<compile_context>
chip_gen: v6e
topology: v6e:2x2x1
jax: 0.10.0
libtpu: 0.0.40
codegen_flags: <defaults>
</compile_context>

<pallas_src>
import functools

import jax
import jax.numpy as jnp
import numpy as np
from jax.experimental import pallas as pl
from jax.experimental.pallas import tpu as pltpu

E = 32        # embedding dim
H = 128       # GRU hidden size
O = 64        # fc1 output size
O_PAD = 128   # fc output padded to a full lane group


def _gru_kernel(T, Bp, VPAD,
                tok_ref, embproj_ref,
                whh0_ref, bhhn0_ref,
                wih1_ref, whh1_ref, bias1_ref, bhhn1_ref,
                fcw_ref, fcb_ref,
                out_ref,
                gi0_scr):
    """Whole 2-layer GRU + fc1 in one invocation (no grid, everything VMEM-resident).

    tok_ref     : (T*Bp, 1) int32   time-major, batch-padded token ids.
    embproj_ref : (VPAD, 3H)        embedding @ Wih0^T with bias0 (b_hh r/z folded) added.
    whh*        : (H, 3H)           pre-transposed recurrent weights.
    wih1        : (H, 3H)           pre-transposed layer-1 input weights.
    bias1       : (1, 3H)           b_ih_l1 with b_hh_l1 r/z folded in.
    bhhn*       : (1, H)            n-gate recurrent bias (stays inside r*(W_hn h + b_hn)).
    fcw         : (H, O_PAD), fcb: (1, O_PAD)
    out         : (Bp, O_PAD)
    gi0_scr     : (T*Bp, 3H) VMEM scratch for the hoisted layer-0 input projections.
    """
    f32 = jnp.float32

    # ---- fused embedding gather + layer-0 input projection (one MXU push, off the chain) ----
    tok = jnp.broadcast_to(tok_ref[...], (T * Bp, VPAD))
    iota_v = jax.lax.broadcasted_iota(jnp.int32, (T * Bp, VPAD), 1)
    onehot = (iota_v == tok).astype(f32)
    gi0_scr[...] = jnp.dot(onehot, embproj_ref[...], preferred_element_type=f32)

    # ---- hoisted broadcasts (done once; JAX does not CSE broadcast_in_dim) ------------------
    bias1 = jnp.broadcast_to(bias1_ref[...], (Bp, 3 * H))
    bhhn0 = jnp.broadcast_to(bhhn0_ref[...], (Bp, H))
    bhhn1 = jnp.broadcast_to(bhhn1_ref[...], (Bp, H))

    def gru_cell(gi, gh, h, bhh_n):
        r = jax.nn.sigmoid(gi[:, 0:H] + gh[:, 0:H])
        z = jax.nn.sigmoid(gi[:, H:2 * H] + gh[:, H:2 * H])
        n = jnp.tanh(gi[:, 2 * H:] + r * (gh[:, 2 * H:] + bhh_n))
        return n + z * (h - n)            # 3 VPU ops on the serial chain instead of 4

    h1 = jnp.zeros((Bp, H), f32)          # layer-0 hidden state
    h2 = jnp.zeros((Bp, H), f32)          # layer-1 hidden state

    # ---- wavefront: step t = layer-0 time t  +  layer-1 time t-1 (independent matmuls) ------
    for t in range(T + 1):                # static unroll (T is small)
        h1_prev = h1                      # layer-0 output of time t-1 (layer-1's input)
        if t < T:
            gi0 = gi0_scr[t * Bp:(t + 1) * Bp, :]              # static sublane-aligned slice
            gh0 = jnp.dot(h1_prev, whh0_ref[...], preferred_element_type=f32)
        if t >= 1:
            gi1 = jnp.dot(h1_prev, wih1_ref[...], preferred_element_type=f32) + bias1
            gh1 = jnp.dot(h2, whh1_ref[...], preferred_element_type=f32)
        if t < T:
            h1 = gru_cell(gi0, gh0, h1_prev, bhhn0)
        if t >= 1:
            h2 = gru_cell(gi1, gh1, h2, bhhn1)

    out_ref[...] = (jnp.dot(h2, fcw_ref[...], preferred_element_type=f32) + fcb_ref[...])


def prepare_params(params):
    """One-time weight preprocessing (hoisted out of the per-call path)."""
    f32 = jnp.float32

    def fold(bih, bhh):
        # Fold b_hh of the r/z gates into the hoisted input-projection bias; keep b_hn apart
        # (it must stay inside r * (W_hn h + b_hn) per PyTorch GRU semantics).
        return bih + jnp.concatenate([bhh[:2 * H], jnp.zeros((H,), bhh.dtype)])

    emb = params["embedding"].astype(f32)
    n_vocab = emb.shape[0]
    vpad = ((n_vocab + 127) // 128) * 128

    # Fused embedding + layer-0 input projection: emb_proj[v] = E[v] @ Wih0^T + bias0.
    embproj = emb @ params["w_ih_l0"].T + fold(params["b_ih_l0"], params["b_hh_l0"])[None, :]
    embproj = jnp.pad(embproj, ((0, vpad - n_vocab), (0, 0)))

    fcw = jnp.zeros((H, O_PAD), f32).at[:, :O].set(params["fc_w"].T)
    fcb = jnp.zeros((1, O_PAD), f32).at[:, :O].set(params["fc_b"])

    return {
        "embproj": embproj,                                            # (VPAD, 3H)
        "whh0": params["w_hh_l0"].T,                                   # (H, 3H)
        "bhhn0": params["b_hh_l0"][2 * H:][None, :],                   # (1, H)
        "wih1": params["w_ih_l1"].T,                                   # (H, 3H)
        "whh1": params["w_hh_l1"].T,                                   # (H, 3H)
        "bias1": fold(params["b_ih_l1"], params["b_hh_l1"])[None, :],  # (1, 3H)
        "bhhn1": params["b_hh_l1"][2 * H:][None, :],                   # (1, H)
        "fcw": fcw,
        "fcb": fcb,
    }


def leonard_gru_multi_big(tokens, prepared):
    """tokens: (B, T) int32, prepared: prepare_params(...) -> (B, 64) float32."""
    B, T = tokens.shape
    Bp = ((B + 7) // 8) * 8                       # pad batch to a sublane multiple
    VPAD = prepared["embproj"].shape[0]

    # Tiny per-call prep: time-major token column (T*Bp, 1). Padded rows read vocab row 0 and
    # are sliced off below (padded rows never mix with real rows: all ops are row-wise).
    tok_col = jnp.pad(tokens.T.astype(jnp.int32), ((0, 0), (0, Bp - B))).reshape(T * Bp, 1)

    vmem = pl.BlockSpec(memory_space=pltpu.MemorySpace.VMEM)
    out = pl.pallas_call(
        functools.partial(_gru_kernel, T, Bp, VPAD),
        out_shape=jax.ShapeDtypeStruct((Bp, O_PAD), jnp.float32),
        in_specs=[vmem] * 10,
        out_specs=vmem,
        scratch_shapes=[pltpu.VMEM((T * Bp, 3 * H), jnp.float32)],
        compiler_params=pltpu.CompilerParams(vmem_limit_bytes=32 * 1024 * 1024),
    )(tok_col, prepared["embproj"],
      prepared["whh0"], prepared["bhhn0"],
      prepared["wih1"], prepared["whh1"], prepared["bias1"], prepared["bhhn1"],
      prepared["fcw"], prepared["fcb"])
    return out[:B, :O]


def reference_forward(tokens, params):
    """Pure-JAX reference (mirrors PyTorch GRU semantics)."""
    x = jnp.take(params["embedding"], tokens, axis=0)

    def gru_layer(x, wih, whh, bih, bhh):
        B = x.shape[0]

        def step(h, x_t):
            gi = x_t @ wih.T + bih
            gh = h @ whh.T + bhh
            r = jax.nn.sigmoid(gi[:, :H] + gh[:, :H])
            z = jax.nn.sigmoid(gi[:, H:2 * H] + gh[:, H:2 * H])
            n = jnp.tanh(gi[:, 2 * H:] + r * gh[:, 2 * H:])
            h_new = (1.0 - z) * n + z * h
            return h_new, h_new

        h0 = jnp.zeros((B, H), jnp.float32)
        _, ys = jax.lax.scan(step, h0, jnp.transpose(x, (1, 0, 2)))
        return jnp.transpose(ys, (1, 0, 2))

    x = gru_layer(x, params["w_ih_l0"], params["w_hh_l0"],
                  params["b_ih_l0"], params["b_hh_l0"])
    x = gru_layer(x, params["w_ih_l1"], params["w_hh_l1"],
                  params["b_ih_l1"], params["b_hh_l1"])
    last = x[:, -1, :]
    return last @ params["fc_w"].T + params["fc_b"]


def init_params(key, n_vocab):
    ks = jax.random.split(key, 12)
    s = 0.1
    return {
        "embedding": jax.random.normal(ks[0], (n_vocab, E), jnp.float32),
        "w_ih_l0": s * jax.random.normal(ks[1], (3 * H, E), jnp.float32),
        "w_hh_l0": s * jax.random.normal(ks[2], (3 * H, H), jnp.float32),
        "b_ih_l0": s * jax.random.normal(ks[3], (3 * H,), jnp.float32),
        "b_hh_l0": s * jax.random.normal(ks[4], (3 * H,), jnp.float32),
        "w_ih_l1": s * jax.random.normal(ks[5], (3 * H, H), jnp.float32),
        "w_hh_l1": s * jax.random.normal(ks[6], (3 * H, H), jnp.float32),
        "b_ih_l1": s * jax.random.normal(ks[7], (3 * H,), jnp.float32),
        "b_hh_l1": s * jax.random.normal(ks[8], (3 * H,), jnp.float32),
        "fc_w": s * jax.random.normal(ks[9], (O, H), jnp.float32),
        "fc_b": s * jax.random.normal(ks[10], (O,), jnp.float32),
    }


if __name__ == "__main__":
    key = jax.random.PRNGKey(0)
    k_param, k_tok = jax.random.split(key)

    n_vocab = 100
    B, T = 2, 8
    params = init_params(k_param, n_vocab)
    tokens = jax.random.randint(k_tok, (B, T), 0, n_vocab, dtype=jnp.int32)

    prepared = prepare_params(params)            # one-time weight prep, off the per-call path
    fwd = jax.jit(leonard_gru_multi_big)
    out = jax.block_until_ready(fwd(tokens, prepared))

    ref = reference_forward(tokens, params)
    np.testing.assert_allclose(np.asarray(out), np.asarray(ref),
                               rtol=1e-4, atol=1e-4)
    assert out.shape == (B, O) and out.dtype == jnp.float32
    print("KERNEL_OK")
</pallas_src>

<mosaic_0001>
module attributes {stable_mosaic.version = 11 : i64} {
  func.func @_gru_kernel(%arg0: memref<64x1xi32, #tpu.memory_space<vmem>>, %arg1: memref<128x384xf32, #tpu.memory_space<vmem>>, %arg2: memref<128x384xf32, #tpu.memory_space<vmem>>, %arg3: memref<1x128xf32, #tpu.memory_space<vmem>>, %arg4: memref<128x384xf32, #tpu.memory_space<vmem>>, %arg5: memref<128x384xf32, #tpu.memory_space<vmem>>, %arg6: memref<1x384xf32, #tpu.memory_space<vmem>>, %arg7: memref<1x128xf32, #tpu.memory_space<vmem>>, %arg8: memref<128x128xf32, #tpu.memory_space<vmem>>, %arg9: memref<1x128xf32, #tpu.memory_space<vmem>>, %arg10: memref<8x128xf32, #tpu.memory_space<vmem>>, %arg11: memref<64x384xf32, #tpu.memory_space<vmem>>) attributes {dimension_semantics = [], scalar_prefetch = 0 : i64, scratch_operands = 1 : i64, tpu.core_type = #tpu.core_type<tc>} {
    %c0 = arith.constant 0 : index
    %c0_0 = arith.constant 0 : index
    %0 = vector.load %arg0[%c0, %c0_0] : memref<64x1xi32, #tpu.memory_space<vmem>>, vector<64x1xi32>
    %1 = vector.shape_cast %0 : vector<64x1xi32> to vector<64x1xi32>
    %2 = vector.broadcast %1 : vector<64x1xi32> to vector<64x128xi32>
    %3 = tpu.iota {dimensions = array<i32: 1>} : vector<64x128xi32>
    %4 = arith.cmpi eq, %3, %2 : vector<64x128xi32>
    %5 = arith.extui %4 : vector<64x128xi1> to vector<64x128xi32>
    %6 = arith.sitofp %5 : vector<64x128xi32> to vector<64x128xf32>
    %c0_1 = arith.constant 0 : index
    %c0_2 = arith.constant 0 : index
    %7 = vector.load %arg1[%c0_1, %c0_2] : memref<128x384xf32, #tpu.memory_space<vmem>>, vector<128x384xf32>
    %cst = arith.constant dense<0.000000e+00> : vector<64x384xf32>
    %8 = tpu.matmul %6, %7, %cst {dimension_numbers = #tpu.dot_dimension_numbers<[1], [0], [0], [1], [0, 0, 1, 1], [], []>} : vector<64x128xf32>, vector<128x384xf32>, vector<64x384xf32> -> vector<64x384xf32>
    %c0_3 = arith.constant 0 : index
    %c0_4 = arith.constant 0 : index
    %9 = vector.load %arg11[%c0_3, %c0_4] : memref<64x384xf32, #tpu.memory_space<vmem>>, vector<64x384xf32>
    tpu.vector_store %arg11[%c0_3, %c0_4], %8 {strides = array<i32>} : memref<64x384xf32, #tpu.memory_space<vmem>>, vector<64x384xf32>,
    %c0_5 = arith.constant 0 : index
    %c0_6 = arith.constant 0 : index
    %10 = vector.load %arg6[%c0_5, %c0_6] : memref<1x384xf32, #tpu.memory_space<vmem>>, vector<1x384xf32>
    %11 = vector.shape_cast %10 : vector<1x384xf32> to vector<1x384xf32>
    %12 = vector.broadcast %11 : vector<1x384xf32> to vector<8x384xf32>
    %c0_7 = arith.constant 0 : index
    %c0_8 = arith.constant 0 : index
    %13 = vector.load %arg3[%c0_7, %c0_8] : memref<1x128xf32, #tpu.memory_space<vmem>>, vector<1x128xf32>
    %14 = vector.shape_cast %13 : vector<1x128xf32> to vector<1x128xf32>
    %15 = vector.broadcast %14 : vector<1x128xf32> to vector<8x128xf32>
    %c0_9 = arith.constant 0 : index
    %c0_10 = arith.constant 0 : index
    %16 = vector.load %arg7[%c0_9, %c0_10] : memref<1x128xf32, #tpu.memory_space<vmem>>, vector<1x128xf32>
    %17 = vector.shape_cast %16 : vector<1x128xf32> to vector<1x128xf32>
    %18 = vector.broadcast %17 : vector<1x128xf32> to vector<8x128xf32>
    %cst_11 = arith.constant 0.000000e+00 : f32
    %19 = vector.broadcast %cst_11 : f32 to vector<8x128xf32>
    %cst_12 = arith.constant 0.000000e+00 : f32
    %20 = vector.broadcast %cst_12 : f32 to vector<8x128xf32>
    %c0_13 = arith.constant 0 : index
    %c0_14 = arith.constant 0 : index
    %21 = vector.load %arg11[%c0_13, %c0_14] : memref<64x384xf32, #tpu.memory_space<vmem>>, vector<8x384xf32>
    %c0_15 = arith.constant 0 : index
    %c0_16 = arith.constant 0 : index
    %22 = vector.load %arg2[%c0_15, %c0_16] : memref<128x384xf32, #tpu.memory_space<vmem>>, vector<128x384xf32>
    %cst_17 = arith.constant dense<0.000000e+00> : vector<8x384xf32>
    %23 = tpu.matmul %19, %22, %cst_17 {dimension_numbers = #tpu.dot_dimension_numbers<[1], [0], [0], [1], [0, 0, 1, 1], [], []>} : vector<8x128xf32>, vector<128x384xf32>, vector<8x384xf32> -> vector<8x384xf32>
    %24 = vector.extract_strided_slice %21 {offsets = [0, 0], sizes = [8, 128], strides = [1, 1]} : vector<8x384xf32> to vector<8x128xf32>
    %25 = vector.extract_strided_slice %23 {offsets = [0, 0], sizes = [8, 128], strides = [1, 1]} : vector<8x384xf32> to vector<8x128xf32>
    %26 = arith.addf %24, %25 : vector<8x128xf32>
    %27 = arith.negf %26 : vector<8x128xf32>
    %28 = math.exp %27 : vector<8x128xf32>
    %cst_18 = arith.constant 1.000000e+00 : f32
    %29 = vector.broadcast %cst_18 : f32 to vector<8x128xf32>
    %30 = arith.addf %29, %28 : vector<8x128xf32>
    %31 = arith.divf %29, %30 : vector<8x128xf32>
    %32 = vector.extract_strided_slice %21 {offsets = [0, 128], sizes = [8, 128], strides = [1, 1]} : vector<8x384xf32> to vector<8x128xf32>
    %33 = vector.extract_strided_slice %23 {offsets = [0, 128], sizes = [8, 128], strides = [1, 1]} : vector<8x384xf32> to vector<8x128xf32>
    %34 = arith.addf %32, %33 : vector<8x128xf32>
    %35 = arith.negf %34 : vector<8x128xf32>
    %36 = math.exp %35 : vector<8x128xf32>
    %cst_19 = arith.constant 1.000000e+00 : f32
    %37 = vector.broadcast %cst_19 : f32 to vector<8x128xf32>
    %38 = arith.addf %37, %36 : vector<8x128xf32>
    %39 = arith.divf %37, %38 : vector<8x128xf32>
    %40 = vector.extract_strided_slice %21 {offsets = [0, 256], sizes = [8, 128], strides = [1, 1]} : vector<8x384xf32> to vector<8x128xf32>
    %41 = vector.extract_strided_slice %23 {offsets = [0, 256], sizes = [8, 128], strides = [1, 1]} : vector<8x384xf32> to vector<8x128xf32>
    %42 = arith.addf %41, %15 : vector<8x128xf32>
    %43 = arith.mulf %31, %42 : vector<8x128xf32>
    %44 = arith.addf %40, %43 : vector<8x128xf32>
    %45 = math.tanh %44 : vector<8x128xf32>
    %46 = arith.subf %19, %45 : vector<8x128xf32>
    %47 = arith.mulf %39, %46 : vector<8x128xf32>
    %48 = arith.addf %45, %47 : vector<8x128xf32>
    %c8 = arith.constant 8 : index
    %c0_20 = arith.constant 0 : index
    %49 = vector.load %arg11[%c8, %c0_20] : memref<64x384xf32, #tpu.memory_space<vmem>>, vector<8x384xf32>
    %c0_21 = arith.constant 0 : index
    %c0_22 = arith.constant 0 : index
    %50 = vector.load %arg2[%c0_21, %c0_22] : memref<128x384xf32, #tpu.memory_space<vmem>>, vector<128x384xf32>
    %cst_23 = arith.constant dense<0.000000e+00> : vector<8x384xf32>
    %51 = tpu.matmul %48, %50, %cst_23 {dimension_numbers = #tpu.dot_dimension_numbers<[1], [0], [0], [1], [0, 0, 1, 1], [], []>} : vector<8x128xf32>, vector<128x384xf32>, vector<8x384xf32> -> vector<8x384xf32>
    %c0_24 = arith.constant 0 : index
    %c0_25 = arith.constant 0 : index
    %52 = vector.load %arg4[%c0_24, %c0_25] : memref<128x384xf32, #tpu.memory_space<vmem>>, vector<128x384xf32>
    %cst_26 = arith.constant dense<0.000000e+00> : vector<8x384xf32>
    %53 = tpu.matmul %48, %52, %cst_26 {dimension_numbers = #tpu.dot_dimension_numbers<[1], [0], [0], [1], [0, 0, 1, 1], [], []>} : vector<8x128xf32>, vector<128x384xf32>, vector<8x384xf32> -> vector<8x384xf32>
    %54 = arith.addf %53, %12 : vector<8x384xf32>
    %c0_27 = arith.constant 0 : index
    %c0_28 = arith.constant 0 : index
    %55 = vector.load %arg5[%c0_27, %c0_28] : memref<128x384xf32, #tpu.memory_space<vmem>>, vector<128x384xf32>
    %cst_29 = arith.constant dense<0.000000e+00> : vector<8x384xf32>
    %56 = tpu.matmul %20, %55, %cst_29 {dimension_numbers = #tpu.dot_dimension_numbers<[1], [0], [0], [1], [0, 0, 1, 1], [], []>} : vector<8x128xf32>, vector<128x384xf32>, vector<8x384xf32> -> vector<8x384xf32>
    %57 = vector.extract_strided_slice %49 {offsets = [0, 0], sizes = [8, 128], strides = [1, 1]} : vector<8x384xf32> to vector<8x128xf32>
    %58 = vector.extract_strided_slice %51 {offsets = [0, 0], sizes = [8, 128], strides = [1, 1]} : vector<8x384xf32> to vector<8x128xf32>
    %59 = arith.addf %57, %58 : vector<8x128xf32>
    %60 = arith.negf %59 : vector<8x128xf32>
    %61 = math.exp %60 : vector<8x128xf32>
    %cst_30 = arith.constant 1.000000e+00 : f32
    %62 = vector.broadcast %cst_30 : f32 to vector<8x128xf32>
    %63 = arith.addf %62, %61 : vector<8x128xf32>
    %64 = arith.divf %62, %63 : vector<8x128xf32>
    %65 = vector.extract_strided_slice %49 {offsets = [0, 128], sizes = [8, 128], strides = [1, 1]} : vector<8x384xf32> to vector<8x128xf32>
    %66 = vector.extract_strided_slice %51 {offsets = [0, 128], sizes = [8, 128], strides = [1, 1]} : vector<8x384xf32> to vector<8x128xf32>
    %67 = arith.addf %65, %66 : vector<8x128xf32>
    %68 = arith.negf %67 : vector<8x128xf32>
    %69 = math.exp %68 : vector<8x128xf32>
    %cst_31 = arith.constant 1.000000e+00 : f32
    %70 = vector.broadcast %cst_31 : f32 to vector<8x128xf32>
    %71 = arith.addf %70, %69 : vector<8x128xf32>
    %72 = arith.divf %70, %71 : vector<8x128xf32>
    %73 = vector.extract_strided_slice %49 {offsets = [0, 256], sizes = [8, 128], strides = [1, 1]} : vector<8x384xf32> to vector<8x128xf32>
    %74 = vector.extract_strided_slice %51 {offsets = [0, 256], sizes = [8, 128], strides = [1, 1]} : vector<8x384xf32> to vector<8x128xf32>
    %75 = arith.addf %74, %15 : vector<8x128xf32>
    %76 = arith.mulf %64, %75 : vector<8x128xf32>
    %77 = arith.addf %73, %76 : vector<8x128xf32>
    %78 = math.tanh %77 : vector<8x128xf32>
    %79 = arith.subf %48, %78 : vector<8x128xf32>
    %80 = arith.mulf %72, %79 : vector<8x128xf32>
    %81 = arith.addf %78, %80 : vector<8x128xf32>
    %82 = vector.extract_strided_slice %54 {offsets = [0, 0], sizes = [8, 128], strides = [1, 1]} : vector<8x384xf32> to vector<8x128xf32>
    %83 = vector.extract_strided_slice %56 {offsets = [0, 0], sizes = [8, 128], strides = [1, 1]} : vector<8x384xf32> to vector<8x128xf32>
    %84 = arith.addf %82, %83 : vector<8x128xf32>
    %85 = arith.negf %84 : vector<8x128xf32>
    %86 = math.exp %85 : vector<8x128xf32>
    %cst_32 = arith.constant 1.000000e+00 : f32
    %87 = vector.broadcast %cst_32 : f32 to vector<8x128xf32>
    %88 = arith.addf %87, %86 : vector<8x128xf32>
    %89 = arith.divf %87, %88 : vector<8x128xf32>
    %90 = vector.extract_strided_slice %54 {offsets = [0, 128], sizes = [8, 128], strides = [1, 1]} : vector<8x384xf32> to vector<8x128xf32>
    %91 = vector.extract_strided_slice %56 {offsets = [0, 128], sizes = [8, 128], strides = [1, 1]} : vector<8x384xf32> to vector<8x128xf32>
    %92 = arith.addf %90, %91 : vector<8x128xf32>
    %93 = arith.negf %92 : vector<8x128xf32>
    %94 = math.exp %93 : vector<8x128xf32>
    %cst_33 = arith.constant 1.000000e+00 : f32
    %95 = vector.broadcast %cst_33 : f32 to vector<8x128xf32>
    %96 = arith.addf %95, %94 : vector<8x128xf32>
    %97 = arith.divf %95, %96 : vector<8x128xf32>
    %98 = vector.extract_strided_slice %54 {offsets = [0, 256], sizes = [8, 128], strides = [1, 1]} : vector<8x384xf32> to vector<8x128xf32>
    %99 = vector.extract_strided_slice %56 {offsets = [0, 256], sizes = [8, 128], strides = [1, 1]} : vector<8x384xf32> to vector<8x128xf32>
    %100 = arith.addf %99, %18 : vector<8x128xf32>
    %101 = arith.mulf %89, %100 : vector<8x128xf32>
    %102 = arith.addf %98, %101 : vector<8x128xf32>
    %103 = math.tanh %102 : vector<8x128xf32>
    %104 = arith.subf %20, %103 : vector<8x128xf32>
    %105 = arith.mulf %97, %104 : vector<8x128xf32>
    %106 = arith.addf %103, %105 : vector<8x128xf32>
    %c16 = arith.constant 16 : index
    %c0_34 = arith.constant 0 : index
    %107 = vector.load %arg11[%c16, %c0_34] : memref<64x384xf32, #tpu.memory_space<vmem>>, vector<8x384xf32>
    %c0_35 = arith.constant 0 : index
    %c0_36 = arith.constant 0 : index
    %108 = vector.load %arg2[%c0_35, %c0_36] : memref<128x384xf32, #tpu.memory_space<vmem>>, vector<128x384xf32>
    %cst_37 = arith.constant dense<0.000000e+00> : vector<8x384xf32>
    %109 = tpu.matmul %81, %108, %cst_37 {dimension_numbers = #tpu.dot_dimension_numbers<[1], [0], [0], [1], [0, 0, 1, 1], [], []>} : vector<8x128xf32>, vector<128x384xf32>, vector<8x384xf32> -> vector<8x384xf32>
    %c0_38 = arith.constant 0 : index
    %c0_39 = arith.constant 0 : index
    %110 = vector.load %arg4[%c0_38, %c0_39] : memref<128x384xf32, #tpu.memory_space<vmem>>, vector<128x384xf32>
    %cst_40 = arith.constant dense<0.000000e+00> : vector<8x384xf32>
    %111 = tpu.matmul %81, %110, %cst_40 {dimension_numbers = #tpu.dot_dimension_numbers<[1], [0], [0], [1], [0, 0, 1, 1], [], []>} : vector<8x128xf32>, vector<128x384xf32>, vector<8x384xf32> -> vector<8x384xf32>
    %112 = arith.addf %111, %12 : vector<8x384xf32>
    %c0_41 = arith.constant 0 : index
    %c0_42 = arith.constant 0 : index
    %113 = vector.load %arg5[%c0_41, %c0_42] : memref<128x384xf32, #tpu.memory_space<vmem>>, vector<128x384xf32>
    %cst_43 = arith.constant dense<0.000000e+00> : vector<8x384xf32>
    %114 = tpu.matmul %106, %113, %cst_43 {dimension_numbers = #tpu.dot_dimension_numbers<[1], [0], [0], [1], [0, 0, 1, 1], [], []>} : vector<8x128xf32>, vector<128x384xf32>, vector<8x384xf32> -> vector<8x384xf32>
    %115 = vector.extract_strided_slice %107 {offsets = [0, 0], sizes = [8, 128], strides = [1, 1]} : vector<8x384xf32> to vector<8x128xf32>
    %116 = vector.extract_strided_slice %109 {offsets = [0, 0], sizes = [8, 128], strides = [1, 1]} : vector<8x384xf32> to vector<8x128xf32>
    %117 = arith.addf %115, %116 : vector<8x128xf32>
    %118 = arith.negf %117 : vector<8x128xf32>
    %119 = math.exp %118 : vector<8x128xf32>
    %cst_44 = arith.constant 1.000000e+00 : f32
    %120 = vector.broadcast %cst_44 : f32 to vector<8x128xf32>
    %121 = arith.addf %120, %119 : vector<8x128xf32>
    %122 = arith.divf %120, %121 : vector<8x128xf32>
    %123 = vector.extract_strided_slice %107 {offsets = [0, 128], sizes = [8, 128], strides = [1, 1]} : vector<8x384xf32> to vector<8x128xf32>
    %124 = vector.extract_strided_slice %109 {offsets = [0, 128], sizes = [8, 128], strides = [1, 1]} : vector<8x384xf32> to vector<8x128xf32>
    %125 = arith.addf %123, %124 : vector<8x128xf32>
    %126 = arith.negf %125 : vector<8x128xf32>
    %127 = math.exp %126 : vector<8x128xf32>
    %cst_45 = arith.constant 1.000000e+00 : f32
    %128 = vector.broadcast %cst_45 : f32 to vector<8x128xf32>
    %129 = arith.addf %128, %127 : vector<8x128xf32>
    %130 = arith.divf %128, %129 : vector<8x128xf32>
    %131 = vector.extract_strided_slice %107 {offsets = [0, 256], sizes = [8, 128], strides = [1, 1]} : vector<8x384xf32> to vector<8x128xf32>
    %132 = vector.extract_strided_slice %109 {offsets = [0, 256], sizes = [8, 128], strides = [1, 1]} : vector<8x384xf32> to vector<8x128xf32>
    %133 = arith.addf %132, %15 : vector<8x128xf32>
    %134 = arith.mulf %122, %133 : vector<8x128xf32>
    %135 = arith.addf %131, %134 : vector<8x128xf32>
    %136 = math.tanh %135 : vector<8x128xf32>
    %137 = arith.subf %81, %136 : vector<8x128xf32>
    %138 = arith.mulf %130, %137 : vector<8x128xf32>
    %139 = arith.addf %136, %138 : vector<8x128xf32>
    %140 = vector.extract_strided_slice %112 {offsets = [0, 0], sizes = [8, 128], strides = [1, 1]} : vector<8x384xf32> to vector<8x128xf32>
    %141 = vector.extract_strided_slice %114 {offsets = [0, 0], sizes = [8, 128], strides = [1, 1]} : vector<8x384xf32> to vector<8x128xf32>
    %142 = arith.addf %140, %141 : vector<8x128xf32>
    %143 = arith.negf %142 : vector<8x128xf32>
    %144 = math.exp %143 : vector<8x128xf32>
    %cst_46 = arith.constant 1.000000e+00 : f32
    %145 = vector.broadcast %cst_46 : f32 to vector<8x128xf32>
    %146 = arith.addf %145, %144 : vector<8x128xf32>
    %147 = arith.divf %145, %146 : vector<8x128xf32>
    %148 = vector.extract_strided_slice %112 {offsets = [0, 128], sizes = [8, 128], strides = [1, 1]} : vector<8x384xf32> to vector<8x128xf32>
    %149 = vector.extract_strided_slice %114 {offsets = [0, 128], sizes = [8, 128], strides = [1, 1]} : vector<8x384xf32> to vector<8x128xf32>
    %150 = arith.addf %148, %149 : vector<8x128xf32>
    %151 = arith.negf %150 : vector<8x128xf32>
    %152 = math.exp %151 : vector<8x128xf32>
    %cst_47 = arith.constant 1.000000e+00 : f32
    %153 = vector.broadcast %cst_47 : f32 to vector<8x128xf32>
    %154 = arith.addf %153, %152 : vector<8x128xf32>
    %155 = arith.divf %153, %154 : vector<8x128xf32>
    %156 = vector.extract_strided_slice %112 {offsets = [0, 256], sizes = [8, 128], strides = [1, 1]} : vector<8x384xf32> to vector<8x128xf32>
    %157 = vector.extract_strided_slice %114 {offsets = [0, 256], sizes = [8, 128], strides = [1, 1]} : vector<8x384xf32> to vector<8x128xf32>
    %158 = arith.addf %157, %18 : vector<8x128xf32>
    %159 = arith.mulf %147, %158 : vector<8x128xf32>
    %160 = arith.addf %156, %159 : vector<8x128xf32>
    %161 = math.tanh %160 : vector<8x128xf32>
    %162 = arith.subf %106, %161 : vector<8x128xf32>
    %163 = arith.mulf %155, %162 : vector<8x128xf32>
    %164 = arith.addf %161, %163 : vector<8x128xf32>
    %c24 = arith.constant 24 : index
    %c0_48 = arith.constant 0 : index
    %165 = vector.load %arg11[%c24, %c0_48] : memref<64x384xf32, #tpu.memory_space<vmem>>, vector<8x384xf32>
    %c0_49 = arith.constant 0 : index
    %c0_50 = arith.constant 0 : index
    %166 = vector.load %arg2[%c0_49, %c0_50] : memref<128x384xf32, #tpu.memory_space<vmem>>, vector<128x384xf32>
    %cst_51 = arith.constant dense<0.000000e+00> : vector<8x384xf32>
    %167 = tpu.matmul %139, %166, %cst_51 {dimension_numbers = #tpu.dot_dimension_numbers<[1], [0], [0], [1], [0, 0, 1, 1], [], []>} : vector<8x128xf32>, vector<128x384xf32>, vector<8x384xf32> -> vector<8x384xf32>
    %c0_52 = arith.constant 0 : index
    %c0_53 = arith.constant 0 : index
    %168 = vector.load %arg4[%c0_52, %c0_53] : memref<128x384xf32, #tpu.memory_space<vmem>>, vector<128x384xf32>
    %cst_54 = arith.constant dense<0.000000e+00> : vector<8x384xf32>
    %169 = tpu.matmul %139, %168, %cst_54 {dimension_numbers = #tpu.dot_dimension_numbers<[1], [0], [0], [1], [0, 0, 1, 1], [], []>} : vector<8x128xf32>, vector<128x384xf32>, vector<8x384xf32> -> vector<8x384xf32>
    %170 = arith.addf %169, %12 : vector<8x384xf32>
    %c0_55 = arith.constant 0 : index
    %c0_56 = arith.constant 0 : index
    %171 = vector.load %arg5[%c0_55, %c0_56] : memref<128x384xf32, #tpu.memory_space<vmem>>, vector<128x384xf32>
    %cst_57 = arith.constant dense<0.000000e+00> : vector<8x384xf32>
    %172 = tpu.matmul %164, %171, %cst_57 {dimension_numbers = #tpu.dot_dimension_numbers<[1], [0], [0], [1], [0, 0, 1, 1], [], []>} : vector<8x128xf32>, vector<128x384xf32>, vector<8x384xf32> -> vector<8x384xf32>
    %173 = vector.extract_strided_slice %165 {offsets = [0, 0], sizes = [8, 128], strides = [1, 1]} : vector<8x384xf32> to vector<8x128xf32>
    %174 = vector.extract_strided_slice %167 {offsets = [0, 0], sizes = [8, 128], strides = [1, 1]} : vector<8x384xf32> to vector<8x128xf32>
    %175 = arith.addf %173, %174 : vector<8x128xf32>
    %176 = arith.negf %175 : vector<8x128xf32>
    %177 = math.exp %176 : vector<8x128xf32>
    %cst_58 = arith.constant 1.000000e+00 : f32
    %178 = vector.broadcast %cst_58 : f32 to vector<8x128xf32>
    %179 = arith.addf %178, %177 : vector<8x128xf32>
    %180 = arith.divf %178, %179 : vector<8x128xf32>
    %181 = vector.extract_strided_slice %165 {offsets = [0, 128], sizes = [8, 128], strides = [1, 1]} : vector<8x384xf32> to vector<8x128xf32>
    %182 = vector.extract_strided_slice %167 {offsets = [0, 128], sizes = [8, 128], strides = [1, 1]} : vector<8x384xf32> to vector<8x128xf32>
    %183 = arith.addf %181, %182 : vector<8x128xf32>
    %184 = arith.negf %183 : vector<8x128xf32>
    %185 = math.exp %184 : vector<8x128xf32>
    %cst_59 = arith.constant 1.000000e+00 : f32
    %186 = vector.broadcast %cst_59 : f32 to vector<8x128xf32>
    %187 = arith.addf %186, %185 : vector<8x128xf32>
    %188 = arith.divf %186, %187 : vector<8x128xf32>
    %189 = vector.extract_strided_slice %165 {offsets = [0, 256], sizes = [8, 128], strides = [1, 1]} : vector<8x384xf32> to vector<8x128xf32>
    %190 = vector.extract_strided_slice %167 {offsets = [0, 256], sizes = [8, 128], strides = [1, 1]} : vector<8x384xf32> to vector<8x128xf32>
    %191 = arith.addf %190, %15 : vector<8x128xf32>
    %192 = arith.mulf %180, %191 : vector<8x128xf32>
    %193 = arith.addf %189, %192 : vector<8x128xf32>
    %194 = math.tanh %193 : vector<8x128xf32>
    %195 = arith.subf %139, %194 : vector<8x128xf32>
    %196 = arith.mulf %188, %195 : vector<8x128xf32>
    %197 = arith.addf %194, %196 : vector<8x128xf32>
    %198 = vector.extract_strided_slice %170 {offsets = [0, 0], sizes = [8, 128], strides = [1, 1]} : vector<8x384xf32> to vector<8x128xf32>
    %199 = vector.extract_strided_slice %172 {offsets = [0, 0], sizes = [8, 128], strides = [1, 1]} : vector<8x384xf32> to vector<8x128xf32>
    %200 = arith.addf %198, %199 : vector<8x128xf32>
    %201 = arith.negf %200 : vector<8x128xf32>
    %202 = math.exp %201 : vector<8x128xf32>
    %cst_60 = arith.constant 1.000000e+00 : f32
    %203 = vector.broadcast %cst_60 : f32 to vector<8x128xf32>
    %204 = arith.addf %203, %202 : vector<8x128xf32>
    %205 = arith.divf %203, %204 : vector<8x128xf32>
    %206 = vector.extract_strided_slice %170 {offsets = [0, 128], sizes = [8, 128], strides = [1, 1]} : vector<8x384xf32> to vector<8x128xf32>
    %207 = vector.extract_strided_slice %172 {offsets = [0, 128], sizes = [8, 128], strides = [1, 1]} : vector<8x384xf32> to vector<8x128xf32>
    %208 = arith.addf %206, %207 : vector<8x128xf32>
    %209 = arith.negf %208 : vector<8x128xf32>
    %210 = math.exp %209 : vector<8x128xf32>
    %cst_61 = arith.constant 1.000000e+00 : f32
    %211 = vector.broadcast %cst_61 : f32 to vector<8x128xf32>
    %212 = arith.addf %211, %210 : vector<8x128xf32>
    %213 = arith.divf %211, %212 : vector<8x128xf32>
    %214 = vector.extract_strided_slice %170 {offsets = [0, 256], sizes = [8, 128], strides = [1, 1]} : vector<8x384xf32> to vector<8x128xf32>
    %215 = vector.extract_strided_slice %172 {offsets = [0, 256], sizes = [8, 128], strides = [1, 1]} : vector<8x384xf32> to vector<8x128xf32>
    %216 = arith.addf %215, %18 : vector<8x128xf32>
    %217 = arith.mulf %205, %216 : vector<8x128xf32>
    %218 = arith.addf %214, %217 : vector<8x128xf32>
    %219 = math.tanh %218 : vector<8x128xf32>
    %220 = arith.subf %164, %219 : vector<8x128xf32>
    %221 = arith.mulf %213, %220 : vector<8x128xf32>
    %222 = arith.addf %219, %221 : vector<8x128xf32>
    %c32 = arith.constant 32 : index
    %c0_62 = arith.constant 0 : index
    %223 = vector.load %arg11[%c32, %c0_62] : memref<64x384xf32, #tpu.memory_space<vmem>>, vector<8x384xf32>
    %c0_63 = arith.constant 0 : index
    %c0_64 = arith.constant 0 : index
    %224 = vector.load %arg2[%c0_63, %c0_64] : memref<128x384xf32, #tpu.memory_space<vmem>>, vector<128x384xf32>
    %cst_65 = arith.constant dense<0.000000e+00> : vector<8x384xf32>
    %225 = tpu.matmul %197, %224, %cst_65 {dimension_numbers = #tpu.dot_dimension_numbers<[1], [0], [0], [1], [0, 0, 1, 1], [], []>} : vector<8x128xf32>, vector<128x384xf32>, vector<8x384xf32> -> vector<8x384xf32>
    %c0_66 = arith.constant 0 : index
    %c0_67 = arith.constant 0 : index
    %226 = vector.load %arg4[%c0_66, %c0_67] : memref<128x384xf32, #tpu.memory_space<vmem>>, vector<128x384xf32>
    %cst_68 = arith.constant dense<0.000000e+00> : vector<8x384xf32>
    %227 = tpu.matmul %197, %226, %cst_68 {dimension_numbers = #tpu.dot_dimension_numbers<[1], [0], [0], [1], [0, 0, 1, 1], [], []>} : vector<8x128xf32>, vector<128x384xf32>, vector<8x384xf32> -> vector<8x384xf32>
    %228 = arith.addf %227, %12 : vector<8x384xf32>
    %c0_69 = arith.constant 0 : index
    %c0_70 = arith.constant 0 : index
    %229 = vector.load %arg5[%c0_69, %c0_70] : memref<128x384xf32, #tpu.memory_space<vmem>>, vector<128x384xf32>
    %cst_71 = arith.constant dense<0.000000e+00> : vector<8x384xf32>
    %230 = tpu.matmul %222, %229, %cst_71 {dimension_numbers = #tpu.dot_dimension_numbers<[1], [0], [0], [1], [0, 0, 1, 1], [], []>} : vector<8x128xf32>, vector<128x384xf32>, vector<8x384xf32> -> vector<8x384xf32>
    %231 = vector.extract_strided_slice %223 {offsets = [0, 0], sizes = [8, 128], strides = [1, 1]} : vector<8x384xf32> to vector<8x128xf32>
    %232 = vector.extract_strided_slice %225 {offsets = [0, 0], sizes = [8, 128], strides = [1, 1]} : vector<8x384xf32> to vector<8x128xf32>
    %233 = arith.addf %231, %232 : vector<8x128xf32>
    %234 = arith.negf %233 : vector<8x128xf32>
    %235 = math.exp %234 : vector<8x128xf32>
    %cst_72 = arith.constant 1.000000e+00 : f32
    %236 = vector.broadcast %cst_72 : f32 to vector<8x128xf32>
    %237 = arith.addf %236, %235 : vector<8x128xf32>
    %238 = arith.divf %236, %237 : vector<8x128xf32>
    %239 = vector.extract_strided_slice %223 {offsets = [0, 128], sizes = [8, 128], strides = [1, 1]} : vector<8x384xf32> to vector<8x128xf32>
    %240 = vector.extract_strided_slice %225 {offsets = [0, 128], sizes = [8, 128], strides = [1, 1]} : vector<8x384xf32> to vector<8x128xf32>
    %241 = arith.addf %239, %240 : vector<8x128xf32>
    %242 = arith.negf %241 : vector<8x128xf32>
    %243 = math.exp %242 : vector<8x128xf32>
    %cst_73 = arith.constant 1.000000e+00 : f32
    %244 = vector.broadcast %cst_73 : f32 to vector<8x128xf32>
    %245 = arith.addf %244, %243 : vector<8x128xf32>
    %246 = arith.divf %244, %245 : vector<8x128xf32>
    %247 = vector.extract_strided_slice %223 {offsets = [0, 256], sizes = [8, 128], strides = [1, 1]} : vector<8x384xf32> to vector<8x128xf32>
    %248 = vector.extract_strided_slice %225 {offsets = [0, 256], sizes = [8, 128], strides = [1, 1]} : vector<8x384xf32> to vector<8x128xf32>
    %249 = arith.addf %248, %15 : vector<8x128xf32>
    %250 = arith.mulf %238, %249 : vector<8x128xf32>
    %251 = arith.addf %247, %250 : vector<8x128xf32>
    %252 = math.tanh %251 : vector<8x128xf32>
    %253 = arith.subf %197, %252 : vector<8x128xf32>
    %254 = arith.mulf %246, %253 : vector<8x128xf32>
    %255 = arith.addf %252, %254 : vector<8x128xf32>
    %256 = vector.extract_strided_slice %228 {offsets = [0, 0], sizes = [8, 128], strides = [1, 1]} : vector<8x384xf32> to vector<8x128xf32>
    %257 = vector.extract_strided_slice %230 {offsets = [0, 0], sizes = [8, 128], strides = [1, 1]} : vector<8x384xf32> to vector<8x128xf32>
    %258 = arith.addf %256, %257 : vector<8x128xf32>
    %259 = arith.negf %258 : vector<8x128xf32>
    %260 = math.exp %259 : vector<8x128xf32>
    %cst_74 = arith.constant 1.000000e+00 : f32
    %261 = vector.broadcast %cst_74 : f32 to vector<8x128xf32>
    %262 = arith.addf %261, %260 : vector<8x128xf32>
    %263 = arith.divf %261, %262 : vector<8x128xf32>
    %264 = vector.extract_strided_slice %228 {offsets = [0, 128], sizes = [8, 128], strides = [1, 1]} : vector<8x384xf32> to vector<8x128xf32>
    %265 = vector.extract_strided_slice %230 {offsets = [0, 128], sizes = [8, 128], strides = [1, 1]} : vector<8x384xf32> to vector<8x128xf32>
    %266 = arith.addf %264, %265 : vector<8x128xf32>
    %267 = arith.negf %266 : vector<8x128xf32>
    %268 = math.exp %267 : vector<8x128xf32>
    %cst_75 = arith.constant 1.000000e+00 : f32
    %269 = vector.broadcast %cst_75 : f32 to vector<8x128xf32>
    %270 = arith.addf %269, %268 : vector<8x128xf32>
    %271 = arith.divf %269, %270 : vector<8x128xf32>
    %272 = vector.extract_strided_slice %228 {offsets = [0, 256], sizes = [8, 128], strides = [1, 1]} : vector<8x384xf32> to vector<8x128xf32>
    %273 = vector.extract_strided_slice %230 {offsets = [0, 256], sizes = [8, 128], strides = [1, 1]} : vector<8x384xf32> to vector<8x128xf32>
    %274 = arith.addf %273, %18 : vector<8x128xf32>
    %275 = arith.mulf %263, %274 : vector<8x128xf32>
    %276 = arith.addf %272, %275 : vector<8x128xf32>
    %277 = math.tanh %276 : vector<8x128xf32>
    %278 = arith.subf %222, %277 : vector<8x128xf32>
    %279 = arith.mulf %271, %278 : vector<8x128xf32>
    %280 = arith.addf %277, %279 : vector<8x128xf32>
    %c40 = arith.constant 40 : index
    %c0_76 = arith.constant 0 : index
    %281 = vector.load %arg11[%c40, %c0_76] : memref<64x384xf32, #tpu.memory_space<vmem>>, vector<8x384xf32>
    %c0_77 = arith.constant 0 : index
    %c0_78 = arith.constant 0 : index
    %282 = vector.load %arg2[%c0_77, %c0_78] : memref<128x384xf32, #tpu.memory_space<vmem>>, vector<128x384xf32>
    %cst_79 = arith.constant dense<0.000000e+00> : vector<8x384xf32>
    %283 = tpu.matmul %255, %282, %cst_79 {dimension_numbers = #tpu.dot_dimension_numbers<[1], [0], [0], [1], [0, 0, 1, 1], [], []>} : vector<8x128xf32>, vector<128x384xf32>, vector<8x384xf32> -> vector<8x384xf32>
    %c0_80 = arith.constant 0 : index
    %c0_81 = arith.constant 0 : index
    %284 = vector.load %arg4[%c0_80, %c0_81] : memref<128x384xf32, #tpu.memory_space<vmem>>, vector<128x384xf32>
    %cst_82 = arith.constant dense<0.000000e+00> : vector<8x384xf32>
    %285 = tpu.matmul %255, %284, %cst_82 {dimension_numbers = #tpu.dot_dimension_numbers<[1], [0], [0], [1], [0, 0, 1, 1], [], []>} : vector<8x128xf32>, vector<128x384xf32>, vector<8x384xf32> -> vector<8x384xf32>
    %286 = arith.addf %285, %12 : vector<8x384xf32>
    %c0_83 = arith.constant 0 : index
    %c0_84 = arith.constant 0 : index
    %287 = vector.load %arg5[%c0_83, %c0_84] : memref<128x384xf32, #tpu.memory_space<vmem>>, vector<128x384xf32>
    %cst_85 = arith.constant dense<0.000000e+00> : vector<8x384xf32>
    %288 = tpu.matmul %280, %287, %cst_85 {dimension_numbers = #tpu.dot_dimension_numbers<[1], [0], [0], [1], [0, 0, 1, 1], [], []>} : vector<8x128xf32>, vector<128x384xf32>, vector<8x384xf32> -> vector<8x384xf32>
    %289 = vector.extract_strided_slice %281 {offsets = [0, 0], sizes = [8, 128], strides = [1, 1]} : vector<8x384xf32> to vector<8x128xf32>
    %290 = vector.extract_strided_slice %283 {offsets = [0, 0], sizes = [8, 128], strides = [1, 1]} : vector<8x384xf32> to vector<8x128xf32>
    %291 = arith.addf %289, %290 : vector<8x128xf32>
    %292 = arith.negf %291 : vector<8x128xf32>
    %293 = math.exp %292 : vector<8x128xf32>
    %cst_86 = arith.constant 1.000000e+00 : f32
    %294 = vector.broadcast %cst_86 : f32 to vector<8x128xf32>
    %295 = arith.addf %294, %293 : vector<8x128xf32>
    %296 = arith.divf %294, %295 : vector<8x128xf32>
    %297 = vector.extract_strided_slice %281 {offsets = [0, 128], sizes = [8, 128], strides = [1, 1]} : vector<8x384xf32> to vector<8x128xf32>
    %298 = vector.extract_strided_slice %283 {offsets = [0, 128], sizes = [8, 128], strides = [1, 1]} : vector<8x384xf32> to vector<8x128xf32>
    %299 = arith.addf %297, %298 : vector<8x128xf32>
    %300 = arith.negf %299 : vector<8x128xf32>
    %301 = math.exp %300 : vector<8x128xf32>
    %cst_87 = arith.constant 1.000000e+00 : f32
    %302 = vector.broadcast %cst_87 : f32 to vector<8x128xf32>
    %303 = arith.addf %302, %301 : vector<8x128xf32>
    %304 = arith.divf %302, %303 : vector<8x128xf32>
    %305 = vector.extract_strided_slice %281 {offsets = [0, 256], sizes = [8, 128], strides = [1, 1]} : vector<8x384xf32> to vector<8x128xf32>
    %306 = vector.extract_strided_slice %283 {offsets = [0, 256], sizes = [8, 128], strides = [1, 1]} : vector<8x384xf32> to vector<8x128xf32>
    %307 = arith.addf %306, %15 : vector<8x128xf32>
    %308 = arith.mulf %296, %307 : vector<8x128xf32>
    %309 = arith.addf %305, %308 : vector<8x128xf32>
    %310 = math.tanh %309 : vector<8x128xf32>
    %311 = arith.subf %255, %310 : vector<8x128xf32>
    %312 = arith.mulf %304, %311 : vector<8x128xf32>
    %313 = arith.addf %310, %312 : vector<8x128xf32>
    %314 = vector.extract_strided_slice %286 {offsets = [0, 0], sizes = [8, 128], strides = [1, 1]} : vector<8x384xf32> to vector<8x128xf32>
    %315 = vector.extract_strided_slice %288 {offsets = [0, 0], sizes = [8, 128], strides = [1, 1]} : vector<8x384xf32> to vector<8x128xf32>
    %316 = arith.addf %314, %315 : vector<8x128xf32>
    %317 = arith.negf %316 : vector<8x128xf32>
    %318 = math.exp %317 : vector<8x128xf32>
    %cst_88 = arith.constant 1.000000e+00 : f32
    %319 = vector.broadcast %cst_88 : f32 to vector<8x128xf32>
    %320 = arith.addf %319, %318 : vector<8x128xf32>
    %321 = arith.divf %319, %320 : vector<8x128xf32>
    %322 = vector.extract_strided_slice %286 {offsets = [0, 128], sizes = [8, 128], strides = [1, 1]} : vector<8x384xf32> to vector<8x128xf32>
    %323 = vector.extract_strided_slice %288 {offsets = [0, 128], sizes = [8, 128], strides = [1, 1]} : vector<8x384xf32> to vector<8x128xf32>
    %324 = arith.addf %322, %323 : vector<8x128xf32>
    %325 = arith.negf %324 : vector<8x128xf32>
    %326 = math.exp %325 : vector<8x128xf32>
    %cst_89 = arith.constant 1.000000e+00 : f32
    %327 = vector.broadcast %cst_89 : f32 to vector<8x128xf32>
    %328 = arith.addf %327, %326 : vector<8x128xf32>
    %329 = arith.divf %327, %328 : vector<8x128xf32>
    %330 = vector.extract_strided_slice %286 {offsets = [0, 256], sizes = [8, 128], strides = [1, 1]} : vector<8x384xf32> to vector<8x128xf32>
    %331 = vector.extract_strided_slice %288 {offsets = [0, 256], sizes = [8, 128], strides = [1, 1]} : vector<8x384xf32> to vector<8x128xf32>
    %332 = arith.addf %331, %18 : vector<8x128xf32>
    %333 = arith.mulf %321, %332 : vector<8x128xf32>
    %334 = arith.addf %330, %333 : vector<8x128xf32>
    %335 = math.tanh %334 : vector<8x128xf32>
    %336 = arith.subf %280, %335 : vector<8x128xf32>
    %337 = arith.mulf %329, %336 : vector<8x128xf32>
    %338 = arith.addf %335, %337 : vector<8x128xf32>
    %c48 = arith.constant 48 : index
    %c0_90 = arith.constant 0 : index
    %339 = vector.load %arg11[%c48, %c0_90] : memref<64x384xf32, #tpu.memory_space<vmem>>, vector<8x384xf32>
    %c0_91 = arith.constant 0 : index
    %c0_92 = arith.constant 0 : index
    %340 = vector.load %arg2[%c0_91, %c0_92] : memref<128x384xf32, #tpu.memory_space<vmem>>, vector<128x384xf32>
    %cst_93 = arith.constant dense<0.000000e+00> : vector<8x384xf32>
    %341 = tpu.matmul %313, %340, %cst_93 {dimension_numbers = #tpu.dot_dimension_numbers<[1], [0], [0], [1], [0, 0, 1, 1], [], []>} : vector<8x128xf32>, vector<128x384xf32>, vector<8x384xf32> -> vector<8x384xf32>
    %c0_94 = arith.constant 0 : index
    %c0_95 = arith.constant 0 : index
    %342 = vector.load %arg4[%c0_94, %c0_95] : memref<128x384xf32, #tpu.memory_space<vmem>>, vector<128x384xf32>
    %cst_96 = arith.constant dense<0.000000e+00> : vector<8x384xf32>
    %343 = tpu.matmul %313, %342, %cst_96 {dimension_numbers = #tpu.dot_dimension_numbers<[1], [0], [0], [1], [0, 0, 1, 1], [], []>} : vector<8x128xf32>, vector<128x384xf32>, vector<8x384xf32> -> vector<8x384xf32>
    %344 = arith.addf %343, %12 : vector<8x384xf32>
    %c0_97 = arith.constant 0 : index
    %c0_98 = arith.constant 0 : index
    %345 = vector.load %arg5[%c0_97, %c0_98] : memref<128x384xf32, #tpu.memory_space<vmem>>, vector<128x384xf32>
    %cst_99 = arith.constant dense<0.000000e+00> : vector<8x384xf32>
    %346 = tpu.matmul %338, %345, %cst_99 {dimension_numbers = #tpu.dot_dimension_numbers<[1], [0], [0], [1], [0, 0, 1, 1], [], []>} : vector<8x128xf32>, vector<128x384xf32>, vector<8x384xf32> -> vector<8x384xf32>
    %347 = vector.extract_strided_slice %339 {offsets = [0, 0], sizes = [8, 128], strides = [1, 1]} : vector<8x384xf32> to vector<8x128xf32>
    %348 = vector.extract_strided_slice %341 {offsets = [0, 0], sizes = [8, 128], strides = [1, 1]} : vector<8x384xf32> to vector<8x128xf32>
    %349 = arith.addf %347, %348 : vector<8x128xf32>
    %350 = arith.negf %349 : vector<8x128xf32>
    %351 = math.exp %350 : vector<8x128xf32>
    %cst_100 = arith.constant 1.000000e+00 : f32
    %352 = vector.broadcast %cst_100 : f32 to vector<8x128xf32>
    %353 = arith.addf %352, %351 : vector<8x128xf32>
    %354 = arith.divf %352, %353 : vector<8x128xf32>
    %355 = vector.extract_strided_slice %339 {offsets = [0, 128], sizes = [8, 128], strides = [1, 1]} : vector<8x384xf32> to vector<8x128xf32>
    %356 = vector.extract_strided_slice %341 {offsets = [0, 128], sizes = [8, 128], strides = [1, 1]} : vector<8x384xf32> to vector<8x128xf32>
    %357 = arith.addf %355, %356 : vector<8x128xf32>
    %358 = arith.negf %357 : vector<8x128xf32>
    %359 = math.exp %358 : vector<8x128xf32>
    %cst_101 = arith.constant 1.000000e+00 : f32
    %360 = vector.broadcast %cst_101 : f32 to vector<8x128xf32>
    %361 = arith.addf %360, %359 : vector<8x128xf32>
    %362 = arith.divf %360, %361 : vector<8x128xf32>
    %363 = vector.extract_strided_slice %339 {offsets = [0, 256], sizes = [8, 128], strides = [1, 1]} : vector<8x384xf32> to vector<8x128xf32>
    %364 = vector.extract_strided_slice %341 {offsets = [0, 256], sizes = [8, 128], strides = [1, 1]} : vector<8x384xf32> to vector<8x128xf32>
    %365 = arith.addf %364, %15 : vector<8x128xf32>
    %366 = arith.mulf %354, %365 : vector<8x128xf32>
    %367 = arith.addf %363, %366 : vector<8x128xf32>
    %368 = math.tanh %367 : vector<8x128xf32>
    %369 = arith.subf %313, %368 : vector<8x128xf32>
    %370 = arith.mulf %362, %369 : vector<8x128xf32>
    %371 = arith.addf %368, %370 : vector<8x128xf32>
    %372 = vector.extract_strided_slice %344 {offsets = [0, 0], sizes = [8, 128], strides = [1, 1]} : vector<8x384xf32> to vector<8x128xf32>
    %373 = vector.extract_strided_slice %346 {offsets = [0, 0], sizes = [8, 128], strides = [1, 1]} : vector<8x384xf32> to vector<8x128xf32>
    %374 = arith.addf %372, %373 : vector<8x128xf32>
    %375 = arith.negf %374 : vector<8x128xf32>
    %376 = math.exp %375 : vector<8x128xf32>
    %cst_102 = arith.constant 1.000000e+00 : f32
    %377 = vector.broadcast %cst_102 : f32 to vector<8x128xf32>
    %378 = arith.addf %377, %376 : vector<8x128xf32>
    %379 = arith.divf %377, %378 : vector<8x128xf32>
    %380 = vector.extract_strided_slice %344 {offsets = [0, 128], sizes = [8, 128], strides = [1, 1]} : vector<8x384xf32> to vector<8x128xf32>
    %381 = vector.extract_strided_slice %346 {offsets = [0, 128], sizes = [8, 128], strides = [1, 1]} : vector<8x384xf32> to vector<8x128xf32>
    %382 = arith.addf %380, %381 : vector<8x128xf32>
    %383 = arith.negf %382 : vector<8x128xf32>
    %384 = math.exp %383 : vector<8x128xf32>
    %cst_103 = arith.constant 1.000000e+00 : f32
    %385 = vector.broadcast %cst_103 : f32 to vector<8x128xf32>
    %386 = arith.addf %385, %384 : vector<8x128xf32>
    %387 = arith.divf %385, %386 : vector<8x128xf32>
    %388 = vector.extract_strided_slice %344 {offsets = [0, 256], sizes = [8, 128], strides = [1, 1]} : vector<8x384xf32> to vector<8x128xf32>
    %389 = vector.extract_strided_slice %346 {offsets = [0, 256], sizes = [8, 128], strides = [1, 1]} : vector<8x384xf32> to vector<8x128xf32>
    %390 = arith.addf %389, %18 : vector<8x128xf32>
    %391 = arith.mulf %379, %390 : vector<8x128xf32>
    %392 = arith.addf %388, %391 : vector<8x128xf32>
    %393 = math.tanh %392 : vector<8x128xf32>
    %394 = arith.subf %338, %393 : vector<8x128xf32>
    %395 = arith.mulf %387, %394 : vector<8x128xf32>
    %396 = arith.addf %393, %395 : vector<8x128xf32>
    %c56 = arith.constant 56 : index
    %c0_104 = arith.constant 0 : index
    %397 = vector.load %arg11[%c56, %c0_104] : memref<64x384xf32, #tpu.memory_space<vmem>>, vector<8x384xf32>
    %c0_105 = arith.constant 0 : index
    %c0_106 = arith.constant 0 : index
    %398 = vector.load %arg2[%c0_105, %c0_106] : memref<128x384xf32, #tpu.memory_space<vmem>>, vector<128x384xf32>
    %cst_107 = arith.constant dense<0.000000e+00> : vector<8x384xf32>
    %399 = tpu.matmul %371, %398, %cst_107 {dimension_numbers = #tpu.dot_dimension_numbers<[1], [0], [0], [1], [0, 0, 1, 1], [], []>} : vector<8x128xf32>, vector<128x384xf32>, vector<8x384xf32> -> vector<8x384xf32>
    %c0_108 = arith.constant 0 : index
    %c0_109 = arith.constant 0 : index
    %400 = vector.load %arg4[%c0_108, %c0_109] : memref<128x384xf32, #tpu.memory_space<vmem>>, vector<128x384xf32>
    %cst_110 = arith.constant dense<0.000000e+00> : vector<8x384xf32>
    %401 = tpu.matmul %371, %400, %cst_110 {dimension_numbers = #tpu.dot_dimension_numbers<[1], [0], [0], [1], [0, 0, 1, 1], [], []>} : vector<8x128xf32>, vector<128x384xf32>, vector<8x384xf32> -> vector<8x384xf32>
    %402 = arith.addf %401, %12 : vector<8x384xf32>
    %c0_111 = arith.constant 0 : index
    %c0_112 = arith.constant 0 : index
    %403 = vector.load %arg5[%c0_111, %c0_112] : memref<128x384xf32, #tpu.memory_space<vmem>>, vector<128x384xf32>
    %cst_113 = arith.constant dense<0.000000e+00> : vector<8x384xf32>
    %404 = tpu.matmul %396, %403, %cst_113 {dimension_numbers = #tpu.dot_dimension_numbers<[1], [0], [0], [1], [0, 0, 1, 1], [], []>} : vector<8x128xf32>, vector<128x384xf32>, vector<8x384xf32> -> vector<8x384xf32>
    %405 = vector.extract_strided_slice %397 {offsets = [0, 0], sizes = [8, 128], strides = [1, 1]} : vector<8x384xf32> to vector<8x128xf32>
    %406 = vector.extract_strided_slice %399 {offsets = [0, 0], sizes = [8, 128], strides = [1, 1]} : vector<8x384xf32> to vector<8x128xf32>
    %407 = arith.addf %405, %406 : vector<8x128xf32>
    %408 = arith.negf %407 : vector<8x128xf32>
    %409 = math.exp %408 : vector<8x128xf32>
    %cst_114 = arith.constant 1.000000e+00 : f32
    %410 = vector.broadcast %cst_114 : f32 to vector<8x128xf32>
    %411 = arith.addf %410, %409 : vector<8x128xf32>
    %412 = arith.divf %410, %411 : vector<8x128xf32>
    %413 = vector.extract_strided_slice %397 {offsets = [0, 128], sizes = [8, 128], strides = [1, 1]} : vector<8x384xf32> to vector<8x128xf32>
    %414 = vector.extract_strided_slice %399 {offsets = [0, 128], sizes = [8, 128], strides = [1, 1]} : vector<8x384xf32> to vector<8x128xf32>
    %415 = arith.addf %413, %414 : vector<8x128xf32>
    %416 = arith.negf %415 : vector<8x128xf32>
    %417 = math.exp %416 : vector<8x128xf32>
    %cst_115 = arith.constant 1.000000e+00 : f32
    %418 = vector.broadcast %cst_115 : f32 to vector<8x128xf32>
    %419 = arith.addf %418, %417 : vector<8x128xf32>
    %420 = arith.divf %418, %419 : vector<8x128xf32>
    %421 = vector.extract_strided_slice %397 {offsets = [0, 256], sizes = [8, 128], strides = [1, 1]} : vector<8x384xf32> to vector<8x128xf32>
    %422 = vector.extract_strided_slice %399 {offsets = [0, 256], sizes = [8, 128], strides = [1, 1]} : vector<8x384xf32> to vector<8x128xf32>
    %423 = arith.addf %422, %15 : vector<8x128xf32>
    %424 = arith.mulf %412, %423 : vector<8x128xf32>
    %425 = arith.addf %421, %424 : vector<8x128xf32>
    %426 = math.tanh %425 : vector<8x128xf32>
    %427 = arith.subf %371, %426 : vector<8x128xf32>
    %428 = arith.mulf %420, %427 : vector<8x128xf32>
    %429 = arith.addf %426, %428 : vector<8x128xf32>
    %430 = vector.extract_strided_slice %402 {offsets = [0, 0], sizes = [8, 128], strides = [1, 1]} : vector<8x384xf32> to vector<8x128xf32>
    %431 = vector.extract_strided_slice %404 {offsets = [0, 0], sizes = [8, 128], strides = [1, 1]} : vector<8x384xf32> to vector<8x128xf32>
    %432 = arith.addf %430, %431 : vector<8x128xf32>
    %433 = arith.negf %432 : vector<8x128xf32>
    %434 = math.exp %433 : vector<8x128xf32>
    %cst_116 = arith.constant 1.000000e+00 : f32
    %435 = vector.broadcast %cst_116 : f32 to vector<8x128xf32>
    %436 = arith.addf %435, %434 : vector<8x128xf32>
    %437 = arith.divf %435, %436 : vector<8x128xf32>
    %438 = vector.extract_strided_slice %402 {offsets = [0, 128], sizes = [8, 128], strides = [1, 1]} : vector<8x384xf32> to vector<8x128xf32>
    %439 = vector.extract_strided_slice %404 {offsets = [0, 128], sizes = [8, 128], strides = [1, 1]} : vector<8x384xf32> to vector<8x128xf32>
    %440 = arith.addf %438, %439 : vector<8x128xf32>
    %441 = arith.negf %440 : vector<8x128xf32>
    %442 = math.exp %441 : vector<8x128xf32>
    %cst_117 = arith.constant 1.000000e+00 : f32
    %443 = vector.broadcast %cst_117 : f32 to vector<8x128xf32>
    %444 = arith.addf %443, %442 : vector<8x128xf32>
    %445 = arith.divf %443, %444 : vector<8x128xf32>
    %446 = vector.extract_strided_slice %402 {offsets = [0, 256], sizes = [8, 128], strides = [1, 1]} : vector<8x384xf32> to vector<8x128xf32>
    %447 = vector.extract_strided_slice %404 {offsets = [0, 256], sizes = [8, 128], strides = [1, 1]} : vector<8x384xf32> to vector<8x128xf32>
    %448 = arith.addf %447, %18 : vector<8x128xf32>
    %449 = arith.mulf %437, %448 : vector<8x128xf32>
    %450 = arith.addf %446, %449 : vector<8x128xf32>
    %451 = math.tanh %450 : vector<8x128xf32>
    %452 = arith.subf %396, %451 : vector<8x128xf32>
    %453 = arith.mulf %445, %452 : vector<8x128xf32>
    %454 = arith.addf %451, %453 : vector<8x128xf32>
    %c0_118 = arith.constant 0 : index
    %c0_119 = arith.constant 0 : index
    %455 = vector.load %arg4[%c0_118, %c0_119] : memref<128x384xf32, #tpu.memory_space<vmem>>, vector<128x384xf32>
    %cst_120 = arith.constant dense<0.000000e+00> : vector<8x384xf32>
    %456 = tpu.matmul %429, %455, %cst_120 {dimension_numbers = #tpu.dot_dimension_numbers<[1], [0], [0], [1], [0, 0, 1, 1], [], []>} : vector<8x128xf32>, vector<128x384xf32>, vector<8x384xf32> -> vector<8x384xf32>
    %457 = arith.addf %456, %12 : vector<8x384xf32>
    %c0_121 = arith.constant 0 : index
    %c0_122 = arith.constant 0 : index
    %458 = vector.load %arg5[%c0_121, %c0_122] : memref<128x384xf32, #tpu.memory_space<vmem>>, vector<128x384xf32>
    %cst_123 = arith.constant dense<0.000000e+00> : vector<8x384xf32>
    %459 = tpu.matmul %454, %458, %cst_123 {dimension_numbers = #tpu.dot_dimension_numbers<[1], [0], [0], [1], [0, 0, 1, 1], [], []>} : vector<8x128xf32>, vector<128x384xf32>, vector<8x384xf32> -> vector<8x384xf32>
    %460 = vector.extract_strided_slice %457 {offsets = [0, 0], sizes = [8, 128], strides = [1, 1]} : vector<8x384xf32> to vector<8x128xf32>
    %461 = vector.extract_strided_slice %459 {offsets = [0, 0], sizes = [8, 128], strides = [1, 1]} : vector<8x384xf32> to vector<8x128xf32>
    %462 = arith.addf %460, %461 : vector<8x128xf32>
    %463 = arith.negf %462 : vector<8x128xf32>
    %464 = math.exp %463 : vector<8x128xf32>
    %cst_124 = arith.constant 1.000000e+00 : f32
    %465 = vector.broadcast %cst_124 : f32 to vector<8x128xf32>
    %466 = arith.addf %465, %464 : vector<8x128xf32>
    %467 = arith.divf %465, %466 : vector<8x128xf32>
    %468 = vector.extract_strided_slice %457 {offsets = [0, 128], sizes = [8, 128], strides = [1, 1]} : vector<8x384xf32> to vector<8x128xf32>
    %469 = vector.extract_strided_slice %459 {offsets = [0, 128], sizes = [8, 128], strides = [1, 1]} : vector<8x384xf32> to vector<8x128xf32>
    %470 = arith.addf %468, %469 : vector<8x128xf32>
    %471 = arith.negf %470 : vector<8x128xf32>
    %472 = math.exp %471 : vector<8x128xf32>
    %cst_125 = arith.constant 1.000000e+00 : f32
    %473 = vector.broadcast %cst_125 : f32 to vector<8x128xf32>
    %474 = arith.addf %473, %472 : vector<8x128xf32>
    %475 = arith.divf %473, %474 : vector<8x128xf32>
    %476 = vector.extract_strided_slice %457 {offsets = [0, 256], sizes = [8, 128], strides = [1, 1]} : vector<8x384xf32> to vector<8x128xf32>
    %477 = vector.extract_strided_slice %459 {offsets = [0, 256], sizes = [8, 128], strides = [1, 1]} : vector<8x384xf32> to vector<8x128xf32>
    %478 = arith.addf %477, %18 : vector<8x128xf32>
    %479 = arith.mulf %467, %478 : vector<8x128xf32>
    %480 = arith.addf %476, %479 : vector<8x128xf32>
    %481 = math.tanh %480 : vector<8x128xf32>
    %482 = arith.subf %454, %481 : vector<8x128xf32>
    %483 = arith.mulf %475, %482 : vector<8x128xf32>
    %484 = arith.addf %481, %483 : vector<8x128xf32>
    %c0_126 = arith.constant 0 : index
    %c0_127 = arith.constant 0 : index
    %485 = vector.load %arg8[%c0_126, %c0_127] : memref<128x128xf32, #tpu.memory_space<vmem>>, vector<128x128xf32>
    %cst_128 = arith.constant dense<0.000000e+00> : vector<8x128xf32>
    %486 = tpu.matmul %484, %485, %cst_128 {dimension_numbers = #tpu.dot_dimension_numbers<[1], [0], [0], [1], [0, 0, 1, 1], [], []>} : vector<8x128xf32>, vector<128x128xf32>, vector<8x128xf32> -> vector<8x128xf32>
    %c0_129 = arith.constant 0 : index
    %c0_130 = arith.constant 0 : index
    %487 = vector.load %arg9[%c0_129, %c0_130] : memref<1x128xf32, #tpu.memory_space<vmem>>, vector<1x128xf32>
    %488 = vector.broadcast %487 : vector<1x128xf32> to vector<8x128xf32>
    %489 = arith.addf %486, %488 : vector<8x128xf32>
    %c0_131 = arith.constant 0 : index
    %c0_132 = arith.constant 0 : index
    %490 = vector.load %arg10[%c0_131, %c0_132] : memref<8x128xf32, #tpu.memory_space<vmem>>, vector<8x128xf32>
    tpu.vector_store %arg10[%c0_131, %c0_132], %489 {strides = array<i32>} : memref<8x128xf32, #tpu.memory_space<vmem>>, vector<8x128xf32>,
    return
  }
}

</mosaic_0001>

<llo_original>
// kernel: leonard_gru_multi_big.1
$region0: #{leonard_gru_multi_big.1}
  #allocation0 [shape = 'u32[]', space=smem, size = 0x4, offset = 0x4, fixed_abs, tag = 'smem constant byte address 0x4 - core index']
  #allocation1 [shape = 'u32[144,128]{1,0:T(1,128)}', space=vmem, size = 0x12000, scoped, tag = 'internal scratch']
  #allocation2 [shape = 'f32[64,384]{1,0:T(8,128)}', space=vmem, size = 0x18000, scoped, tag = 'scratch operand']
  %s0 = inlined_call_operand.vmem [shape: s32[64,1], index: 0, kind: input, shape index: {}]
  %s1 = inlined_call_operand.hbm [shape: f32[128,384], index: 1, kind: input, shape index: {}]
  %s2 = inlined_call_operand.hbm [shape: f32[128,384], index: 2, kind: input, shape index: {}]
  %s3 = inlined_call_operand.vmem [shape: f32[1,128], index: 3, kind: input, shape index: {}]
  %s4 = inlined_call_operand.hbm [shape: f32[128,384], index: 4, kind: input, shape index: {}]
  %s5 = inlined_call_operand.hbm [shape: f32[128,384], index: 5, kind: input, shape index: {}]
  %s6 = inlined_call_operand.vmem [shape: f32[1,384], index: 6, kind: input, shape index: {}]
  %s7 = inlined_call_operand.vmem [shape: f32[1,128], index: 7, kind: input, shape index: {}]
  %s8 = inlined_call_operand.hbm [shape: f32[128,128], index: 8, kind: input, shape index: {}]
  %s9 = inlined_call_operand.vmem [shape: f32[1,128], index: 9, kind: input, shape index: {}]
  %s10 = inlined_call_operand.vmem [shape: f32[8,128], index: 10, kind: output, shape index: {}]
  %s11 = sld [smem:[#allocation0]]
  $region70: #{leonard_gru_multi_big.1} parent=0
    _
  %s13 = ssub.s32 1, %s11
  %s14 = scalar_select 0, %s13, %s11
  $region1: #{leonard_gru_multi_big.1} parent=0
    #allocation3 [shape = 'u8[196608]{0}', space=vmem, size = 0x30000, scoped, tag = 'input window, operand 1, single buffered']
    #allocation4 [shape = 's32[1]{0}', space=sflag, size = 0x4, scoped, tag = 'scoped memory for leonard_gru_multi_big.1']
    #allocation5 [shape = 'u8[196608]{0}', space=vmem, size = 0x30000, scoped, tag = 'input window, operand 2, single buffered']
    #allocation6 [shape = 's32[1]{0}', space=sflag, size = 0x4, scoped, tag = 'scoped memory for leonard_gru_multi_big.1']
    #allocation7 [shape = 'u8[196608]{0}', space=vmem, size = 0x30000, scoped, tag = 'input window, operand 4, single buffered']
    #allocation8 [shape = 'u8[196608]{0}', space=vmem, size = 0x30000, scoped, tag = 'input window, operand 5, single buffered']
    #allocation9 [shape = 's32[1]{0}', space=sflag, size = 0x4, scoped, tag = 'scoped memory for leonard_gru_multi_big.1']
    #allocation10 [shape = 'u8[65536]{0}', space=vmem, size = 0x10000, scoped, tag = 'input window, operand 8, single buffered']
    %15 = vsyncpa [#allocation4], 0
    %16 = vsyncpa [#allocation6], 0
    %17 = vsyncpa [#allocation9], 0
    // Predicated region
    $region2: #{leonard_gru_multi_big.1} parent=1 // pred_check
      _
    $region3: #{leonard_gru_multi_big.1} parent=1 // pred_check_branch
      %19 = sbr.rel (0) target = $region5
    $region4: #{leonard_gru_multi_big.1} parent=1 // pred_region
      _
    $region5: #{leonard_gru_multi_big.1} parent=1 // pred_fallthru
      _
    // Predicated region
    $region6: #{leonard_gru_multi_big.1} parent=1 // pred_check
      _
    $region7: #{leonard_gru_multi_big.1} parent=1 // pred_check_branch
      %21 = sbr.rel (0) target = $region9
    $region8: #{leonard_gru_multi_big.1} parent=1 // pred_region
      %s23 = ssub.s32 6144, 6144
      %24 = vsyncadd [#allocation4], %s23
      %s25 = sshll.u32 [#allocation3], 4
      %s26 = int_to_ptr.vmem [resolvable:$true] %s25
      %31 = dma.hbm_to_vmem [thread:$0]  %s1, 6144, %s26, [#allocation4], 384, 384, 24
    $region9: #{leonard_gru_multi_big.1} parent=1 // pred_fallthru
      _
    // Predicated region
    $region10: #{leonard_gru_multi_big.1} parent=1 // pred_check
      _
    $region11: #{leonard_gru_multi_big.1} parent=1 // pred_check_branch
      %33 = sbr.rel (0) target = $region13
    $region12: #{leonard_gru_multi_big.1} parent=1 // pred_region
      %s35 = ssub.s32 6144, 6144
      %36 = vsyncadd [#allocation6], %s35
      %s37 = sshll.u32 [#allocation5], 4
      %s38 = int_to_ptr.vmem [resolvable:$true] %s37
      %43 = dma.hbm_to_vmem [thread:$0]  %s2, 6144, %s38, [#allocation6], 384, 384, 24
    $region13: #{leonard_gru_multi_big.1} parent=1 // pred_fallthru
      _
    // Predicated region
    $region14: #{leonard_gru_multi_big.1} parent=1 // pred_check
      _
    $region15: #{leonard_gru_multi_big.1} parent=1 // pred_check_branch
      %45 = sbr.rel (0) target = $region17
    $region16: #{leonard_gru_multi_big.1} parent=1 // pred_region
      _
    $region17: #{leonard_gru_multi_big.1} parent=1 // pred_fallthru
      _
    // Predicated region
    $region18: #{leonard_gru_multi_big.1} parent=1 // pred_check
      _
    $region19: #{leonard_gru_multi_big.1} parent=1 // pred_check_branch
      %47 = sbr.rel (0) target = $region21
    $region20: #{leonard_gru_multi_big.1} parent=1 // pred_region
      %s49 = ssub.s32 6144, 6144
      %50 = vsyncadd [#allocation6], %s49
      %s51 = sshll.u32 [#allocation7], 4
      %s52 = int_to_ptr.vmem [resolvable:$true] %s51
      %57 = dma.hbm_to_vmem [thread:$0]  %s4, 6144, %s52, [#allocation6], 384, 384, 24
    $region21: #{leonard_gru_multi_big.1} parent=1 // pred_fallthru
      _
    // Predicated region
    $region22: #{leonard_gru_multi_big.1} parent=1 // pred_check
      _
    $region23: #{leonard_gru_multi_big.1} parent=1 // pred_check_branch
      %59 = sbr.rel (0) target = $region25
    $region24: #{leonard_gru_multi_big.1} parent=1 // pred_region
      %s61 = ssub.s32 6144, 6144
      %62 = vsyncadd [#allocation9], %s61
      %s63 = sshll.u32 [#allocation8], 4
      %s64 = int_to_ptr.vmem [resolvable:$true] %s63
      %69 = dma.hbm_to_vmem [thread:$0]  %s5, 6144, %s64, [#allocation9], 384, 384, 24
    $region25: #{leonard_gru_multi_big.1} parent=1 // pred_fallthru
      _
    // Predicated region
    $region26: #{leonard_gru_multi_big.1} parent=1 // pred_check
      _
    $region27: #{leonard_gru_multi_big.1} parent=1 // pred_check_branch
      %71 = sbr.rel (0) target = $region29
    $region28: #{leonard_gru_multi_big.1} parent=1 // pred_region
      _
    $region29: #{leonard_gru_multi_big.1} parent=1 // pred_fallthru
      _
    // Predicated region
    $region30: #{leonard_gru_multi_big.1} parent=1 // pred_check
      _
    $region31: #{leonard_gru_multi_big.1} parent=1 // pred_check_branch
      %73 = sbr.rel (0) target = $region33
    $region32: #{leonard_gru_multi_big.1} parent=1 // pred_region
      _
    $region33: #{leonard_gru_multi_big.1} parent=1 // pred_fallthru
      _
    // Predicated region
    $region34: #{leonard_gru_multi_big.1} parent=1 // pred_check
      _
    $region35: #{leonard_gru_multi_big.1} parent=1 // pred_check_branch
      %75 = sbr.rel (0) target = $region37
    $region36: #{leonard_gru_multi_big.1} parent=1 // pred_region
      %s77 = ssub.s32 2048, 2048
      %78 = vsyncadd [#allocation9], %s77
      %s79 = sshll.u32 [#allocation10], 4
      %s80 = int_to_ptr.vmem [resolvable:$true] %s79
      %85 = dma.hbm_to_vmem [thread:$0]  %s8, 2048, %s80, [#allocation9], 128, 128, 8
    $region37: #{leonard_gru_multi_big.1} parent=1 // pred_fallthru
      _
    // Predicated region
    $region38: #{leonard_gru_multi_big.1} parent=1 // pred_check
      _
    $region39: #{leonard_gru_multi_big.1} parent=1 // pred_check_branch
      %87 = sbr.rel (0) target = $region41
    $region40: #{leonard_gru_multi_big.1} parent=1 // pred_region
      _
    $region41: #{leonard_gru_multi_big.1} parent=1 // pred_fallthru
      _
    // Predicated region
    $region42: #{leonard_gru_multi_big.1} parent=1 // pred_check
      _
    $region43: #{leonard_gru_multi_big.1} parent=1 // pred_check_branch
      %89 = sbr.rel (0) target = $region45
    $region44: #{leonard_gru_multi_big.1} parent=1 // pred_region
      %90 = dma.done [#allocation4], 6144
    $region45: #{leonard_gru_multi_big.1} parent=1 // pred_fallthru
      _
    // Predicated region
    $region46: #{leonard_gru_multi_big.1} parent=1 // pred_check
      _
    $region47: #{leonard_gru_multi_big.1} parent=1 // pred_check_branch
      %92 = sbr.rel (0) target = $region49
    $region48: #{leonard_gru_multi_big.1} parent=1 // pred_region
      %93 = dma.done [#allocation6], 6144
    $region49: #{leonard_gru_multi_big.1} parent=1 // pred_fallthru
      _
    // Predicated region
    $region50: #{leonard_gru_multi_big.1} parent=1 // pred_check
      _
    $region51: #{leonard_gru_multi_big.1} parent=1 // pred_check_branch
      %95 = sbr.rel (0) target = $region53
    $region52: #{leonard_gru_multi_big.1} parent=1 // pred_region
      %96 = dma.done [#allocation6], 6144
    $region53: #{leonard_gru_multi_big.1} parent=1 // pred_fallthru
      _
    // Predicated region
    $region54: #{leonard_gru_multi_big.1} parent=1 // pred_check
      _
    $region55: #{leonard_gru_multi_big.1} parent=1 // pred_check_branch
      %98 = sbr.rel (0) target = $region57
    $region56: #{leonard_gru_multi_big.1} parent=1 // pred_region
      %99 = dma.done [#allocation9], 6144
    $region57: #{leonard_gru_multi_big.1} parent=1 // pred_fallthru
      _
    // Predicated region
    $region58: #{leonard_gru_multi_big.1} parent=1 // pred_check
      _
    $region59: #{leonard_gru_multi_big.1} parent=1 // pred_check_branch
      %101 = sbr.rel (0) target = $region61
    $region60: #{leonard_gru_multi_big.1} parent=1 // pred_region
      %102 = dma.done [#allocation9], 2048
    $region61: #{leonard_gru_multi_big.1} parent=1 // pred_fallthru
      _
    %v103 = vld [vmem:[%s0] sm:$0xff]
    %v104 = vld [vmem:[%s0 + $0x8] sm:$0xff]
    %v105 = vld [vmem:[%s0 + $0x10] sm:$0xff]
    %v106 = vld [vmem:[%s0 + $0x18] sm:$0xff]
    %v107 = vld [vmem:[%s0 + $0x20] sm:$0xff]
    %v108 = vld [vmem:[%s0 + $0x28] sm:$0xff]
    %v109 = vld [vmem:[%s0 + $0x30] sm:$0xff]
    %v110 = vld [vmem:[%s0 + $0x38] sm:$0xff]
    %111 = vset.pattern.permute.xlu0 0
    %112 = vperm.xlu0 %111, %v103
    %v113 = vpop.permute.xlu0 %112
    %114 = vset.pattern.permute.xlu0 0
    %115 = vperm.xlu0 %114, %v104
    %v116 = vpop.permute.xlu0 %115
    %117 = vset.pattern.permute.xlu0 0
    %118 = vperm.xlu0 %117, %v105
    %v119 = vpop.permute.xlu0 %118
    %120 = vset.pattern.permute.xlu0 0
    %121 = vperm.xlu0 %120, %v106
    %v122 = vpop.permute.xlu0 %121
    %123 = vset.pattern.permute.xlu0 0
    %124 = vperm.xlu0 %123, %v107
    %v125 = vpop.permute.xlu0 %124
    %126 = vset.pattern.permute.xlu0 0
    %127 = vperm.xlu0 %126, %v108
    %v128 = vpop.permute.xlu0 %127
    %129 = vset.pattern.permute.xlu0 0
    %130 = vperm.xlu0 %129, %v109
    %v131 = vpop.permute.xlu0 %130
    %132 = vset.pattern.permute.xlu0 0
    %133 = vperm.xlu0 %132, %v110
    %v134 = vpop.permute.xlu0 %133
    %v135 = vlaneseq
    %v136 = vand.u32 %v135, 127
    %vm137 = vcmp.eq.s32.totalorder %v136, %v113
    %vm138 = vcmp.eq.s32.totalorder %v136, %v116
    %vm139 = vcmp.eq.s32.totalorder %v136, %v119
    %vm140 = vcmp.eq.s32.totalorder %v136, %v122
    %vm141 = vcmp.eq.s32.totalorder %v136, %v125
    %vm142 = vcmp.eq.s32.totalorder %v136, %v128
    %vm143 = vcmp.eq.s32.totalorder %v136, %v131
    %vm144 = vcmp.eq.s32.totalorder %v136, %v134
    %v145 = vsel %vm137, 1, 0
    %v146 = vsel %vm138, 1, 0
    %v147 = vsel %vm139, 1, 0
    %v148 = vsel %vm140, 1, 0
    %v149 = vsel %vm141, 1, 0
    %v150 = vsel %vm142, 1, 0
    %v151 = vsel %vm143, 1, 0
    %v152 = vsel %vm144, 1, 0
    %v153 = vcvt.s32.f32 %v145
    %v154 = vcvt.s32.f32 %v146
    %v155 = vcvt.s32.f32 %v147
    %v156 = vcvt.s32.f32 %v148
    %v157 = vcvt.s32.f32 %v149
    %v158 = vcvt.s32.f32 %v150
    %v159 = vcvt.s32.f32 %v151
    %v160 = vcvt.s32.f32 %v152
    %v161 = vld [vmem:[#allocation3] sm:$0xff]
    %v162 = vld [vmem:[#allocation3 + $0x8] sm:$0xff]
    %v163 = vld [vmem:[#allocation3 + $0x10] sm:$0xff]
    %v164 = vld [vmem:[#allocation3 + $0x18] sm:$0xff]
    %v165 = vld [vmem:[#allocation3 + $0x20] sm:$0xff]
    %v166 = vld [vmem:[#allocation3 + $0x28] sm:$0xff]
    %v167 = vld [vmem:[#allocation3 + $0x30] sm:$0xff]
    %v168 = vld [vmem:[#allocation3 + $0x38] sm:$0xff]
    %v169 = vld [vmem:[#allocation3 + $0x40] sm:$0xff]
    %v170 = vld [vmem:[#allocation3 + $0x48] sm:$0xff]
    %v171 = vld [vmem:[#allocation3 + $0x50] sm:$0xff]
    %v172 = vld [vmem:[#allocation3 + $0x58] sm:$0xff]
    %v173 = vld [vmem:[#allocation3 + $0x60] sm:$0xff]
    %v174 = vld [vmem:[#allocation3 + $0x68] sm:$0xff]
    %v175 = vld [vmem:[#allocation3 + $0x70] sm:$0xff]
    %v176 = vld [vmem:[#allocation3 + $0x78] sm:$0xff]
    %v177 = vld [vmem:[#allocation3 + $0x80] sm:$0xff]
    %v178 = vld [vmem:[#allocation3 + $0x88] sm:$0xff]
    %v179 = vld [vmem:[#allocation3 + $0x90] sm:$0xff]
    %v180 = vld [vmem:[#allocation3 + $0x98] sm:$0xff]
    %v181 = vld [vmem:[#allocation3 + $0xa0] sm:$0xff]
    %v182 = vld [vmem:[#allocation3 + $0xa8] sm:$0xff]
    %v183 = vld [vmem:[#allocation3 + $0xb0] sm:$0xff]
    %v184 = vld [vmem:[#allocation3 + $0xb8] sm:$0xff]
    %v185 = vld [vmem:[#allocation3 + $0xc0] sm:$0xff]
    %v186 = vld [vmem:[#allocation3 + $0xc8] sm:$0xff]
    %v187 = vld [vmem:[#allocation3 + $0xd0] sm:$0xff]
    %v188 = vld [vmem:[#allocation3 + $0xd8] sm:$0xff]
    %v189 = vld [vmem:[#allocation3 + $0xe0] sm:$0xff]
    %v190 = vld [vmem:[#allocation3 + $0xe8] sm:$0xff]
    %v191 = vld [vmem:[#allocation3 + $0xf0] sm:$0xff]
    %v192 = vld [vmem:[#allocation3 + $0xf8] sm:$0xff]
    %v193 = vld [vmem:[#allocation3 + $0x100] sm:$0xff]
    %v194 = vld [vmem:[#allocation3 + $0x108] sm:$0xff]
    %v195 = vld [vmem:[#allocation3 + $0x110] sm:$0xff]
    %v196 = vld [vmem:[#allocation3 + $0x118] sm:$0xff]
    %v197 = vld [vmem:[#allocation3 + $0x120] sm:$0xff]
    %v198 = vld [vmem:[#allocation3 + $0x128] sm:$0xff]
    %v199 = vld [vmem:[#allocation3 + $0x130] sm:$0xff]
    %v200 = vld [vmem:[#allocation3 + $0x138] sm:$0xff]
    %v201 = vld [vmem:[#allocation3 + $0x140] sm:$0xff]
    %v202 = vld [vmem:[#allocation3 + $0x148] sm:$0xff]
    %v203 = vld [vmem:[#allocation3 + $0x150] sm:$0xff]
    %v204 = vld [vmem:[#allocation3 + $0x158] sm:$0xff]
    %v205 = vld [vmem:[#allocation3 + $0x160] sm:$0xff]
    %v206 = vld [vmem:[#allocation3 + $0x168] sm:$0xff]
    %v207 = vld [vmem:[#allocation3 + $0x170] sm:$0xff]
    %v208 = vld [vmem:[#allocation3 + $0x178] sm:$0xff]
    %209 = vmatprep.subr.mxu0 %v207
    %210 = vmatpush1.msra.mxu0 %v206
    %211 = vmatprep.subr.mxu0 %v204
    %212 = vmatpush1.msra.mxu0 %v203
    %213 = vmatprep.subr.mxu0 %v201
    %214 = vmatpush1.msra.mxu0 %v200
    %215 = vmatprep.subr.mxu0 %v198
    %216 = vmatpush1.msra.mxu0 %v197
    %217 = vmatprep.subr.mxu0 %v195
    %218 = vmatpush1.msra.mxu0 %v194
    %219 = vmatprep.subr.mxu0 %v192
    %220 = vmatpush1.msra.mxu0 %v191
    %221 = vmatprep.subr.mxu0 %v189
    %222 = vmatpush1.msra.mxu0 %v188
    %223 = vmatprep.subr.mxu0 %v186
    %224 = vmatpush1.msra.mxu0 %v185
    %225 = vmatprep.subr.mxu0 %v183
    %226 = vmatpush1.msra.mxu0 %v182
    %227 = vmatprep.subr.mxu0 %v180
    %228 = vmatpush1.msra.mxu0 %v179
    %229 = vmatprep.subr.mxu0 %v177
    %230 = vmatpush1.msra.mxu0 %v176
    %231 = vmatprep.subr.mxu0 %v174
    %232 = vmatpush1.msra.mxu0 %v173
    %233 = vmatprep.subr.mxu0 %v171
    %234 = vmatpush1.msra.mxu0 %v170
    %235 = vmatprep.subr.mxu0 %v168
    %236 = vmatpush1.msra.mxu0 %v167
    %237 = vmatprep.subr.mxu0 %v165
    %238 = vmatpush1.msra.mxu0 %v164
    %239 = vmatprep.subr.mxu0 %v162
    %240 = vmatpush1.msra.mxu0 %v161
    %241 = vmatprep.subr.mxu0 0.0
    %242 = vmatpush2.msra.mxu0 0.0
    %243 = vmatprep.subr.mxu0 0.0
    %244 = vmatpush2.msra.mxu0 0.0
    %245 = vmatprep.subr.mxu0 0.0
    %246 = vmatpush2.msra.mxu0 0.0
    %247 = vmatprep.subr.mxu0 0.0
    %248 = vmatpush2.msra.mxu0 0.0
    %249 = vmatprep.subr.mxu0 0.0
    %250 = vmatpush2.msra.mxu0 0.0
    %251 = vmatprep.subr.mxu0 0.0
    %252 = vmatpush2.msra.mxu0 0.0
    %253 = vmatprep.subr.mxu0 0.0
    %254 = vmatpush2.msra.mxu0 0.0
    %255 = vmatprep.subr.mxu0 0.0
    %256 = vmatpush2.msra.mxu0 0.0
    %257 = vmatprep.subr.mxu0 0.0
    %258 = vmatpush2.msra.mxu0 0.0
    %259 = vmatprep.subr.mxu0 0.0
    %260 = vmatpush2.msra.mxu0 0.0
    %261 = vmatprep.subr.mxu0 0.0
    %262 = vmatpush2.msra.mxu0 0.0
    %263 = vmatprep.subr.mxu0 0.0
    %264 = vmatpush2.msra.mxu0 0.0
    %265 = vmatprep.subr.mxu0 0.0
    %266 = vmatpush2.msra.mxu0 0.0
    %267 = vmatprep.subr.mxu0 0.0
    %268 = vmatpush2.msra.mxu0 0.0
    %269 = vmatprep.subr.mxu0 0.0
    %270 = vmatpush2.msra.mxu0 0.0
    %271 = vmatprep.subr.mxu0 0.0
    %272 = vmatpush2.msra.mxu0 0.0
    %273 = vmatprep.mubr.f32.mxu0 0.0
    %274 = vmatmul.mubr.f32.gmra.mxu0 %v153
    %v275 = vpop.f32.mrf.mxu0
    %v276 = vadd.f32 0.0, %v275
    %v277 = vpop.f32.mrf.mxu0
    %v278 = vadd.f32 0.0, %v277
    %279 = vmatprep.mubr.f32.mxu0 0.0
    %280 = vmatmul.mubr.f32.gmra.mxu0 %v154
    %v281 = vpop.f32.mrf.mxu0
    %v282 = vadd.f32 0.0, %v281
    %v283 = vpop.f32.mrf.mxu0
    %v284 = vadd.f32 0.0, %v283
    %285 = vmatprep.mubr.f32.mxu0 0.0
    %286 = vmatmul.mubr.f32.gmra.mxu0 %v155
    %v287 = vpop.f32.mrf.mxu0
    %v288 = vadd.f32 0.0, %v287
    %v289 = vpop.f32.mrf.mxu0
    %v290 = vadd.f32 0.0, %v289
    %291 = vmatprep.mubr.f32.mxu0 0.0
    %292 = vmatmul.mubr.f32.gmra.mxu0 %v156
    %v293 = vpop.f32.mrf.mxu0
    %v294 = vadd.f32 0.0, %v293
    %v295 = vpop.f32.mrf.mxu0
    %v296 = vadd.f32 0.0, %v295
    %297 = vmatprep.mubr.f32.mxu0 0.0
    %298 = vmatmul.mubr.f32.gmra.mxu0 %v157
    %v299 = vpop.f32.mrf.mxu0
    %v300 = vadd.f32 0.0, %v299
    %v301 = vpop.f32.mrf.mxu0
    %v302 = vadd.f32 0.0, %v301
    %303 = vmatprep.mubr.f32.mxu0 0.0
    %304 = vmatmul.mubr.f32.gmra.mxu0 %v158
    %v305 = vpop.f32.mrf.mxu0
    %v306 = vadd.f32 0.0, %v305
    %v307 = vpop.f32.mrf.mxu0
    %v308 = vadd.f32 0.0, %v307
    %309 = vmatprep.mubr.f32.mxu0 0.0
    %310 = vmatmul.mubr.f32.gmra.mxu0 %v159
    %v311 = vpop.f32.mrf.mxu0
    %v312 = vadd.f32 0.0, %v311
    %v313 = vpop.f32.mrf.mxu0
    %v314 = vadd.f32 0.0, %v313
    %315 = vmatprep.mubr.f32.mxu0 0.0
    %316 = vmatmul.mubr.f32.gmra.mxu0 %v160
    %v317 = vpop.f32.mrf.mxu0
    %v318 = vadd.f32 0.0, %v317
    %v319 = vpop.f32.mrf.mxu0
    %v320 = vadd.f32 0.0, %v319
    %321 = vdwg.mxu0
    %322 = vmatprep.subr.mxu0 0.0
    %323 = vmatpush1.msra.mxu0 %v208
    %324 = vmatprep.subr.mxu0 0.0
    %325 = vmatpush1.msra.mxu0 %v205
    %326 = vmatprep.subr.mxu0 0.0
    %327 = vmatpush1.msra.mxu0 %v202
    %328 = vmatprep.subr.mxu0 0.0
    %329 = vmatpush1.msra.mxu0 %v199
    %330 = vmatprep.subr.mxu0 0.0
    %331 = vmatpush1.msra.mxu0 %v196
    %332 = vmatprep.subr.mxu0 0.0
    %333 = vmatpush1.msra.mxu0 %v193
    %334 = vmatprep.subr.mxu0 0.0
    %335 = vmatpush1.msra.mxu0 %v190
    %336 = vmatprep.subr.mxu0 0.0
    %337 = vmatpush1.msra.mxu0 %v187
    %338 = vmatprep.subr.mxu0 0.0
    %339 = vmatpush1.msra.mxu0 %v184
    %340 = vmatprep.subr.mxu0 0.0
    %341 = vmatpush1.msra.mxu0 %v181
    %342 = vmatprep.subr.mxu0 0.0
    %343 = vmatpush1.msra.mxu0 %v178
    %344 = vmatprep.subr.mxu0 0.0
    %345 = vmatpush1.msra.mxu0 %v175
    %346 = vmatprep.subr.mxu0 0.0
    %347 = vmatpush1.msra.mxu0 %v172
    %348 = vmatprep.subr.mxu0 0.0
    %349 = vmatpush1.msra.mxu0 %v169
    %350 = vmatprep.subr.mxu0 0.0
    %351 = vmatpush1.msra.mxu0 %v166
    %352 = vmatprep.subr.mxu0 0.0
    %353 = vmatpush1.msra.mxu0 %v163
    %354 = vmatprep.subr.mxu0 0.0
    %355 = vmatpush2.msra.mxu0 0.0
    %356 = vmatprep.subr.mxu0 0.0
    %357 = vmatpush2.msra.mxu0 0.0
    %358 = vmatprep.subr.mxu0 0.0
    %359 = vmatpush2.msra.mxu0 0.0
    %360 = vmatprep.subr.mxu0 0.0
    %361 = vmatpush2.msra.mxu0 0.0
    %362 = vmatprep.subr.mxu0 0.0
    %363 = vmatpush2.msra.mxu0 0.0
    %364 = vmatprep.subr.mxu0 0.0
    %365 = vmatpush2.msra.mxu0 0.0
    %366 = vmatprep.subr.mxu0 0.0
    %367 = vmatpush2.msra.mxu0 0.0
    %368 = vmatprep.subr.mxu0 0.0
    %369 = vmatpush2.msra.mxu0 0.0
    %370 = vmatprep.subr.mxu0 0.0
    %371 = vmatpush2.msra.mxu0 0.0
    %372 = vmatprep.subr.mxu0 0.0
    %373 = vmatpush2.msra.mxu0 0.0
    %374 = vmatprep.subr.mxu0 0.0
    %375 = vmatpush2.msra.mxu0 0.0
    %376 = vmatprep.subr.mxu0 0.0
    %377 = vmatpush2.msra.mxu0 0.0
    %378 = vmatprep.subr.mxu0 0.0
    %379 = vmatpush2.msra.mxu0 0.0
    %380 = vmatprep.subr.mxu0 0.0
    %381 = vmatpush2.msra.mxu0 0.0
    %382 = vmatprep.subr.mxu0 0.0
    %383 = vmatpush2.msra.mxu0 0.0
    %384 = vmatprep.subr.mxu0 0.0
    %385 = vmatpush2.msra.mxu0 0.0
    %386 = vmatprep.mubr.f32.mxu0 0.0
    %387 = vmatmul.mubr.f32.gmra.mxu0 %v153
    %v388 = vpop.f32.mrf.mxu0
    %v389 = vadd.f32 0.0, %v388
    %v390 = vpop.f32.mrf.mxu0
    %391 = vmatprep.mubr.f32.mxu0 0.0
    %392 = vmatmul.mubr.f32.gmra.mxu0 %v154
    %v393 = vpop.f32.mrf.mxu0
    %v394 = vadd.f32 0.0, %v393
    %v395 = vpop.f32.mrf.mxu0
    %396 = vmatprep.mubr.f32.mxu0 0.0
    %397 = vmatmul.mubr.f32.gmra.mxu0 %v155
    %v398 = vpop.f32.mrf.mxu0
    %v399 = vadd.f32 0.0, %v398
    %v400 = vpop.f32.mrf.mxu0
    %401 = vmatprep.mubr.f32.mxu0 0.0
    %402 = vmatmul.mubr.f32.gmra.mxu0 %v156
    %v403 = vpop.f32.mrf.mxu0
    %v404 = vadd.f32 0.0, %v403
    %v405 = vpop.f32.mrf.mxu0
    %406 = vmatprep.mubr.f32.mxu0 0.0
    %407 = vmatmul.mubr.f32.gmra.mxu0 %v157
    %v408 = vpop.f32.mrf.mxu0
    %v409 = vadd.f32 0.0, %v408
    %v410 = vpop.f32.mrf.mxu0
    %411 = vmatprep.mubr.f32.mxu0 0.0
    %412 = vmatmul.mubr.f32.gmra.mxu0 %v158
    %v413 = vpop.f32.mrf.mxu0
    %v414 = vadd.f32 0.0, %v413
    %v415 = vpop.f32.mrf.mxu0
    %416 = vmatprep.mubr.f32.mxu0 0.0
    %417 = vmatmul.mubr.f32.gmra.mxu0 %v159
    %v418 = vpop.f32.mrf.mxu0
    %v419 = vadd.f32 0.0, %v418
    %v420 = vpop.f32.mrf.mxu0
    %421 = vmatprep.mubr.f32.mxu0 0.0
    %422 = vmatmul.mubr.f32.gmra.mxu0 %v160
    %v423 = vpop.f32.mrf.mxu0
    %v424 = vadd.f32 0.0, %v423
    %v425 = vpop.f32.mrf.mxu0
    %426 = vdwg.mxu0
    %427 = vst [vmem:[#allocation2] sm:$0xff] %v276
    %428 = vst [vmem:[#allocation2 + $0x8] sm:$0xff] %v278
    %429 = vst [vmem:[#allocation2 + $0x10] sm:$0xff] %v389
    %430 = vst [vmem:[#allocation2 + $0x18] sm:$0xff] %v282
    %431 = vst [vmem:[#allocation2 + $0x20] sm:$0xff] %v284
    %432 = vst [vmem:[#allocation2 + $0x28] sm:$0xff] %v394
    %433 = vst [vmem:[#allocation2 + $0x30] sm:$0xff] %v288
    %434 = vst [vmem:[#allocation2 + $0x38] sm:$0xff] %v290
    %435 = vst [vmem:[#allocation2 + $0x40] sm:$0xff] %v399
    %436 = vst [vmem:[#allocation2 + $0x48] sm:$0xff] %v294
    %437 = vst [vmem:[#allocation2 + $0x50] sm:$0xff] %v296
    %438 = vst [vmem:[#allocation2 + $0x58] sm:$0xff] %v404
    %439 = vst [vmem:[#allocation2 + $0x60] sm:$0xff] %v300
    %440 = vst [vmem:[#allocation2 + $0x68] sm:$0xff] %v302
    %441 = vst [vmem:[#allocation2 + $0x70] sm:$0xff] %v409
    %442 = vst [vmem:[#allocation2 + $0x78] sm:$0xff] %v306
    %443 = vst [vmem:[#allocation2 + $0x80] sm:$0xff] %v308
    %444 = vst [vmem:[#allocation2 + $0x88] sm:$0xff] %v414
    %445 = vst [vmem:[#allocation2 + $0x90] sm:$0xff] %v312
    %446 = vst [vmem:[#allocation2 + $0x98] sm:$0xff] %v314
    %447 = vst [vmem:[#allocation2 + $0xa0] sm:$0xff] %v419
    %448 = vst [vmem:[#allocation2 + $0xa8] sm:$0xff] %v318
    %449 = vst [vmem:[#allocation2 + $0xb0] sm:$0xff] %v320
    %450 = vst [vmem:[#allocation2 + $0xb8] sm:$0xff] %v424
    %v451 = vld [vmem:[%s6] sm:$0x7]
    %v453 = vlaneseq
    %v454 = vshrl.u32 %v453, 7
    %v455 = vsub.s32 0, %v454
    %v456 = vrot.slane %v451, %v455
    %v457 = vlaneseq
    %v458 = vshrl.u32 %v457, 7
    %v459 = vsub.s32 1, %v458
    %v460 = vrot.slane %v451, %v459
    %v461 = vlaneseq
    %v462 = vshrl.u32 %v461, 7
    %v463 = vsub.s32 2, %v462
    %v464 = vrot.slane %v451, %v463
    %v468 = vld [vmem:[%s3] sm:$0x1]
    %v470 = vlaneseq
    %v471 = vshrl.u32 %v470, 7
    %v472 = vsub.s32 0, %v471
    %v473 = vrot.slane %v468, %v472
    %v475 = vld [vmem:[%s7] sm:$0x1]
    %v477 = vlaneseq
    %v478 = vshrl.u32 %v477, 7
    %v479 = vsub.s32 0, %v478
    %v480 = vrot.slane %v475, %v479
    %v482 = vld [vmem:[#allocation2] sm:$0xff]
    %v483 = vld [vmem:[#allocation2 + $0x8] sm:$0xff]
    %v484 = vld [vmem:[#allocation2 + $0x10] sm:$0xff]
    %v485 = vld [vmem:[#allocation5] sm:$0xff]
    %v486 = vld [vmem:[#allocation5 + $0x8] sm:$0xff]
    %v487 = vld [vmem:[#allocation5 + $0x10] sm:$0xff]
    %v488 = vld [vmem:[#allocation5 + $0x18] sm:$0xff]
    %v489 = vld [vmem:[#allocation5 + $0x20] sm:$0xff]
    %v490 = vld [vmem:[#allocation5 + $0x28] sm:$0xff]
    %v491 = vld [vmem:[#allocation5 + $0x30] sm:$0xff]
    %v492 = vld [vmem:[#allocation5 + $0x38] sm:$0xff]
    %v493 = vld [vmem:[#allocation5 + $0x40] sm:$0xff]
    %v494 = vld [vmem:[#allocation5 + $0x48] sm:$0xff]
    %v495 = vld [vmem:[#allocation5 + $0x50] sm:$0xff]
    %v496 = vld [vmem:[#allocation5 + $0x58] sm:$0xff]
    %v497 = vld [vmem:[#allocation5 + $0x60] sm:$0xff]
    %v498 = vld [vmem:[#allocation5 + $0x68] sm:$0xff]
    %v499 = vld [vmem:[#allocation5 + $0x70] sm:$0xff]
    %v500 = vld [vmem:[#allocation5 + $0x78] sm:$0xff]
    %v501 = vld [vmem:[#allocation5 + $0x80] sm:$0xff]
    %v502 = vld [vmem:[#allocation5 + $0x88] sm:$0xff]
    %v503 = vld [vmem:[#allocation5 + $0x90] sm:$0xff]
    %v504 = vld [vmem:[#allocation5 + $0x98] sm:$0xff]
    %v505 = vld [vmem:[#allocation5 + $0xa0] sm:$0xff]
    %v506 = vld [vmem:[#allocation5 + $0xa8] sm:$0xff]
    %v507 = vld [vmem:[#allocation5 + $0xb0] sm:$0xff]
    %v508 = vld [vmem:[#allocation5 + $0xb8] sm:$0xff]
    %v509 = vld [vmem:[#allocation5 + $0xc0] sm:$0xff]
    %v510 = vld [vmem:[#allocation5 + $0xc8] sm:$0xff]
    %v511 = vld [vmem:[#allocation5 + $0xd0] sm:$0xff]
    %v512 = vld [vmem:[#allocation5 + $0xd8] sm:$0xff]
    %v513 = vld [vmem:[#allocation5 + $0xe0] sm:$0xff]
    %v514 = vld [vmem:[#allocation5 + $0xe8] sm:$0xff]
    %v515 = vld [vmem:[#allocation5 + $0xf0] sm:$0xff]
    %v516 = vld [vmem:[#allocation5 + $0xf8] sm:$0xff]
    %v517 = vld [vmem:[#allocation5 + $0x100] sm:$0xff]
    %v518 = vld [vmem:[#allocation5 + $0x108] sm:$0xff]
    %v519 = vld [vmem:[#allocation5 + $0x110] sm:$0xff]
    %v520 = vld [vmem:[#allocation5 + $0x118] sm:$0xff]
    %v521 = vld [vmem:[#allocation5 + $0x120] sm:$0xff]
    %v522 = vld [vmem:[#allocation5 + $0x128] sm:$0xff]
    %v523 = vld [vmem:[#allocation5 + $0x130] sm:$0xff]
    %v524 = vld [vmem:[#allocation5 + $0x138] sm:$0xff]
    %v525 = vld [vmem:[#allocation5 + $0x140] sm:$0xff]
    %v526 = vld [vmem:[#allocation5 + $0x148] sm:$0xff]
    %v527 = vld [vmem:[#allocation5 + $0x150] sm:$0xff]
    %v528 = vld [vmem:[#allocation5 + $0x158] sm:$0xff]
    %v529 = vld [vmem:[#allocation5 + $0x160] sm:$0xff]
    %v530 = vld [vmem:[#allocation5 + $0x168] sm:$0xff]
    %v531 = vld [vmem:[#allocation5 + $0x170] sm:$0xff]
    %v532 = vld [vmem:[#allocation5 + $0x178] sm:$0xff]
    %533 = vmatprep.subr.mxu0 %v531
    %534 = vmatpush1.msra.mxu0 %v530
    %535 = vmatprep.subr.mxu0 %v528
    %536 = vmatpush1.msra.mxu0 %v527
    %537 = vmatprep.subr.mxu0 %v525
    %538 = vmatpush1.msra.mxu0 %v524
    %539 = vmatprep.subr.mxu0 %v522
    %540 = vmatpush1.msra.mxu0 %v521
    %541 = vmatprep.subr.mxu0 %v519
    %542 = vmatpush1.msra.mxu0 %v518
    %543 = vmatprep.subr.mxu0 %v516
    %544 = vmatpush1.msra.mxu0 %v515
    %545 = vmatprep.subr.mxu0 %v513
    %546 = vmatpush1.msra.mxu0 %v512
    %547 = vmatprep.subr.mxu0 %v510
    %548 = vmatpush1.msra.mxu0 %v509
    %549 = vmatprep.subr.mxu0 %v507
    %550 = vmatpush1.msra.mxu0 %v506
    %551 = vmatprep.subr.mxu0 %v504
    %552 = vmatpush1.msra.mxu0 %v503
    %553 = vmatprep.subr.mxu0 %v501
    %554 = vmatpush1.msra.mxu0 %v500
    %555 = vmatprep.subr.mxu0 %v498
    %556 = vmatpush1.msra.mxu0 %v497
    %557 = vmatprep.subr.mxu0 %v495
    %558 = vmatpush1.msra.mxu0 %v494
    %559 = vmatprep.subr.mxu0 %v492
    %560 = vmatpush1.msra.mxu0 %v491
    %561 = vmatprep.subr.mxu0 %v489
    %562 = vmatpush1.msra.mxu0 %v488
    %563 = vmatprep.subr.mxu0 %v486
    %564 = vmatpush1.msra.mxu0 %v485
    %565 = vmatprep.subr.mxu0 0.0
    %566 = vmatpush2.msra.mxu0 0.0
    %567 = vmatprep.subr.mxu0 0.0
    %568 = vmatpush2.msra.mxu0 0.0
    %569 = vmatprep.subr.mxu0 0.0
    %570 = vmatpush2.msra.mxu0 0.0
    %571 = vmatprep.subr.mxu0 0.0
    %572 = vmatpush2.msra.mxu0 0.0
    %573 = vmatprep.subr.mxu0 0.0
    %574 = vmatpush2.msra.mxu0 0.0
    %575 = vmatprep.subr.mxu0 0.0
    %576 = vmatpush2.msra.mxu0 0.0
    %577 = vmatprep.subr.mxu0 0.0
    %578 = vmatpush2.msra.mxu0 0.0
    %579 = vmatprep.subr.mxu0 0.0
    %580 = vmatpush2.msra.mxu0 0.0
    %581 = vmatprep.subr.mxu0 0.0
    %582 = vmatpush2.msra.mxu0 0.0
    %583 = vmatprep.subr.mxu0 0.0
    %584 = vmatpush2.msra.mxu0 0.0
    %585 = vmatprep.subr.mxu0 0.0
    %586 = vmatpush2.msra.mxu0 0.0
    %587 = vmatprep.subr.mxu0 0.0
    %588 = vmatpush2.msra.mxu0 0.0
    %589 = vmatprep.subr.mxu0 0.0
    %590 = vmatpush2.msra.mxu0 0.0
    %591 = vmatprep.subr.mxu0 0.0
    %592 = vmatpush2.msra.mxu0 0.0
    %593 = vmatprep.subr.mxu0 0.0
    %594 = vmatpush2.msra.mxu0 0.0
    %595 = vmatprep.subr.mxu0 0.0
    %596 = vmatpush2.msra.mxu0 0.0
    %597 = vmatprep.mubr.f32.mxu0 0.0
    %598 = vmatmul.mubr.f32.gmra.mxu0 0.0
    %v599 = vpop.f32.mrf.mxu0
    %v600 = vadd.f32 0.0, %v599
    %v601 = vpop.f32.mrf.mxu0
    %v602 = vadd.f32 0.0, %v601
    %603 = vdwg.mxu0
    %604 = vmatprep.subr.mxu0 0.0
    %605 = vmatpush1.msra.mxu0 %v532
    %606 = vmatprep.subr.mxu0 0.0
    %607 = vmatpush1.msra.mxu0 %v529
    %608 = vmatprep.subr.mxu0 0.0
    %609 = vmatpush1.msra.mxu0 %v526
    %610 = vmatprep.subr.mxu0 0.0
    %611 = vmatpush1.msra.mxu0 %v523
    %612 = vmatprep.subr.mxu0 0.0
    %613 = vmatpush1.msra.mxu0 %v520
    %614 = vmatprep.subr.mxu0 0.0
    %615 = vmatpush1.msra.mxu0 %v517
    %616 = vmatprep.subr.mxu0 0.0
    %617 = vmatpush1.msra.mxu0 %v514
    %618 = vmatprep.subr.mxu0 0.0
    %619 = vmatpush1.msra.mxu0 %v511
    %620 = vmatprep.subr.mxu0 0.0
    %621 = vmatpush1.msra.mxu0 %v508
    %622 = vmatprep.subr.mxu0 0.0
    %623 = vmatpush1.msra.mxu0 %v505
    %624 = vmatprep.subr.mxu0 0.0
    %625 = vmatpush1.msra.mxu0 %v502
    %626 = vmatprep.subr.mxu0 0.0
    %627 = vmatpush1.msra.mxu0 %v499
    %628 = vmatprep.subr.mxu0 0.0
    %629 = vmatpush1.msra.mxu0 %v496
    %630 = vmatprep.subr.mxu0 0.0
    %631 = vmatpush1.msra.mxu0 %v493
    %632 = vmatprep.subr.mxu0 0.0
    %633 = vmatpush1.msra.mxu0 %v490
    %634 = vmatprep.subr.mxu0 0.0
    %635 = vmatpush1.msra.mxu0 %v487
    %636 = vmatprep.subr.mxu0 0.0
    %637 = vmatpush2.msra.mxu0 0.0
    %638 = vmatprep.subr.mxu0 0.0
    %639 = vmatpush2.msra.mxu0 0.0
    %640 = vmatprep.subr.mxu0 0.0
    %641 = vmatpush2.msra.mxu0 0.0
    %642 = vmatprep.subr.mxu0 0.0
    %643 = vmatpush2.msra.mxu0 0.0
    %644 = vmatprep.subr.mxu0 0.0
    %645 = vmatpush2.msra.mxu0 0.0
    %646 = vmatprep.subr.mxu0 0.0
    %647 = vmatpush2.msra.mxu0 0.0
    %648 = vmatprep.subr.mxu0 0.0
    %649 = vmatpush2.msra.mxu0 0.0
    %650 = vmatprep.subr.mxu0 0.0
    %651 = vmatpush2.msra.mxu0 0.0
    %652 = vmatprep.subr.mxu0 0.0
    %653 = vmatpush2.msra.mxu0 0.0
    %654 = vmatprep.subr.mxu0 0.0
    %655 = vmatpush2.msra.mxu0 0.0
    %656 = vmatprep.subr.mxu0 0.0
    %657 = vmatpush2.msra.mxu0 0.0
    %658 = vmatprep.subr.mxu0 0.0
    %659 = vmatpush2.msra.mxu0 0.0
    %660 = vmatprep.subr.mxu0 0.0
    %661 = vmatpush2.msra.mxu0 0.0
    %662 = vmatprep.subr.mxu0 0.0
    %663 = vmatpush2.msra.mxu0 0.0
    %664 = vmatprep.subr.mxu0 0.0
    %665 = vmatpush2.msra.mxu0 0.0
    %666 = vmatprep.subr.mxu0 0.0
    %667 = vmatpush2.msra.mxu0 0.0
    %668 = vmatprep.mubr.f32.mxu0 0.0
    %669 = vmatmul.mubr.f32.gmra.mxu0 0.0
    %v670 = vpop.f32.mrf.mxu0
    %v671 = vadd.f32 0.0, %v670
    %v672 = vpop.f32.mrf.mxu0
    %673 = vdwg.mxu0
    %v674 = vadd.f32 %v482, %v600
    %v675 = vxor.u32 %v674, 2147483648
    %v676 = vmul.f32 %v675, 1.442695
    %v677 = vpow.pop %v676
    %v678 = vadd.f32 %v677, 1.0
    %v679 = vrcp.pop %v678
    %v680 = vmul.f32 1.0, %v679
    %v681 = vadd.f32 %v483, %v602
    %v682 = vxor.u32 %v681, 2147483648
    %v683 = vmul.f32 %v682, 1.442695
    %v684 = vpow.pop %v683
    %v685 = vadd.f32 %v684, 1.0
    %v686 = vrcp.pop %v685
    %v687 = vmul.f32 1.0, %v686
    %v688 = vadd.f32 %v671, %v473
    %v689 = vmul.f32 %v680, %v688
    %v690 = vadd.f32 %v484, %v689
    %v691 = vtanh.pop %v690
    %v692 = vsub.f32 0.0, %v691
    %v693 = vmul.f32 %v687, %v692
    %v694 = vadd.f32 %v691, %v693
    %v695 = vld [vmem:[#allocation2 + $0x18] sm:$0xff]
    %v696 = vld [vmem:[#allocation2 + $0x20] sm:$0xff]
    %v697 = vld [vmem:[#allocation2 + $0x28] sm:$0xff]
    %698 = vmatprep.subr.mxu0 %v531
    %699 = vmatpush1.msra.mxu0 %v530
    %700 = vmatprep.subr.mxu0 %v528
    %701 = vmatpush1.msra.mxu0 %v527
    %702 = vmatprep.subr.mxu0 %v525
    %703 = vmatpush1.msra.mxu0 %v524
    %704 = vmatprep.subr.mxu0 %v522
    %705 = vmatpush1.msra.mxu0 %v521
    %706 = vmatprep.subr.mxu0 %v519
    %707 = vmatpush1.msra.mxu0 %v518
    %708 = vmatprep.subr.mxu0 %v516
    %709 = vmatpush1.msra.mxu0 %v515
    %710 = vmatprep.subr.mxu0 %v513
    %711 = vmatpush1.msra.mxu0 %v512
    %712 = vmatprep.subr.mxu0 %v510
    %713 = vmatpush1.msra.mxu0 %v509
    %714 = vmatprep.subr.mxu0 %v507
    %715 = vmatpush1.msra.mxu0 %v506
    %716 = vmatprep.subr.mxu0 %v504
    %717 = vmatpush1.msra.mxu0 %v503
    %718 = vmatprep.subr.mxu0 %v501
    %719 = vmatpush1.msra.mxu0 %v500
    %720 = vmatprep.subr.mxu0 %v498
    %721 = vmatpush1.msra.mxu0 %v497
    %722 = vmatprep.subr.mxu0 %v495
    %723 = vmatpush1.msra.mxu0 %v494
    %724 = vmatprep.subr.mxu0 %v492
    %725 = vmatpush1.msra.mxu0 %v491
    %726 = vmatprep.subr.mxu0 %v489
    %727 = vmatpush1.msra.mxu0 %v488
    %728 = vmatprep.subr.mxu0 %v486
    %729 = vmatpush1.msra.mxu0 %v485
    %730 = vmatprep.subr.mxu0 0.0
    %731 = vmatpush2.msra.mxu0 0.0
    %732 = vmatprep.subr.mxu0 0.0
    %733 = vmatpush2.msra.mxu0 0.0
    %734 = vmatprep.subr.mxu0 0.0
    %735 = vmatpush2.msra.mxu0 0.0
    %736 = vmatprep.subr.mxu0 0.0
    %737 = vmatpush2.msra.mxu0 0.0
    %738 = vmatprep.subr.mxu0 0.0
    %739 = vmatpush2.msra.mxu0 0.0
    %740 = vmatprep.subr.mxu0 0.0
    %741 = vmatpush2.msra.mxu0 0.0
    %742 = vmatprep.subr.mxu0 0.0
    %743 = vmatpush2.msra.mxu0 0.0
    %744 = vmatprep.subr.mxu0 0.0
    %745 = vmatpush2.msra.mxu0 0.0
    %746 = vmatprep.subr.mxu0 0.0
    %747 = vmatpush2.msra.mxu0 0.0
    %748 = vmatprep.subr.mxu0 0.0
    %749 = vmatpush2.msra.mxu0 0.0
    %750 = vmatprep.subr.mxu0 0.0
    %751 = vmatpush2.msra.mxu0 0.0
    %752 = vmatprep.subr.mxu0 0.0
    %753 = vmatpush2.msra.mxu0 0.0
    %754 = vmatprep.subr.mxu0 0.0
    %755 = vmatpush2.msra.mxu0 0.0
    %756 = vmatprep.subr.mxu0 0.0
    %757 = vmatpush2.msra.mxu0 0.0
    %758 = vmatprep.subr.mxu0 0.0
    %759 = vmatpush2.msra.mxu0 0.0
    %760 = vmatprep.subr.mxu0 0.0
    %761 = vmatpush2.msra.mxu0 0.0
    %762 = vmatprep.mubr.f32.mxu0 0.0
    %763 = vmatmul.mubr.f32.gmra.mxu0 %v694
    %v764 = vpop.f32.mrf.mxu0
    %v765 = vadd.f32 0.0, %v764
    %v766 = vpop.f32.mrf.mxu0
    %v767 = vadd.f32 0.0, %v766
    %768 = vdwg.mxu0
    %769 = vmatprep.subr.mxu0 0.0
    %770 = vmatpush1.msra.mxu0 %v532
    %771 = vmatprep.subr.mxu0 0.0
    %772 = vmatpush1.msra.mxu0 %v529
    %773 = vmatprep.subr.mxu0 0.0
    %774 = vmatpush1.msra.mxu0 %v526
    %775 = vmatprep.subr.mxu0 0.0
    %776 = vmatpush1.msra.mxu0 %v523
    %777 = vmatprep.subr.mxu0 0.0
    %778 = vmatpush1.msra.mxu0 %v520
    %779 = vmatprep.subr.mxu0 0.0
    %780 = vmatpush1.msra.mxu0 %v517
    %781 = vmatprep.subr.mxu0 0.0
    %782 = vmatpush1.msra.mxu0 %v514
    %783 = vmatprep.subr.mxu0 0.0
    %784 = vmatpush1.msra.mxu0 %v511
    %785 = vmatprep.subr.mxu0 0.0
    %786 = vmatpush1.msra.mxu0 %v508
    %787 = vmatprep.subr.mxu0 0.0
    %788 = vmatpush1.msra.mxu0 %v505
    %789 = vmatprep.subr.mxu0 0.0
    %790 = vmatpush1.msra.mxu0 %v502
    %791 = vmatprep.subr.mxu0 0.0
    %792 = vmatpush1.msra.mxu0 %v499
    %793 = vmatprep.subr.mxu0 0.0
    %794 = vmatpush1.msra.mxu0 %v496
    %795 = vmatprep.subr.mxu0 0.0
    %796 = vmatpush1.msra.mxu0 %v493
    %797 = vmatprep.subr.mxu0 0.0
    %798 = vmatpush1.msra.mxu0 %v490
    %799 = vmatprep.subr.mxu0 0.0
    %800 = vmatpush1.msra.mxu0 %v487
    %801 = vmatprep.subr.mxu0 0.0
    %802 = vmatpush2.msra.mxu0 0.0
    %803 = vmatprep.subr.mxu0 0.0
    %804 = vmatpush2.msra.mxu0 0.0
    %805 = vmatprep.subr.mxu0 0.0
    %806 = vmatpush2.msra.mxu0 0.0
    %807 = vmatprep.subr.mxu0 0.0
    %808 = vmatpush2.msra.mxu0 0.0
    %809 = vmatprep.subr.mxu0 0.0
    %810 = vmatpush2.msra.mxu0 0.0
    %811 = vmatprep.subr.mxu0 0.0
    %812 = vmatpush2.msra.mxu0 0.0
    %813 = vmatprep.subr.mxu0 0.0
    %814 = vmatpush2.msra.mxu0 0.0
    %815 = vmatprep.subr.mxu0 0.0
    %816 = vmatpush2.msra.mxu0 0.0
    %817 = vmatprep.subr.mxu0 0.0
    %818 = vmatpush2.msra.mxu0 0.0
    %819 = vmatprep.subr.mxu0 0.0
    %820 = vmatpush2.msra.mxu0 0.0
    %821 = vmatprep.subr.mxu0 0.0
    %822 = vmatpush2.msra.mxu0 0.0
    %823 = vmatprep.subr.mxu0 0.0
    %824 = vmatpush2.msra.mxu0 0.0
    %825 = vmatprep.subr.mxu0 0.0
    %826 = vmatpush2.msra.mxu0 0.0
    %827 = vmatprep.subr.mxu0 0.0
    %828 = vmatpush2.msra.mxu0 0.0
    %829 = vmatprep.subr.mxu0 0.0
    %830 = vmatpush2.msra.mxu0 0.0
    %831 = vmatprep.subr.mxu0 0.0
    %832 = vmatpush2.msra.mxu0 0.0
    %833 = vmatprep.mubr.f32.mxu0 0.0
    %834 = vmatmul.mubr.f32.gmra.mxu0 %v694
    %v835 = vpop.f32.mrf.mxu0
    %v836 = vadd.f32 0.0, %v835
    %v837 = vpop.f32.mrf.mxu0
    %838 = vdwg.mxu0
    %v839 = vld [vmem:[#allocation7] sm:$0xff]
    %v840 = vld [vmem:[#allocation7 + $0x8] sm:$0xff]
    %v841 = vld [vmem:[#allocation7 + $0x10] sm:$0xff]
    %v842 = vld [vmem:[#allocation7 + $0x18] sm:$0xff]
    %v843 = vld [vmem:[#allocation7 + $0x20] sm:$0xff]
    %v844 = vld [vmem:[#allocation7 + $0x28] sm:$0xff]
    %v845 = vld [vmem:[#allocation7 + $0x30] sm:$0xff]
    %v846 = vld [vmem:[#allocation7 + $0x38] sm:$0xff]
    %v847 = vld [vmem:[#allocation7 + $0x40] sm:$0xff]
    %v848 = vld [vmem:[#allocation7 + $0x48] sm:$0xff]
    %v849 = vld [vmem:[#allocation7 + $0x50] sm:$0xff]
    %v850 = vld [vmem:[#allocation7 + $0x58] sm:$0xff]
    %v851 = vld [vmem:[#allocation7 + $0x60] sm:$0xff]
    %v852 = vld [vmem:[#allocation7 + $0x68] sm:$0xff]
    %v853 = vld [vmem:[#allocation7 + $0x70] sm:$0xff]
    %v854 = vld [vmem:[#allocation7 + $0x78] sm:$0xff]
    %v855 = vld [vmem:[#allocation7 + $0x80] sm:$0xff]
    %v856 = vld [vmem:[#allocation7 + $0x88] sm:$0xff]
    %v857 = vld [vmem:[#allocation7 + $0x90] sm:$0xff]
    %v858 = vld [vmem:[#allocation7 + $0x98] sm:$0xff]
    %v859 = vld [vmem:[#allocation7 + $0xa0] sm:$0xff]
    %v860 = vld [vmem:[#allocation7 + $0xa8] sm:$0xff]
    %v861 = vld [vmem:[#allocation7 + $0xb0] sm:$0xff]
    %v862 = vld [vmem:[#allocation7 + $0xb8] sm:$0xff]
    %v863 = vld [vmem:[#allocation7 + $0xc0] sm:$0xff]
    %v864 = vld [vmem:[#allocation7 + $0xc8] sm:$0xff]
    %v865 = vld [vmem:[#allocation7 + $0xd0] sm:$0xff]
    %v866 = vld [vmem:[#allocation7 + $0xd8] sm:$0xff]
    %v867 = vld [vmem:[#allocation7 + $0xe0] sm:$0xff]
    %v868 = vld [vmem:[#allocation7 + $0xe8] sm:$0xff]
    %v869 = vld [vmem:[#allocation7 + $0xf0] sm:$0xff]
    %v870 = vld [vmem:[#allocation7 + $0xf8] sm:$0xff]
    %v871 = vld [vmem:[#allocation7 + $0x100] sm:$0xff]
    %v872 = vld [vmem:[#allocation7 + $0x108] sm:$0xff]
    %v873 = vld [vmem:[#allocation7 + $0x110] sm:$0xff]
    %v874 = vld [vmem:[#allocation7 + $0x118] sm:$0xff]
    %v875 = vld [vmem:[#allocation7 + $0x120] sm:$0xff]
    %v876 = vld [vmem:[#allocation7 + $0x128] sm:$0xff]
    %v877 = vld [vmem:[#allocation7 + $0x130] sm:$0xff]
    %v878 = vld [vmem:[#allocation7 + $0x138] sm:$0xff]
    %v879 = vld [vmem:[#allocation7 + $0x140] sm:$0xff]
    %v880 = vld [vmem:[#allocation7 + $0x148] sm:$0xff]
    %v881 = vld [vmem:[#allocation7 + $0x150] sm:$0xff]
    %v882 = vld [vmem:[#allocation7 + $0x158] sm:$0xff]
    %v883 = vld [vmem:[#allocation7 + $0x160] sm:$0xff]
    %v884 = vld [vmem:[#allocation7 + $0x168] sm:$0xff]
    %v885 = vld [vmem:[#allocation7 + $0x170] sm:$0xff]
    %v886 = vld [vmem:[#allocation7 + $0x178] sm:$0xff]
    %887 = vmatprep.subr.mxu0 %v885
    %888 = vmatpush1.msra.mxu0 %v884
    %889 = vmatprep.subr.mxu0 %v882
    %890 = vmatpush1.msra.mxu0 %v881
    %891 = vmatprep.subr.mxu0 %v879
    %892 = vmatpush1.msra.mxu0 %v878
    %893 = vmatprep.subr.mxu0 %v876
    %894 = vmatpush1.msra.mxu0 %v875
    %895 = vmatprep.subr.mxu0 %v873
    %896 = vmatpush1.msra.mxu0 %v872
    %897 = vmatprep.subr.mxu0 %v870
    %898 = vmatpush1.msra.mxu0 %v869
    %899 = vmatprep.subr.mxu0 %v867
    %900 = vmatpush1.msra.mxu0 %v866
    %901 = vmatprep.subr.mxu0 %v864
    %902 = vmatpush1.msra.mxu0 %v863
    %903 = vmatprep.subr.mxu0 %v861
    %904 = vmatpush1.msra.mxu0 %v860
    %905 = vmatprep.subr.mxu0 %v858
    %906 = vmatpush1.msra.mxu0 %v857
    %907 = vmatprep.subr.mxu0 %v855
    %908 = vmatpush1.msra.mxu0 %v854
    %909 = vmatprep.subr.mxu0 %v852
    %910 = vmatpush1.msra.mxu0 %v851
    %911 = vmatprep.subr.mxu0 %v849
    %912 = vmatpush1.msra.mxu0 %v848
    %913 = vmatprep.subr.mxu0 %v846
    %914 = vmatpush1.msra.mxu0 %v845
    %915 = vmatprep.subr.mxu0 %v843
    %916 = vmatpush1.msra.mxu0 %v842
    %917 = vmatprep.subr.mxu0 %v840
    %918 = vmatpush1.msra.mxu0 %v839
    %919 = vmatprep.subr.mxu0 0.0
    %920 = vmatpush2.msra.mxu0 0.0
    %921 = vmatprep.subr.mxu0 0.0
    %922 = vmatpush2.msra.mxu0 0.0
    %923 = vmatprep.subr.mxu0 0.0
    %924 = vmatpush2.msra.mxu0 0.0
    %925 = vmatprep.subr.mxu0 0.0
    %926 = vmatpush2.msra.mxu0 0.0
    %927 = vmatprep.subr.mxu0 0.0
    %928 = vmatpush2.msra.mxu0 0.0
    %929 = vmatprep.subr.mxu0 0.0
    %930 = vmatpush2.msra.mxu0 0.0
    %931 = vmatprep.subr.mxu0 0.0
    %932 = vmatpush2.msra.mxu0 0.0
    %933 = vmatprep.subr.mxu0 0.0
    %934 = vmatpush2.msra.mxu0 0.0
    %935 = vmatprep.subr.mxu0 0.0
    %936 = vmatpush2.msra.mxu0 0.0
    %937 = vmatprep.subr.mxu0 0.0
    %938 = vmatpush2.msra.mxu0 0.0
    %939 = vmatprep.subr.mxu0 0.0
    %940 = vmatpush2.msra.mxu0 0.0
    %941 = vmatprep.subr.mxu0 0.0
    %942 = vmatpush2.msra.mxu0 0.0
    %943 = vmatprep.subr.mxu0 0.0
    %944 = vmatpush2.msra.mxu0 0.0
    %945 = vmatprep.subr.mxu0 0.0
    %946 = vmatpush2.msra.mxu0 0.0
    %947 = vmatprep.subr.mxu0 0.0
    %948 = vmatpush2.msra.mxu0 0.0
    %949 = vmatprep.subr.mxu0 0.0
    %950 = vmatpush2.msra.mxu0 0.0
    %951 = vmatprep.mubr.f32.mxu0 0.0
    %952 = vmatmul.mubr.f32.gmra.mxu0 %v694
    %v953 = vpop.f32.mrf.mxu0
    %v954 = vadd.f32 %v456, %v953
    %v955 = vpop.f32.mrf.mxu0
    %v956 = vadd.f32 %v460, %v955
    %957 = vdwg.mxu0
    %958 = vmatprep.subr.mxu0 0.0
    %959 = vmatpush1.msra.mxu0 %v886
    %960 = vmatprep.subr.mxu0 0.0
    %961 = vmatpush1.msra.mxu0 %v883
    %962 = vmatprep.subr.mxu0 0.0
    %963 = vmatpush1.msra.mxu0 %v880
    %964 = vmatprep.subr.mxu0 0.0
    %965 = vmatpush1.msra.mxu0 %v877
    %966 = vmatprep.subr.mxu0 0.0
    %967 = vmatpush1.msra.mxu0 %v874
    %968 = vmatprep.subr.mxu0 0.0
    %969 = vmatpush1.msra.mxu0 %v871
    %970 = vmatprep.subr.mxu0 0.0
    %971 = vmatpush1.msra.mxu0 %v868
    %972 = vmatprep.subr.mxu0 0.0
    %973 = vmatpush1.msra.mxu0 %v865
    %974 = vmatprep.subr.mxu0 0.0
    %975 = vmatpush1.msra.mxu0 %v862
    %976 = vmatprep.subr.mxu0 0.0
    %977 = vmatpush1.msra.mxu0 %v859
    %978 = vmatprep.subr.mxu0 0.0
    %979 = vmatpush1.msra.mxu0 %v856
    %980 = vmatprep.subr.mxu0 0.0
    %981 = vmatpush1.msra.mxu0 %v853
    %982 = vmatprep.subr.mxu0 0.0
    %983 = vmatpush1.msra.mxu0 %v850
    %984 = vmatprep.subr.mxu0 0.0
    %985 = vmatpush1.msra.mxu0 %v847
    %986 = vmatprep.subr.mxu0 0.0
    %987 = vmatpush1.msra.mxu0 %v844
    %988 = vmatprep.subr.mxu0 0.0
    %989 = vmatpush1.msra.mxu0 %v841
    %990 = vmatprep.subr.mxu0 0.0
    %991 = vmatpush2.msra.mxu0 0.0
    %992 = vmatprep.subr.mxu0 0.0
    %993 = vmatpush2.msra.mxu0 0.0
    %994 = vmatprep.subr.mxu0 0.0
    %995 = vmatpush2.msra.mxu0 0.0
    %996 = vmatprep.subr.mxu0 0.0
    %997 = vmatpush2.msra.mxu0 0.0
    %998 = vmatprep.subr.mxu0 0.0
    %999 = vmatpush2.msra.mxu0 0.0
    %1000 = vmatprep.subr.mxu0 0.0
    %1001 = vmatpush2.msra.mxu0 0.0
    %1002 = vmatprep.subr.mxu0 0.0
    %1003 = vmatpush2.msra.mxu0 0.0
    %1004 = vmatprep.subr.mxu0 0.0
    %1005 = vmatpush2.msra.mxu0 0.0
    %1006 = vmatprep.subr.mxu0 0.0
    %1007 = vmatpush2.msra.mxu0 0.0
    %1008 = vmatprep.subr.mxu0 0.0
    %1009 = vmatpush2.msra.mxu0 0.0
    %1010 = vmatprep.subr.mxu0 0.0
    %1011 = vmatpush2.msra.mxu0 0.0
    %1012 = vmatprep.subr.mxu0 0.0
    %1013 = vmatpush2.msra.mxu0 0.0
    %1014 = vmatprep.subr.mxu0 0.0
    %1015 = vmatpush2.msra.mxu0 0.0
    %1016 = vmatprep.subr.mxu0 0.0
    %1017 = vmatpush2.msra.mxu0 0.0
    %1018 = vmatprep.subr.mxu0 0.0
    %1019 = vmatpush2.msra.mxu0 0.0
    %1020 = vmatprep.subr.mxu0 0.0
    %1021 = vmatpush2.msra.mxu0 0.0
    %1022 = vmatprep.mubr.f32.mxu0 0.0
    %1023 = vmatmul.mubr.f32.gmra.mxu0 %v694
    %v1024 = vpop.f32.mrf.mxu0
    %v1025 = vadd.f32 %v464, %v1024
    %v1026 = vpop.f32.mrf.mxu0
    %1027 = vdwg.mxu0
    %v1028 = vld [vmem:[#allocation8] sm:$0xff]
    %v1029 = vld [vmem:[#allocation8 + $0x8] sm:$0xff]
    %v1030 = vld [vmem:[#allocation8 + $0x10] sm:$0xff]
    %v1031 = vld [vmem:[#allocation8 + $0x18] sm:$0xff]
    %v1032 = vld [vmem:[#allocation8 + $0x20] sm:$0xff]
    %v1033 = vld [vmem:[#allocation8 + $0x28] sm:$0xff]
    %v1034 = vld [vmem:[#allocation8 + $0x30] sm:$0xff]
    %v1035 = vld [vmem:[#allocation8 + $0x38] sm:$0xff]
    %v1036 = vld [vmem:[#allocation8 + $0x40] sm:$0xff]
    %v1037 = vld [vmem:[#allocation8 + $0x48] sm:$0xff]
    %v1038 = vld [vmem:[#allocation8 + $0x50] sm:$0xff]
    %v1039 = vld [vmem:[#allocation8 + $0x58] sm:$0xff]
    %v1040 = vld [vmem:[#allocation8 + $0x60] sm:$0xff]
    %v1041 = vld [vmem:[#allocation8 + $0x68] sm:$0xff]
    %v1042 = vld [vmem:[#allocation8 + $0x70] sm:$0xff]
    %v1043 = vld [vmem:[#allocation8 + $0x78] sm:$0xff]
    %v1044 = vld [vmem:[#allocation8 + $0x80] sm:$0xff]
    %v1045 = vld [vmem:[#allocation8 + $0x88] sm:$0xff]
    %v1046 = vld [vmem:[#allocation8 + $0x90] sm:$0xff]
    %v1047 = vld [vmem:[#allocation8 + $0x98] sm:$0xff]
    %v1048 = vld [vmem:[#allocation8 + $0xa0] sm:$0xff]
    %v1049 = vld [vmem:[#allocation8 + $0xa8] sm:$0xff]
    %v1050 = vld [vmem:[#allocation8 + $0xb0] sm:$0xff]
    %v1051 = vld [vmem:[#allocation8 + $0xb8] sm:$0xff]
    %v1052 = vld [vmem:[#allocation8 + $0xc0] sm:$0xff]
    %v1053 = vld [vmem:[#allocation8 + $0xc8] sm:$0xff]
    %v1054 = vld [vmem:[#allocation8 + $0xd0] sm:$0xff]
    %v1055 = vld [vmem:[#allocation8 + $0xd8] sm:$0xff]
    %v1056 = vld [vmem:[#allocation8 + $0xe0] sm:$0xff]
    %v1057 = vld [vmem:[#allocation8 + $0xe8] sm:$0xff]
    %v1058 = vld [vmem:[#allocation8 + $0xf0] sm:$0xff]
    %v1059 = vld [vmem:[#allocation8 + $0xf8] sm:$0xff]
    %v1060 = vld [vmem:[#allocation8 + $0x100] sm:$0xff]
    %v1061 = vld [vmem:[#allocation8 + $0x108] sm:$0xff]
    %v1062 = vld [vmem:[#allocation8 + $0x110] sm:$0xff]
    %v1063 = vld [vmem:[#allocation8 + $0x118] sm:$0xff]
    %v1064 = vld [vmem:[#allocation8 + $0x120] sm:$0xff]
    %v1065 = vld [vmem:[#allocation8 + $0x128] sm:$0xff]
    %v1066 = vld [vmem:[#allocation8 + $0x130] sm:$0xff]
    %v1067 = vld [vmem:[#allocation8 + $0x138] sm:$0xff]
    %v1068 = vld [vmem:[#allocation8 + $0x140] sm:$0xff]
    %v1069 = vld [vmem:[#allocation8 + $0x148] sm:$0xff]
    %v1070 = vld [vmem:[#allocation8 + $0x150] sm:$0xff]
    %v1071 = vld [vmem:[#allocation8 + $0x158] sm:$0xff]
    %v1072 = vld [vmem:[#allocation8 + $0x160] sm:$0xff]
    %v1073 = vld [vmem:[#allocation8 + $0x168] sm:$0xff]
    %v1074 = vld [vmem:[#allocation8 + $0x170] sm:$0xff]
    %v1075 = vld [vmem:[#allocation8 + $0x178] sm:$0xff]
    %1076 = vmatprep.subr.mxu0 %v1074
    %1077 = vmatpush1.msra.mxu0 %v1073
    %1078 = vmatprep.subr.mxu0 %v1071
    %1079 = vmatpush1.msra.mxu0 %v1070
    %1080 = vmatprep.subr.mxu0 %v1068
    %1081 = vmatpush1.msra.mxu0 %v1067
    %1082 = vmatprep.subr.mxu0 %v1065
    %1083 = vmatpush1.msra.mxu0 %v1064
    %1084 = vmatprep.subr.mxu0 %v1062
    %1085 = vmatpush1.msra.mxu0 %v1061
    %1086 = vmatprep.subr.mxu0 %v1059
    %1087 = vmatpush1.msra.mxu0 %v1058
    %1088 = vmatprep.subr.mxu0 %v1056
    %1089 = vmatpush1.msra.mxu0 %v1055
    %1090 = vmatprep.subr.mxu0 %v1053
    %1091 = vmatpush1.msra.mxu0 %v1052
    %1092 = vmatprep.subr.mxu0 %v1050
    %1093 = vmatpush1.msra.mxu0 %v1049
    %1094 = vmatprep.subr.mxu0 %v1047
    %1095 = vmatpush1.msra.mxu0 %v1046
    %1096 = vmatprep.subr.mxu0 %v1044
    %1097 = vmatpush1.msra.mxu0 %v1043
    %1098 = vmatprep.subr.mxu0 %v1041
    %1099 = vmatpush1.msra.mxu0 %v1040
    %1100 = vmatprep.subr.mxu0 %v1038
    %1101 = vmatpush1.msra.mxu0 %v1037
    %1102 = vmatprep.subr.mxu0 %v1035
    %1103 = vmatpush1.msra.mxu0 %v1034
    %1104 = vmatprep.subr.mxu0 %v1032
    %1105 = vmatpush1.msra.mxu0 %v1031
    %1106 = vmatprep.subr.mxu0 %v1029
    %1107 = vmatpush1.msra.mxu0 %v1028
    %1108 = vmatprep.subr.mxu0 0.0
    %1109 = vmatpush2.msra.mxu0 0.0
    %1110 = vmatprep.subr.mxu0 0.0
    %1111 = vmatpush2.msra.mxu0 0.0
    %1112 = vmatprep.subr.mxu0 0.0
    %1113 = vmatpush2.msra.mxu0 0.0
    %1114 = vmatprep.subr.mxu0 0.0
    %1115 = vmatpush2.msra.mxu0 0.0
    %1116 = vmatprep.subr.mxu0 0.0
    %1117 = vmatpush2.msra.mxu0 0.0
    %1118 = vmatprep.subr.mxu0 0.0
    %1119 = vmatpush2.msra.mxu0 0.0
    %1120 = vmatprep.subr.mxu0 0.0
    %1121 = vmatpush2.msra.mxu0 0.0
    %1122 = vmatprep.subr.mxu0 0.0
    %1123 = vmatpush2.msra.mxu0 0.0
    %1124 = vmatprep.subr.mxu0 0.0
    %1125 = vmatpush2.msra.mxu0 0.0
    %1126 = vmatprep.subr.mxu0 0.0
    %1127 = vmatpush2.msra.mxu0 0.0
    %1128 = vmatprep.subr.mxu0 0.0
    %1129 = vmatpush2.msra.mxu0 0.0
    %1130 = vmatprep.subr.mxu0 0.0
    %1131 = vmatpush2.msra.mxu0 0.0
    %1132 = vmatprep.subr.mxu0 0.0
    %1133 = vmatpush2.msra.mxu0 0.0
    %1134 = vmatprep.subr.mxu0 0.0
    %1135 = vmatpush2.msra.mxu0 0.0
    %1136 = vmatprep.subr.mxu0 0.0
    %1137 = vmatpush2.msra.mxu0 0.0
    %1138 = vmatprep.subr.mxu0 0.0
    %1139 = vmatpush2.msra.mxu0 0.0
    %1140 = vmatprep.mubr.f32.mxu0 0.0
    %1141 = vmatmul.mubr.f32.gmra.mxu0 0.0
    %v1142 = vpop.f32.mrf.mxu0
    %v1143 = vadd.f32 0.0, %v1142
    %v1144 = vpop.f32.mrf.mxu0
    %v1145 = vadd.f32 0.0, %v1144
    %1146 = vdwg.mxu0
    %1147 = vmatprep.subr.mxu0 0.0
    %1148 = vmatpush1.msra.mxu0 %v1075
    %1149 = vmatprep.subr.mxu0 0.0
    %1150 = vmatpush1.msra.mxu0 %v1072
    %1151 = vmatprep.subr.mxu0 0.0
    %1152 = vmatpush1.msra.mxu0 %v1069
    %1153 = vmatprep.subr.mxu0 0.0
    %1154 = vmatpush1.msra.mxu0 %v1066
    %1155 = vmatprep.subr.mxu0 0.0
    %1156 = vmatpush1.msra.mxu0 %v1063
    %1157 = vmatprep.subr.mxu0 0.0
    %1158 = vmatpush1.msra.mxu0 %v1060
    %1159 = vmatprep.subr.mxu0 0.0
    %1160 = vmatpush1.msra.mxu0 %v1057
    %1161 = vmatprep.subr.mxu0 0.0
    %1162 = vmatpush1.msra.mxu0 %v1054
    %1163 = vmatprep.subr.mxu0 0.0
    %1164 = vmatpush1.msra.mxu0 %v1051
    %1165 = vmatprep.subr.mxu0 0.0
    %1166 = vmatpush1.msra.mxu0 %v1048
    %1167 = vmatprep.subr.mxu0 0.0
    %1168 = vmatpush1.msra.mxu0 %v1045
    %1169 = vmatprep.subr.mxu0 0.0
    %1170 = vmatpush1.msra.mxu0 %v1042
    %1171 = vmatprep.subr.mxu0 0.0
    %1172 = vmatpush1.msra.mxu0 %v1039
    %1173 = vmatprep.subr.mxu0 0.0
    %1174 = vmatpush1.msra.mxu0 %v1036
    %1175 = vmatprep.subr.mxu0 0.0
    %1176 = vmatpush1.msra.mxu0 %v1033
    %1177 = vmatprep.subr.mxu0 0.0
    %1178 = vmatpush1.msra.mxu0 %v1030
    %1179 = vmatprep.subr.mxu0 0.0
    %1180 = vmatpush2.msra.mxu0 0.0
    %1181 = vmatprep.subr.mxu0 0.0
    %1182 = vmatpush2.msra.mxu0 0.0
    %1183 = vmatprep.subr.mxu0 0.0
    %1184 = vmatpush2.msra.mxu0 0.0
    %1185 = vmatprep.subr.mxu0 0.0
    %1186 = vmatpush2.msra.mxu0 0.0
    %1187 = vmatprep.subr.mxu0 0.0
    %1188 = vmatpush2.msra.mxu0 0.0
    %1189 = vmatprep.subr.mxu0 0.0
    %1190 = vmatpush2.msra.mxu0 0.0
    %1191 = vmatprep.subr.mxu0 0.0
    %1192 = vmatpush2.msra.mxu0 0.0
    %1193 = vmatprep.subr.mxu0 0.0
    %1194 = vmatpush2.msra.mxu0 0.0
    %1195 = vmatprep.subr.mxu0 0.0
    %1196 = vmatpush2.msra.mxu0 0.0
    %1197 = vmatprep.subr.mxu0 0.0
    %1198 = vmatpush2.msra.mxu0 0.0
    %1199 = vmatprep.subr.mxu0 0.0
    %1200 = vmatpush2.msra.mxu0 0.0
    %1201 = vmatprep.subr.mxu0 0.0
    %1202 = vmatpush2.msra.mxu0 0.0
    %1203 = vmatprep.subr.mxu0 0.0
    %1204 = vmatpush2.msra.mxu0 0.0
    %1205 = vmatprep.subr.mxu0 0.0
    %1206 = vmatpush2.msra.mxu0 0.0
    %1207 = vmatprep.subr.mxu0 0.0
    %1208 = vmatpush2.msra.mxu0 0.0
    %1209 = vmatprep.subr.mxu0 0.0
    %1210 = vmatpush2.msra.mxu0 0.0
    %1211 = vmatprep.mubr.f32.mxu0 0.0
    %1212 = vmatmul.mubr.f32.gmra.mxu0 0.0
    %v1213 = vpop.f32.mrf.mxu0
    %v1214 = vadd.f32 0.0, %v1213
    %v1215 = vpop.f32.mrf.mxu0
    %1216 = vdwg.mxu0
    %v1217 = vadd.f32 %v695, %v765
    %v1218 = vxor.u32 %v1217, 2147483648
    %v1219 = vmul.f32 %v1218, 1.442695
    %v1220 = vpow.pop %v1219
    %v1221 = vadd.f32 %v1220, 1.0
    %v1222 = vrcp.pop %v1221
    %v1223 = vmul.f32 1.0, %v1222
    %v1224 = vadd.f32 %v696, %v767
    %v1225 = vxor.u32 %v1224, 2147483648
    %v1226 = vmul.f32 %v1225, 1.442695
    %v1227 = vpow.pop %v1226
    %v1228 = vadd.f32 %v1227, 1.0
    %v1229 = vrcp.pop %v1228
    %v1230 = vmul.f32 1.0, %v1229
    %v1231 = vadd.f32 %v836, %v473
    %v1232 = vmul.f32 %v1223, %v1231
    %v1233 = vadd.f32 %v697, %v1232
    %v1234 = vtanh.pop %v1233
    %v1235 = vsub.f32 %v694, %v1234
    %v1236 = vmul.f32 %v1230, %v1235
    %v1237 = vadd.f32 %v1234, %v1236
    %v1238 = vadd.f32 %v954, %v1143
    %v1239 = vxor.u32 %v1238, 2147483648
    %v1240 = vmul.f32 %v1239, 1.442695
    %v1241 = vpow.pop %v1240
    %v1242 = vadd.f32 %v1241, 1.0
    %v1243 = vrcp.pop %v1242
    %v1244 = vmul.f32 1.0, %v1243
    %v1245 = vadd.f32 %v956, %v1145
    %v1246 = vxor.u32 %v1245, 2147483648
    %v1247 = vmul.f32 %v1246, 1.442695
    %v1248 = vpow.pop %v1247
    %v1249 = vadd.f32 %v1248, 1.0
    %v1250 = vrcp.pop %v1249
    %v1251 = vmul.f32 1.0, %v1250
    %v1252 = vadd.f32 %v1214, %v480
    %v1253 = vmul.f32 %v1244, %v1252
    %v1254 = vadd.f32 %v1025, %v1253
    %v1255 = vtanh.pop %v1254
    %v1256 = vsub.f32 0.0, %v1255
    %v1257 = vmul.f32 %v1251, %v1256
    %v1258 = vadd.f32 %v1255, %v1257
    %v1259 = vld [vmem:[#allocation2 + $0x30] sm:$0xff]
    %v1260 = vld [vmem:[#allocation2 + $0x38] sm:$0xff]
    %v1261 = vld [vmem:[#allocation2 + $0x40] sm:$0xff]
    %1262 = vmatprep.subr.mxu0 %v531
    %1263 = vmatpush1.msra.mxu0 %v530
    %1264 = vmatprep.subr.mxu0 %v528
    %1265 = vmatpush1.msra.mxu0 %v527
    %1266 = vmatprep.subr.mxu0 %v525
    %1267 = vmatpush1.msra.mxu0 %v524
    %1268 = vmatprep.subr.mxu0 %v522
    %1269 = vmatpush1.msra.mxu0 %v521
    %1270 = vmatprep.subr.mxu0 %v519
    %1271 = vmatpush1.msra.mxu0 %v518
    %1272 = vmatprep.subr.mxu0 %v516
    %1273 = vmatpush1.msra.mxu0 %v515
    %1274 = vmatprep.subr.mxu0 %v513
    %1275 = vmatpush1.msra.mxu0 %v512
    %1276 = vmatprep.subr.mxu0 %v510
    %1277 = vmatpush1.msra.mxu0 %v509
    %1278 = vmatprep.subr.mxu0 %v507
    %1279 = vmatpush1.msra.mxu0 %v506
    %1280 = vmatprep.subr.mxu0 %v504
    %1281 = vmatpush1.msra.mxu0 %v503
    %1282 = vmatprep.subr.mxu0 %v501
    %1283 = vmatpush1.msra.mxu0 %v500
    %1284 = vmatprep.subr.mxu0 %v498
    %1285 = vmatpush1.msra.mxu0 %v497
    %1286 = vmatprep.subr.mxu0 %v495
    %1287 = vmatpush1.msra.mxu0 %v494
    %1288 = vmatprep.subr.mxu0 %v492
    %1289 = vmatpush1.msra.mxu0 %v491
    %1290 = vmatprep.subr.mxu0 %v489
    %1291 = vmatpush1.msra.mxu0 %v488
    %1292 = vmatprep.subr.mxu0 %v486
    %1293 = vmatpush1.msra.mxu0 %v485
    %1294 = vmatprep.subr.mxu0 0.0
    %1295 = vmatpush2.msra.mxu0 0.0
    %1296 = vmatprep.subr.mxu0 0.0
    %1297 = vmatpush2.msra.mxu0 0.0
    %1298 = vmatprep.subr.mxu0 0.0
    %1299 = vmatpush2.msra.mxu0 0.0
    %1300 = vmatprep.subr.mxu0 0.0
    %1301 = vmatpush2.msra.mxu0 0.0
    %1302 = vmatprep.subr.mxu0 0.0
    %1303 = vmatpush2.msra.mxu0 0.0
    %1304 = vmatprep.subr.mxu0 0.0
    %1305 = vmatpush2.msra.mxu0 0.0
    %1306 = vmatprep.subr.mxu0 0.0
    %1307 = vmatpush2.msra.mxu0 0.0
    %1308 = vmatprep.subr.mxu0 0.0
    %1309 = vmatpush2.msra.mxu0 0.0
    %1310 = vmatprep.subr.mxu0 0.0
    %1311 = vmatpush2.msra.mxu0 0.0
    %1312 = vmatprep.subr.mxu0 0.0
    %1313 = vmatpush2.msra.mxu0 0.0
    %1314 = vmatprep.subr.mxu0 0.0
    %1315 = vmatpush2.msra.mxu0 0.0
    %1316 = vmatprep.subr.mxu0 0.0
    %1317 = vmatpush2.msra.mxu0 0.0
    %1318 = vmatprep.subr.mxu0 0.0
    %1319 = vmatpush2.msra.mxu0 0.0
    %1320 = vmatprep.subr.mxu0 0.0
    %1321 = vmatpush2.msra.mxu0 0.0
    %1322 = vmatprep.subr.mxu0 0.0
    %1323 = vmatpush2.msra.mxu0 0.0
    %1324 = vmatprep.subr.mxu0 0.0
    %1325 = vmatpush2.msra.mxu0 0.0
    %1326 = vmatprep.mubr.f32.mxu0 0.0
    %1327 = vmatmul.mubr.f32.gmra.mxu0 %v1237
    %v1328 = vpop.f32.mrf.mxu0
    %v1329 = vadd.f32 0.0, %v1328
    %v1330 = vpop.f32.mrf.mxu0
    %v1331 = vadd.f32 0.0, %v1330
    %1332 = vdwg.mxu0
    %1333 = vmatprep.subr.mxu0 0.0
    %1334 = vmatpush1.msra.mxu0 %v532
    %1335 = vmatprep.subr.mxu0 0.0
    %1336 = vmatpush1.msra.mxu0 %v529
    %1337 = vmatprep.subr.mxu0 0.0
    %1338 = vmatpush1.msra.mxu0 %v526
    %1339 = vmatprep.subr.mxu0 0.0
    %1340 = vmatpush1.msra.mxu0 %v523
    %1341 = vmatprep.subr.mxu0 0.0
    %1342 = vmatpush1.msra.mxu0 %v520
    %1343 = vmatprep.subr.mxu0 0.0
    %1344 = vmatpush1.msra.mxu0 %v517
    %1345 = vmatprep.subr.mxu0 0.0
    %1346 = vmatpush1.msra.mxu0 %v514
    %1347 = vmatprep.subr.mxu0 0.0
    %1348 = vmatpush1.msra.mxu0 %v511
    %1349 = vmatprep.subr.mxu0 0.0
    %1350 = vmatpush1.msra.mxu0 %v508
    %1351 = vmatprep.subr.mxu0 0.0
    %1352 = vmatpush1.msra.mxu0 %v505
    %1353 = vmatprep.subr.mxu0 0.0
    %1354 = vmatpush1.msra.mxu0 %v502
    %1355 = vmatprep.subr.mxu0 0.0
    %1356 = vmatpush1.msra.mxu0 %v499
    %1357 = vmatprep.subr.mxu0 0.0
    %1358 = vmatpush1.msra.mxu0 %v496
    %1359 = vmatprep.subr.mxu0 0.0
    %1360 = vmatpush1.msra.mxu0 %v493
    %1361 = vmatprep.subr.mxu0 0.0
    %1362 = vmatpush1.msra.mxu0 %v490
    %1363 = vmatprep.subr.mxu0 0.0
    %1364 = vmatpush1.msra.mxu0 %v487
    %1365 = vmatprep.subr.mxu0 0.0
    %1366 = vmatpush2.msra.mxu0 0.0
    %1367 = vmatprep.subr.mxu0 0.0
    %1368 = vmatpush2.msra.mxu0 0.0
    %1369 = vmatprep.subr.mxu0 0.0
    %1370 = vmatpush2.msra.mxu0 0.0
    %1371 = vmatprep.subr.mxu0 0.0
    %1372 = vmatpush2.msra.mxu0 0.0
    %1373 = vmatprep.subr.mxu0 0.0
    %1374 = vmatpush2.msra.mxu0 0.0
    %1375 = vmatprep.subr.mxu0 0.0
    %1376 = vmatpush2.msra.mxu0 0.0
    %1377 = vmatprep.subr.mxu0 0.0
    %1378 = vmatpush2.msra.mxu0 0.0
    %1379 = vmatprep.subr.mxu0 0.0
    %1380 = vmatpush2.msra.mxu0 0.0
    %1381 = vmatprep.subr.mxu0 0.0
    %1382 = vmatpush2.msra.mxu0 0.0
    %1383 = vmatprep.subr.mxu0 0.0
    %1384 = vmatpush2.msra.mxu0 0.0
    %1385 = vmatprep.subr.mxu0 0.0
    %1386 = vmatpush2.msra.mxu0 0.0
    %1387 = vmatprep.subr.mxu0 0.0
    %1388 = vmatpush2.msra.mxu0 0.0
    %1389 = vmatprep.subr.mxu0 0.0
    %1390 = vmatpush2.msra.mxu0 0.0
    %1391 = vmatprep.subr.mxu0 0.0
    %1392 = vmatpush2.msra.mxu0 0.0
    %1393 = vmatprep.subr.mxu0 0.0
    %1394 = vmatpush2.msra.mxu0 0.0
    %1395 = vmatprep.subr.mxu0 0.0
    %1396 = vmatpush2.msra.mxu0 0.0
    %1397 = vmatprep.mubr.f32.mxu0 0.0
    %1398 = vmatmul.mubr.f32.gmra.mxu0 %v1237
    %v1399 = vpop.f32.mrf.mxu0
    %v1400 = vadd.f32 0.0, %v1399
    %v1401 = vpop.f32.mrf.mxu0
    %1402 = vdwg.mxu0
    %1403 = vmatprep.subr.mxu0 %v885
    %1404 = vmatpush1.msra.mxu0 %v884
    %1405 = vmatprep.subr.mxu0 %v882
    %1406 = vmatpush1.msra.mxu0 %v881
    %1407 = vmatprep.subr.mxu0 %v879
    %1408 = vmatpush1.msra.mxu0 %v878
    %1409 = vmatprep.subr.mxu0 %v876
    %1410 = vmatpush1.msra.mxu0 %v875
    %1411 = vmatprep.subr.mxu0 %v873
    %1412 = vmatpush1.msra.mxu0 %v872
    %1413 = vmatprep.subr.mxu0 %v870
    %1414 = vmatpush1.msra.mxu0 %v869
    %1415 = vmatprep.subr.mxu0 %v867
    %1416 = vmatpush1.msra.mxu0 %v866
    %1417 = vmatprep.subr.mxu0 %v864
    %1418 = vmatpush1.msra.mxu0 %v863
    %1419 = vmatprep.subr.mxu0 %v861
    %1420 = vmatpush1.msra.mxu0 %v860
    %1421 = vmatprep.subr.mxu0 %v858
    %1422 = vmatpush1.msra.mxu0 %v857
    %1423 = vmatprep.subr.mxu0 %v855
    %1424 = vmatpush1.msra.mxu0 %v854
    %1425 = vmatprep.subr.mxu0 %v852
    %1426 = vmatpush1.msra.mxu0 %v851
    %1427 = vmatprep.subr.mxu0 %v849
    %1428 = vmatpush1.msra.mxu0 %v848
    %1429 = vmatprep.subr.mxu0 %v846
    %1430 = vmatpush1.msra.mxu0 %v845
    %1431 = vmatprep.subr.mxu0 %v843
    %1432 = vmatpush1.msra.mxu0 %v842
    %1433 = vmatprep.subr.mxu0 %v840
    %1434 = vmatpush1.msra.mxu0 %v839
    %1435 = vmatprep.subr.mxu0 0.0
    %1436 = vmatpush2.msra.mxu0 0.0
    %1437 = vmatprep.subr.mxu0 0.0
    %1438 = vmatpush2.msra.mxu0 0.0
    %1439 = vmatprep.subr.mxu0 0.0
    %1440 = vmatpush2.msra.mxu0 0.0
    %1441 = vmatprep.subr.mxu0 0.0
    %1442 = vmatpush2.msra.mxu0 0.0
    %1443 = vmatprep.subr.mxu0 0.0
    %1444 = vmatpush2.msra.mxu0 0.0
    %1445 = vmatprep.subr.mxu0 0.0
    %1446 = vmatpush2.msra.mxu0 0.0
    %1447 = vmatprep.subr.mxu0 0.0
    %1448 = vmatpush2.msra.mxu0 0.0
    %1449 = vmatprep.subr.mxu0 0.0
    %1450 = vmatpush2.msra.mxu0 0.0
    %1451 = vmatprep.subr.mxu0 0.0
    %1452 = vmatpush2.msra.mxu0 0.0
    %1453 = vmatprep.subr.mxu0 0.0
    %1454 = vmatpush2.msra.mxu0 0.0
    %1455 = vmatprep.subr.mxu0 0.0
    %1456 = vmatpush2.msra.mxu0 0.0
    %1457 = vmatprep.subr.mxu0 0.0
    %1458 = vmatpush2.msra.mxu0 0.0
    %1459 = vmatprep.subr.mxu0 0.0
    %1460 = vmatpush2.msra.mxu0 0.0
    %1461 = vmatprep.subr.mxu0 0.0
    %1462 = vmatpush2.msra.mxu0 0.0
    %1463 = vmatprep.subr.mxu0 0.0
    %1464 = vmatpush2.msra.mxu0 0.0
    %1465 = vmatprep.subr.mxu0 0.0
    %1466 = vmatpush2.msra.mxu0 0.0
    %1467 = vmatprep.mubr.f32.mxu0 0.0
    %1468 = vmatmul.mubr.f32.gmra.mxu0 %v1237
    %v1469 = vpop.f32.mrf.mxu0
    %v1470 = vadd.f32 %v456, %v1469
    %v1471 = vpop.f32.mrf.mxu0
    %v1472 = vadd.f32 %v460, %v1471
    %1473 = vdwg.mxu0
    %1474 = vmatprep.subr.mxu0 0.0
    %1475 = vmatpush1.msra.mxu0 %v886
    %1476 = vmatprep.subr.mxu0 0.0
    %1477 = vmatpush1.msra.mxu0 %v883
    %1478 = vmatprep.subr.mxu0 0.0
    %1479 = vmatpush1.msra.mxu0 %v880
    %1480 = vmatprep.subr.mxu0 0.0
    %1481 = vmatpush1.msra.mxu0 %v877
    %1482 = vmatprep.subr.mxu0 0.0
    %1483 = vmatpush1.msra.mxu0 %v874
    %1484 = vmatprep.subr.mxu0 0.0
    %1485 = vmatpush1.msra.mxu0 %v871
    %1486 = vmatprep.subr.mxu0 0.0
    %1487 = vmatpush1.msra.mxu0 %v868
    %1488 = vmatprep.subr.mxu0 0.0
    %1489 = vmatpush1.msra.mxu0 %v865
    %1490 = vmatprep.subr.mxu0 0.0
    %1491 = vmatpush1.msra.mxu0 %v862
    %1492 = vmatprep.subr.mxu0 0.0
    %1493 = vmatpush1.msra.mxu0 %v859
    %1494 = vmatprep.subr.mxu0 0.0
    %1495 = vmatpush1.msra.mxu0 %v856
    %1496 = vmatprep.subr.mxu0 0.0
    %1497 = vmatpush1.msra.mxu0 %v853
    %1498 = vmatprep.subr.mxu0 0.0
    %1499 = vmatpush1.msra.mxu0 %v850
    %1500 = vmatprep.subr.mxu0 0.0
    %1501 = vmatpush1.msra.mxu0 %v847
    %1502 = vmatprep.subr.mxu0 0.0
    %1503 = vmatpush1.msra.mxu0 %v844
    %1504 = vmatprep.subr.mxu0 0.0
    %1505 = vmatpush1.msra.mxu0 %v841
    %1506 = vmatprep.subr.mxu0 0.0
    %1507 = vmatpush2.msra.mxu0 0.0
    %1508 = vmatprep.subr.mxu0 0.0
    %1509 = vmatpush2.msra.mxu0 0.0
    %1510 = vmatprep.subr.mxu0 0.0
    %1511 = vmatpush2.msra.mxu0 0.0
    %1512 = vmatprep.subr.mxu0 0.0
    %1513 = vmatpush2.msra.mxu0 0.0
    %1514 = vmatprep.subr.mxu0 0.0
    %1515 = vmatpush2.msra.mxu0 0.0
    %1516 = vmatprep.subr.mxu0 0.0
    %1517 = vmatpush2.msra.mxu0 0.0
    %1518 = vmatprep.subr.mxu0 0.0
    %1519 = vmatpush2.msra.mxu0 0.0
    %1520 = vmatprep.subr.mxu0 0.0
    %1521 = vmatpush2.msra.mxu0 0.0
    %1522 = vmatprep.subr.mxu0 0.0
    %1523 = vmatpush2.msra.mxu0 0.0
    %1524 = vmatprep.subr.mxu0 0.0
    %1525 = vmatpush2.msra.mxu0 0.0
    %1526 = vmatprep.subr.mxu0 0.0
    %1527 = vmatpush2.msra.mxu0 0.0
    %1528 = vmatprep.subr.mxu0 0.0
    %1529 = vmatpush2.msra.mxu0 0.0
    %1530 = vmatprep.subr.mxu0 0.0
    %1531 = vmatpush2.msra.mxu0 0.0
    %1532 = vmatprep.subr.mxu0 0.0
    %1533 = vmatpush2.msra.mxu0 0.0
    %1534 = vmatprep.subr.mxu0 0.0
    %1535 = vmatpush2.msra.mxu0 0.0
    %1536 = vmatprep.subr.mxu0 0.0
    %1537 = vmatpush2.msra.mxu0 0.0
    %1538 = vmatprep.mubr.f32.mxu0 0.0
    %1539 = vmatmul.mubr.f32.gmra.mxu0 %v1237
    %v1540 = vpop.f32.mrf.mxu0
    %v1541 = vadd.f32 %v464, %v1540
    %v1542 = vpop.f32.mrf.mxu0
    %1543 = vdwg.mxu0
    %1544 = vmatprep.subr.mxu0 %v1074
    %1545 = vmatpush1.msra.mxu0 %v1073
    %1546 = vmatprep.subr.mxu0 %v1071
    %1547 = vmatpush1.msra.mxu0 %v1070
    %1548 = vmatprep.subr.mxu0 %v1068
    %1549 = vmatpush1.msra.mxu0 %v1067
    %1550 = vmatprep.subr.mxu0 %v1065
    %1551 = vmatpush1.msra.mxu0 %v1064
    %1552 = vmatprep.subr.mxu0 %v1062
    %1553 = vmatpush1.msra.mxu0 %v1061
    %1554 = vmatprep.subr.mxu0 %v1059
    %1555 = vmatpush1.msra.mxu0 %v1058
    %1556 = vmatprep.subr.mxu0 %v1056
    %1557 = vmatpush1.msra.mxu0 %v1055
    %1558 = vmatprep.subr.mxu0 %v1053
    %1559 = vmatpush1.msra.mxu0 %v1052
    %1560 = vmatprep.subr.mxu0 %v1050
    %1561 = vmatpush1.msra.mxu0 %v1049
    %1562 = vmatprep.subr.mxu0 %v1047
    %1563 = vmatpush1.msra.mxu0 %v1046
    %1564 = vmatprep.subr.mxu0 %v1044
    %1565 = vmatpush1.msra.mxu0 %v1043
    %1566 = vmatprep.subr.mxu0 %v1041
    %1567 = vmatpush1.msra.mxu0 %v1040
    %1568 = vmatprep.subr.mxu0 %v1038
    %1569 = vmatpush1.msra.mxu0 %v1037
    %1570 = vmatprep.subr.mxu0 %v1035
    %1571 = vmatpush1.msra.mxu0 %v1034
    %1572 = vmatprep.subr.mxu0 %v1032
    %1573 = vmatpush1.msra.mxu0 %v1031
    %1574 = vmatprep.subr.mxu0 %v1029
    %1575 = vmatpush1.msra.mxu0 %v1028
    %1576 = vmatprep.subr.mxu0 0.0
    %1577 = vmatpush2.msra.mxu0 0.0
    %1578 = vmatprep.subr.mxu0 0.0
    %1579 = vmatpush2.msra.mxu0 0.0
    %1580 = vmatprep.subr.mxu0 0.0
    %1581 = vmatpush2.msra.mxu0 0.0
    %1582 = vmatprep.subr.mxu0 0.0
    %1583 = vmatpush2.msra.mxu0 0.0
    %1584 = vmatprep.subr.mxu0 0.0
    %1585 = vmatpush2.msra.mxu0 0.0
    %1586 = vmatprep.subr.mxu0 0.0
    %1587 = vmatpush2.msra.mxu0 0.0
    %1588 = vmatprep.subr.mxu0 0.0
    %1589 = vmatpush2.msra.mxu0 0.0
    %1590 = vmatprep.subr.mxu0 0.0
    %1591 = vmatpush2.msra.mxu0 0.0
    %1592 = vmatprep.subr.mxu0 0.0
    %1593 = vmatpush2.msra.mxu0 0.0
    %1594 = vmatprep.subr.mxu0 0.0
    %1595 = vmatpush2.msra.mxu0 0.0
    %1596 = vmatprep.subr.mxu0 0.0
    %1597 = vmatpush2.msra.mxu0 0.0
    %1598 = vmatprep.subr.mxu0 0.0
    %1599 = vmatpush2.msra.mxu0 0.0
    %1600 = vmatprep.subr.mxu0 0.0
    %1601 = vmatpush2.msra.mxu0 0.0
    %1602 = vmatprep.subr.mxu0 0.0
    %1603 = vmatpush2.msra.mxu0 0.0
    %1604 = vmatprep.subr.mxu0 0.0
    %1605 = vmatpush2.msra.mxu0 0.0
    %1606 = vmatprep.subr.mxu0 0.0
    %1607 = vmatpush2.msra.mxu0 0.0
    %1608 = vmatprep.mubr.f32.mxu0 0.0
    %1609 = vmatmul.mubr.f32.gmra.mxu0 %v1258
    %v1610 = vpop.f32.mrf.mxu0
    %v1611 = vadd.f32 0.0, %v1610
    %v1612 = vpop.f32.mrf.mxu0
    %v1613 = vadd.f32 0.0, %v1612
    %1614 = vdwg.mxu0
    %1615 = vmatprep.subr.mxu0 0.0
    %1616 = vmatpush1.msra.mxu0 %v1075
    %1617 = vmatprep.subr.mxu0 0.0
    %1618 = vmatpush1.msra.mxu0 %v1072
    %1619 = vmatprep.subr.mxu0 0.0
    %1620 = vmatpush1.msra.mxu0 %v1069
    %1621 = vmatprep.subr.mxu0 0.0
    %1622 = vmatpush1.msra.mxu0 %v1066
    %1623 = vmatprep.subr.mxu0 0.0
    %1624 = vmatpush1.msra.mxu0 %v1063
    %1625 = vmatprep.subr.mxu0 0.0
    %1626 = vmatpush1.msra.mxu0 %v1060
    %1627 = vmatprep.subr.mxu0 0.0
    %1628 = vmatpush1.msra.mxu0 %v1057
    %1629 = vmatprep.subr.mxu0 0.0
    %1630 = vmatpush1.msra.mxu0 %v1054
    %1631 = vmatprep.subr.mxu0 0.0
    %1632 = vmatpush1.msra.mxu0 %v1051
    %1633 = vmatprep.subr.mxu0 0.0
    %1634 = vmatpush1.msra.mxu0 %v1048
    %1635 = vmatprep.subr.mxu0 0.0
    %1636 = vmatpush1.msra.mxu0 %v1045
    %1637 = vmatprep.subr.mxu0 0.0
    %1638 = vmatpush1.msra.mxu0 %v1042
    %1639 = vmatprep.subr.mxu0 0.0
    %1640 = vmatpush1.msra.mxu0 %v1039
    %1641 = vmatprep.subr.mxu0 0.0
    %1642 = vmatpush1.msra.mxu0 %v1036
    %1643 = vmatprep.subr.mxu0 0.0
    %1644 = vmatpush1.msra.mxu0 %v1033
    %1645 = vmatprep.subr.mxu0 0.0
    %1646 = vmatpush1.msra.mxu0 %v1030
    %1647 = vmatprep.subr.mxu0 0.0
    %1648 = vmatpush2.msra.mxu0 0.0
    %1649 = vmatprep.subr.mxu0 0.0
    %1650 = vmatpush2.msra.mxu0 0.0
    %1651 = vmatprep.subr.mxu0 0.0
    %1652 = vmatpush2.msra.mxu0 0.0
    %1653 = vmatprep.subr.mxu0 0.0
    %1654 = vmatpush2.msra.mxu0 0.0
    %1655 = vmatprep.subr.mxu0 0.0
    %1656 = vmatpush2.msra.mxu0 0.0
    %1657 = vmatprep.subr.mxu0 0.0
    %1658 = vmatpush2.msra.mxu0 0.0
    %1659 = vmatprep.subr.mxu0 0.0
    %1660 = vmatpush2.msra.mxu0 0.0
    %1661 = vmatprep.subr.mxu0 0.0
    %1662 = vmatpush2.msra.mxu0 0.0
    %1663 = vmatprep.subr.mxu0 0.0
    %1664 = vmatpush2.msra.mxu0 0.0
    %1665 = vmatprep.subr.mxu0 0.0
    %1666 = vmatpush2.msra.mxu0 0.0
    %1667 = vmatprep.subr.mxu0 0.0
    %1668 = vmatpush2.msra.mxu0 0.0
    %1669 = vmatprep.subr.mxu0 0.0
    %1670 = vmatpush2.msra.mxu0 0.0
    %1671 = vmatprep.subr.mxu0 0.0
    %1672 = vmatpush2.msra.mxu0 0.0
    %1673 = vmatprep.subr.mxu0 0.0
    %1674 = vmatpush2.msra.mxu0 0.0
    %1675 = vmatprep.subr.mxu0 0.0
    %1676 = vmatpush2.msra.mxu0 0.0
    %1677 = vmatprep.subr.mxu0 0.0
    %1678 = vmatpush2.msra.mxu0 0.0
    %1679 = vmatprep.mubr.f32.mxu0 0.0
    %1680 = vmatmul.mubr.f32.gmra.mxu0 %v1258
    %v1681 = vpop.f32.mrf.mxu0
    %v1682 = vadd.f32 0.0, %v1681
    %v1683 = vpop.f32.mrf.mxu0
    %1684 = vdwg.mxu0
    %v1685 = vadd.f32 %v1259, %v1329
    %v1686 = vxor.u32 %v1685, 2147483648
    %v1687 = vmul.f32 %v1686, 1.442695
    %v1688 = vpow.pop %v1687
    %v1689 = vadd.f32 %v1688, 1.0
    %v1690 = vrcp.pop %v1689
    %v1691 = vmul.f32 1.0, %v1690
    %v1692 = vadd.f32 %v1260, %v1331
    %v1693 = vxor.u32 %v1692, 2147483648
    %v1694 = vmul.f32 %v1693, 1.442695
    %v1695 = vpow.pop %v1694
    %v1696 = vadd.f32 %v1695, 1.0
    %v1697 = vrcp.pop %v1696
    %v1698 = vmul.f32 1.0, %v1697
    %v1699 = vadd.f32 %v1400, %v473
    %v1700 = vmul.f32 %v1691, %v1699
    %v1701 = vadd.f32 %v1261, %v1700
    %v1702 = vtanh.pop %v1701
    %v1703 = vsub.f32 %v1237, %v1702
    %v1704 = vmul.f32 %v1698, %v1703
    %v1705 = vadd.f32 %v1702, %v1704
    %v1706 = vadd.f32 %v1470, %v1611
    %v1707 = vxor.u32 %v1706, 2147483648
    %v1708 = vmul.f32 %v1707, 1.442695
    %v1709 = vpow.pop %v1708
    %v1710 = vadd.f32 %v1709, 1.0
    %v1711 = vrcp.pop %v1710
    %v1712 = vmul.f32 1.0, %v1711
    %v1713 = vadd.f32 %v1472, %v1613
    %v1714 = vxor.u32 %v1713, 2147483648
    %v1715 = vmul.f32 %v1714, 1.442695
    %v1716 = vpow.pop %v1715
    %v1717 = vadd.f32 %v1716, 1.0
    %v1718 = vrcp.pop %v1717
    %v1719 = vmul.f32 1.0, %v1718
    %v1720 = vadd.f32 %v1682, %v480
    %v1721 = vmul.f32 %v1712, %v1720
    %v1722 = vadd.f32 %v1541, %v1721
    %v1723 = vtanh.pop %v1722
    %v1724 = vsub.f32 %v1258, %v1723
    %v1725 = vmul.f32 %v1719, %v1724
    %v1726 = vadd.f32 %v1723, %v1725
    %v1727 = vld [vmem:[#allocation2 + $0x48] sm:$0xff]
    %v1728 = vld [vmem:[#allocation2 + $0x50] sm:$0xff]
    %v1729 = vld [vmem:[#allocation2 + $0x58] sm:$0xff]
    %1730 = vmatprep.subr.mxu0 %v531
    %1731 = vmatpush1.msra.mxu0 %v530
    %1732 = vmatprep.subr.mxu0 %v528
    %1733 = vmatpush1.msra.mxu0 %v527
    %1734 = vmatprep.subr.mxu0 %v525
    %1735 = vmatpush1.msra.mxu0 %v524
    %1736 = vmatprep.subr.mxu0 %v522
    %1737 = vmatpush1.msra.mxu0 %v521
    %1738 = vmatprep.subr.mxu0 %v519
    %1739 = vmatpush1.msra.mxu0 %v518
    %1740 = vmatprep.subr.mxu0 %v516
    %1741 = vmatpush1.msra.mxu0 %v515
    %1742 = vmatprep.subr.mxu0 %v513
    %1743 = vmatpush1.msra.mxu0 %v512
    %1744 = vmatprep.subr.mxu0 %v510
    %1745 = vmatpush1.msra.mxu0 %v509
    %1746 = vmatprep.subr.mxu0 %v507
    %1747 = vmatpush1.msra.mxu0 %v506
    %1748 = vmatprep.subr.mxu0 %v504
    %1749 = vmatpush1.msra.mxu0 %v503
    %1750 = vmatprep.subr.mxu0 %v501
    %1751 = vmatpush1.msra.mxu0 %v500
    %1752 = vmatprep.subr.mxu0 %v498
    %1753 = vmatpush1.msra.mxu0 %v497
    %1754 = vmatprep.subr.mxu0 %v495
    %1755 = vmatpush1.msra.mxu0 %v494
    %1756 = vmatprep.subr.mxu0 %v492
    %1757 = vmatpush1.msra.mxu0 %v491
    %1758 = vmatprep.subr.mxu0 %v489
    %1759 = vmatpush1.msra.mxu0 %v488
    %1760 = vmatprep.subr.mxu0 %v486
    %1761 = vmatpush1.msra.mxu0 %v485
    %1762 = vmatprep.subr.mxu0 0.0
    %1763 = vmatpush2.msra.mxu0 0.0
    %1764 = vmatprep.subr.mxu0 0.0
    %1765 = vmatpush2.msra.mxu0 0.0
    %1766 = vmatprep.subr.mxu0 0.0
    %1767 = vmatpush2.msra.mxu0 0.0
    %1768 = vmatprep.subr.mxu0 0.0
    %1769 = vmatpush2.msra.mxu0 0.0
    %1770 = vmatprep.subr.mxu0 0.0
    %1771 = vmatpush2.msra.mxu0 0.0
    %1772 = vmatprep.subr.mxu0 0.0
    %1773 = vmatpush2.msra.mxu0 0.0
    %1774 = vmatprep.subr.mxu0 0.0
    %1775 = vmatpush2.msra.mxu0 0.0
    %1776 = vmatprep.subr.mxu0 0.0
    %1777 = vmatpush2.msra.mxu0 0.0
    %1778 = vmatprep.subr.mxu0 0.0
    %1779 = vmatpush2.msra.mxu0 0.0
    %1780 = vmatprep.subr.mxu0 0.0
    %1781 = vmatpush2.msra.mxu0 0.0
    %1782 = vmatprep.subr.mxu0 0.0
    %1783 = vmatpush2.msra.mxu0 0.0
    %1784 = vmatprep.subr.mxu0 0.0
    %1785 = vmatpush2.msra.mxu0 0.0
    %1786 = vmatprep.subr.mxu0 0.0
    %1787 = vmatpush2.msra.mxu0 0.0
    %1788 = vmatprep.subr.mxu0 0.0
    %1789 = vmatpush2.msra.mxu0 0.0
    %1790 = vmatprep.subr.mxu0 0.0
    %1791 = vmatpush2.msra.mxu0 0.0
    %1792 = vmatprep.subr.mxu0 0.0
    %1793 = vmatpush2.msra.mxu0 0.0
    %1794 = vmatprep.mubr.f32.mxu0 0.0
    %1795 = vmatmul.mubr.f32.gmra.mxu0 %v1705
    %v1796 = vpop.f32.mrf.mxu0
    %v1797 = vadd.f32 0.0, %v1796
    %v1798 = vpop.f32.mrf.mxu0
    %v1799 = vadd.f32 0.0, %v1798
    %1800 = vdwg.mxu0
    %1801 = vmatprep.subr.mxu0 0.0
    %1802 = vmatpush1.msra.mxu0 %v532
    %1803 = vmatprep.subr.mxu0 0.0
    %1804 = vmatpush1.msra.mxu0 %v529
    %1805 = vmatprep.subr.mxu0 0.0
    %1806 = vmatpush1.msra.mxu0 %v526
    %1807 = vmatprep.subr.mxu0 0.0
    %1808 = vmatpush1.msra.mxu0 %v523
    %1809 = vmatprep.subr.mxu0 0.0
    %1810 = vmatpush1.msra.mxu0 %v520
    %1811 = vmatprep.subr.mxu0 0.0
    %1812 = vmatpush1.msra.mxu0 %v517
    %1813 = vmatprep.subr.mxu0 0.0
    %1814 = vmatpush1.msra.mxu0 %v514
    %1815 = vmatprep.subr.mxu0 0.0
    %1816 = vmatpush1.msra.mxu0 %v511
    %1817 = vmatprep.subr.mxu0 0.0
    %1818 = vmatpush1.msra.mxu0 %v508
    %1819 = vmatprep.subr.mxu0 0.0
    %1820 = vmatpush1.msra.mxu0 %v505
    %1821 = vmatprep.subr.mxu0 0.0
    %1822 = vmatpush1.msra.mxu0 %v502
    %1823 = vmatprep.subr.mxu0 0.0
    %1824 = vmatpush1.msra.mxu0 %v499
    %1825 = vmatprep.subr.mxu0 0.0
    %1826 = vmatpush1.msra.mxu0 %v496
    %1827 = vmatprep.subr.mxu0 0.0
    %1828 = vmatpush1.msra.mxu0 %v493
    %1829 = vmatprep.subr.mxu0 0.0
    %1830 = vmatpush1.msra.mxu0 %v490
    %1831 = vmatprep.subr.mxu0 0.0
    %1832 = vmatpush1.msra.mxu0 %v487
    %1833 = vmatprep.subr.mxu0 0.0
    %1834 = vmatpush2.msra.mxu0 0.0
    %1835 = vmatprep.subr.mxu0 0.0
    %1836 = vmatpush2.msra.mxu0 0.0
    %1837 = vmatprep.subr.mxu0 0.0
    %1838 = vmatpush2.msra.mxu0 0.0
    %1839 = vmatprep.subr.mxu0 0.0
    %1840 = vmatpush2.msra.mxu0 0.0
    %1841 = vmatprep.subr.mxu0 0.0
    %1842 = vmatpush2.msra.mxu0 0.0
    %1843 = vmatprep.subr.mxu0 0.0
    %1844 = vmatpush2.msra.mxu0 0.0
    %1845 = vmatprep.subr.mxu0 0.0
    %1846 = vmatpush2.msra.mxu0 0.0
    %1847 = vmatprep.subr.mxu0 0.0
    %1848 = vmatpush2.msra.mxu0 0.0
    %1849 = vmatprep.subr.mxu0 0.0
    %1850 = vmatpush2.msra.mxu0 0.0
    %1851 = vmatprep.subr.mxu0 0.0
    %1852 = vmatpush2.msra.mxu0 0.0
    %1853 = vmatprep.subr.mxu0 0.0
    %1854 = vmatpush2.msra.mxu0 0.0
    %1855 = vmatprep.subr.mxu0 0.0
    %1856 = vmatpush2.msra.mxu0 0.0
    %1857 = vmatprep.subr.mxu0 0.0
    %1858 = vmatpush2.msra.mxu0 0.0
    %1859 = vmatprep.subr.mxu0 0.0
    %1860 = vmatpush2.msra.mxu0 0.0
    %1861 = vmatprep.subr.mxu0 0.0
    %1862 = vmatpush2.msra.mxu0 0.0
    %1863 = vmatprep.subr.mxu0 0.0
    %1864 = vmatpush2.msra.mxu0 0.0
    %1865 = vmatprep.mubr.f32.mxu0 0.0
    %1866 = vmatmul.mubr.f32.gmra.mxu0 %v1705
    %v1867 = vpop.f32.mrf.mxu0
    %v1868 = vadd.f32 0.0, %v1867
    %v1869 = vpop.f32.mrf.mxu0
    %1870 = vdwg.mxu0
    %1871 = vmatprep.subr.mxu0 %v885
    %1872 = vmatpush1.msra.mxu0 %v884
    %1873 = vmatprep.subr.mxu0 %v882
    %1874 = vmatpush1.msra.mxu0 %v881
    %1875 = vmatprep.subr.mxu0 %v879
    %1876 = vmatpush1.msra.mxu0 %v878
    %1877 = vmatprep.subr.mxu0 %v876
    %1878 = vmatpush1.msra.mxu0 %v875
    %1879 = vmatprep.subr.mxu0 %v873
    %1880 = vmatpush1.msra.mxu0 %v872
    %1881 = vmatprep.subr.mxu0 %v870
    %1882 = vmatpush1.msra.mxu0 %v869
    %1883 = vmatprep.subr.mxu0 %v867
    %1884 = vmatpush1.msra.mxu0 %v866
    %1885 = vmatprep.subr.mxu0 %v864
    %1886 = vmatpush1.msra.mxu0 %v863
    %1887 = vmatprep.subr.mxu0 %v861
    %1888 = vmatpush1.msra.mxu0 %v860
    %1889 = vmatprep.subr.mxu0 %v858
    %1890 = vmatpush1.msra.mxu0 %v857
    %1891 = vmatprep.subr.mxu0 %v855
    %1892 = vmatpush1.msra.mxu0 %v854
    %1893 = vmatprep.subr.mxu0 %v852
    %1894 = vmatpush1.msra.mxu0 %v851
    %1895 = vmatprep.subr.mxu0 %v849
    %1896 = vmatpush1.msra.mxu0 %v848
    %1897 = vmatprep.subr.mxu0 %v846
    %1898 = vmatpush1.msra.mxu0 %v845
    %1899 = vmatprep.subr.mxu0 %v843
    %1900 = vmatpush1.msra.mxu0 %v842
    %1901 = vmatprep.subr.mxu0 %v840
    %1902 = vmatpush1.msra.mxu0 %v839
    %1903 = vmatprep.subr.mxu0 0.0
    %1904 = vmatpush2.msra.mxu0 0.0
    %1905 = vmatprep.subr.mxu0 0.0
    %1906 = vmatpush2.msra.mxu0 0.0
    %1907 = vmatprep.subr.mxu0 0.0
    %1908 = vmatpush2.msra.mxu0 0.0
    %1909 = vmatprep.subr.mxu0 0.0
    %1910 = vmatpush2.msra.mxu0 0.0
    %1911 = vmatprep.subr.mxu0 0.0
    %1912 = vmatpush2.msra.mxu0 0.0
    %1913 = vmatprep.subr.mxu0 0.0
    %1914 = vmatpush2.msra.mxu0 0.0
    %1915 = vmatprep.subr.mxu0 0.0
    %1916 = vmatpush2.msra.mxu0 0.0
    %1917 = vmatprep.subr.mxu0 0.0
    %1918 = vmatpush2.msra.mxu0 0.0
    %1919 = vmatprep.subr.mxu0 0.0
    %1920 = vmatpush2.msra.mxu0 0.0
    %1921 = vmatprep.subr.mxu0 0.0
    %1922 = vmatpush2.msra.mxu0 0.0
    %1923 = vmatprep.subr.mxu0 0.0
    %1924 = vmatpush2.msra.mxu0 0.0
    %1925 = vmatprep.subr.mxu0 0.0
    %1926 = vmatpush2.msra.mxu0 0.0
    %1927 = vmatprep.subr.mxu0 0.0
    %1928 = vmatpush2.msra.mxu0 0.0
    %1929 = vmatprep.subr.mxu0 0.0
    %1930 = vmatpush2.msra.mxu0 0.0
    %1931 = vmatprep.subr.mxu0 0.0
    %1932 = vmatpush2.msra.mxu0 0.0
    %1933 = vmatprep.subr.mxu0 0.0
    %1934 = vmatpush2.msra.mxu0 0.0
    %1935 = vmatprep.mubr.f32.mxu0 0.0
    %1936 = vmatmul.mubr.f32.gmra.mxu0 %v1705
    %v1937 = vpop.f32.mrf.mxu0
    %v1938 = vadd.f32 %v456, %v1937
    %v1939 = vpop.f32.mrf.mxu0
    %v1940 = vadd.f32 %v460, %v1939
    %1941 = vdwg.mxu0
    %1942 = vmatprep.subr.mxu0 0.0
    %1943 = vmatpush1.msra.mxu0 %v886
    %1944 = vmatprep.subr.mxu0 0.0
    %1945 = vmatpush1.msra.mxu0 %v883
    %1946 = vmatprep.subr.mxu0 0.0
    %1947 = vmatpush1.msra.mxu0 %v880
    %1948 = vmatprep.subr.mxu0 0.0
    %1949 = vmatpush1.msra.mxu0 %v877
    %1950 = vmatprep.subr.mxu0 0.0
    %1951 = vmatpush1.msra.mxu0 %v874
    %1952 = vmatprep.subr.mxu0 0.0
    %1953 = vmatpush1.msra.mxu0 %v871
    %1954 = vmatprep.subr.mxu0 0.0
    %1955 = vmatpush1.msra.mxu0 %v868
    %1956 = vmatprep.subr.mxu0 0.0
    %1957 = vmatpush1.msra.mxu0 %v865
    %1958 = vmatprep.subr.mxu0 0.0
    %1959 = vmatpush1.msra.mxu0 %v862
    %1960 = vmatprep.subr.mxu0 0.0
    %1961 = vmatpush1.msra.mxu0 %v859
    %1962 = vmatprep.subr.mxu0 0.0
    %1963 = vmatpush1.msra.mxu0 %v856
    %1964 = vmatprep.subr.mxu0 0.0
    %1965 = vmatpush1.msra.mxu0 %v853
    %1966 = vmatprep.subr.mxu0 0.0
    %1967 = vmatpush1.msra.mxu0 %v850
    %1968 = vmatprep.subr.mxu0 0.0
    %1969 = vmatpush1.msra.mxu0 %v847
    %1970 = vmatprep.subr.mxu0 0.0
    %1971 = vmatpush1.msra.mxu0 %v844
    %1972 = vmatprep.subr.mxu0 0.0
    %1973 = vmatpush1.msra.mxu0 %v841
    %1974 = vmatprep.subr.mxu0 0.0
    %1975 = vmatpush2.msra.mxu0 0.0
    %1976 = vmatprep.subr.mxu0 0.0
    %1977 = vmatpush2.msra.mxu0 0.0
    %1978 = vmatprep.subr.mxu0 0.0
    %1979 = vmatpush2.msra.mxu0 0.0
    %1980 = vmatprep.subr.mxu0 0.0
    %1981 = vmatpush2.msra.mxu0 0.0
    %1982 = vmatprep.subr.mxu0 0.0
    %1983 = vmatpush2.msra.mxu0 0.0
    %1984 = vmatprep.subr.mxu0 0.0
    %1985 = vmatpush2.msra.mxu0 0.0
    %1986 = vmatprep.subr.mxu0 0.0
    %1987 = vmatpush2.msra.mxu0 0.0
    %1988 = vmatprep.subr.mxu0 0.0
    %1989 = vmatpush2.msra.mxu0 0.0
    %1990 = vmatprep.subr.mxu0 0.0
    %1991 = vmatpush2.msra.mxu0 0.0
    %1992 = vmatprep.subr.mxu0 0.0
    %1993 = vmatpush2.msra.mxu0 0.0
    %1994 = vmatprep.subr.mxu0 0.0
    %1995 = vmatpush2.msra.mxu0 0.0
    %1996 = vmatprep.subr.mxu0 0.0
    %1997 = vmatpush2.msra.mxu0 0.0
    %1998 = vmatprep.subr.mxu0 0.0
    %1999 = vmatpush2.msra.mxu0 0.0
    %2000 = vmatprep.subr.mxu0 0.0
    %2001 = vmatpush2.msra.mxu0 0.0
    %2002 = vmatprep.subr.mxu0 0.0
    %2003 = vmatpush2.msra.mxu0 0.0
    %2004 = vmatprep.subr.mxu0 0.0
    %2005 = vmatpush2.msra.mxu0 0.0
    %2006 = vmatprep.mubr.f32.mxu0 0.0
    %2007 = vmatmul.mubr.f32.gmra.mxu0 %v1705
    %v2008 = vpop.f32.mrf.mxu0
    %v2009 = vadd.f32 %v464, %v2008
    %v2010 = vpop.f32.mrf.mxu0
    %2011 = vdwg.mxu0
    %2012 = vmatprep.subr.mxu0 %v1074
    %2013 = vmatpush1.msra.mxu0 %v1073
    %2014 = vmatprep.subr.mxu0 %v1071
    %2015 = vmatpush1.msra.mxu0 %v1070
    %2016 = vmatprep.subr.mxu0 %v1068
    %2017 = vmatpush1.msra.mxu0 %v1067
    %2018 = vmatprep.subr.mxu0 %v1065
    %2019 = vmatpush1.msra.mxu0 %v1064
    %2020 = vmatprep.subr.mxu0 %v1062
    %2021 = vmatpush1.msra.mxu0 %v1061
    %2022 = vmatprep.subr.mxu0 %v1059
    %2023 = vmatpush1.msra.mxu0 %v1058
    %2024 = vmatprep.subr.mxu0 %v1056
    %2025 = vmatpush1.msra.mxu0 %v1055
    %2026 = vmatprep.subr.mxu0 %v1053
    %2027 = vmatpush1.msra.mxu0 %v1052
    %2028 = vmatprep.subr.mxu0 %v1050
    %2029 = vmatpush1.msra.mxu0 %v1049
    %2030 = vmatprep.subr.mxu0 %v1047
    %2031 = vmatpush1.msra.mxu0 %v1046
    %2032 = vmatprep.subr.mxu0 %v1044
    %2033 = vmatpush1.msra.mxu0 %v1043
    %2034 = vmatprep.subr.mxu0 %v1041
    %2035 = vmatpush1.msra.mxu0 %v1040
    %2036 = vmatprep.subr.mxu0 %v1038
    %2037 = vmatpush1.msra.mxu0 %v1037
    %2038 = vmatprep.subr.mxu0 %v1035
    %2039 = vmatpush1.msra.mxu0 %v1034
    %2040 = vmatprep.subr.mxu0 %v1032
    %2041 = vmatpush1.msra.mxu0 %v1031
    %2042 = vmatprep.subr.mxu0 %v1029
    %2043 = vmatpush1.msra.mxu0 %v1028
    %2044 = vmatprep.subr.mxu0 0.0
    %2045 = vmatpush2.msra.mxu0 0.0
    %2046 = vmatprep.subr.mxu0 0.0
    %2047 = vmatpush2.msra.mxu0 0.0
    %2048 = vmatprep.subr.mxu0 0.0
    %2049 = vmatpush2.msra.mxu0 0.0
    %2050 = vmatprep.subr.mxu0 0.0
    %2051 = vmatpush2.msra.mxu0 0.0
    %2052 = vmatprep.subr.mxu0 0.0
    %2053 = vmatpush2.msra.mxu0 0.0
    %2054 = vmatprep.subr.mxu0 0.0
    %2055 = vmatpush2.msra.mxu0 0.0
    %2056 = vmatprep.subr.mxu0 0.0
    %2057 = vmatpush2.msra.mxu0 0.0
    %2058 = vmatprep.subr.mxu0 0.0
    %2059 = vmatpush2.msra.mxu0 0.0
    %2060 = vmatprep.subr.mxu0 0.0
    %2061 = vmatpush2.msra.mxu0 0.0
    %2062 = vmatprep.subr.mxu0 0.0
    %2063 = vmatpush2.msra.mxu0 0.0
    %2064 = vmatprep.subr.mxu0 0.0
    %2065 = vmatpush2.msra.mxu0 0.0
    %2066 = vmatprep.subr.mxu0 0.0
    %2067 = vmatpush2.msra.mxu0 0.0
    %2068 = vmatprep.subr.mxu0 0.0
    %2069 = vmatpush2.msra.mxu0 0.0
    %2070 = vmatprep.subr.mxu0 0.0
    %2071 = vmatpush2.msra.mxu0 0.0
    %2072 = vmatprep.subr.mxu0 0.0
    %2073 = vmatpush2.msra.mxu0 0.0
    %2074 = vmatprep.subr.mxu0 0.0
    %2075 = vmatpush2.msra.mxu0 0.0
    %2076 = vmatprep.mubr.f32.mxu0 0.0
    %2077 = vmatmul.mubr.f32.gmra.mxu0 %v1726
    %v2078 = vpop.f32.mrf.mxu0
    %v2079 = vadd.f32 0.0, %v2078
    %v2080 = vpop.f32.mrf.mxu0
    %v2081 = vadd.f32 0.0, %v2080
    %2082 = vdwg.mxu0
    %2083 = vmatprep.subr.mxu0 0.0
    %2084 = vmatpush1.msra.mxu0 %v1075
    %2085 = vmatprep.subr.mxu0 0.0
    %2086 = vmatpush1.msra.mxu0 %v1072
    %2087 = vmatprep.subr.mxu0 0.0
    %2088 = vmatpush1.msra.mxu0 %v1069
    %2089 = vmatprep.subr.mxu0 0.0
    %2090 = vmatpush1.msra.mxu0 %v1066
    %2091 = vmatprep.subr.mxu0 0.0
    %2092 = vmatpush1.msra.mxu0 %v1063
    %2093 = vmatprep.subr.mxu0 0.0
    %2094 = vmatpush1.msra.mxu0 %v1060
    %2095 = vmatprep.subr.mxu0 0.0
    %2096 = vmatpush1.msra.mxu0 %v1057
    %2097 = vmatprep.subr.mxu0 0.0
    %2098 = vmatpush1.msra.mxu0 %v1054
    %2099 = vmatprep.subr.mxu0 0.0
    %2100 = vmatpush1.msra.mxu0 %v1051
    %2101 = vmatprep.subr.mxu0 0.0
    %2102 = vmatpush1.msra.mxu0 %v1048
    %2103 = vmatprep.subr.mxu0 0.0
    %2104 = vmatpush1.msra.mxu0 %v1045
    %2105 = vmatprep.subr.mxu0 0.0
    %2106 = vmatpush1.msra.mxu0 %v1042
    %2107 = vmatprep.subr.mxu0 0.0
    %2108 = vmatpush1.msra.mxu0 %v1039
    %2109 = vmatprep.subr.mxu0 0.0
    %2110 = vmatpush1.msra.mxu0 %v1036
    %2111 = vmatprep.subr.mxu0 0.0
    %2112 = vmatpush1.msra.mxu0 %v1033
    %2113 = vmatprep.subr.mxu0 0.0
    %2114 = vmatpush1.msra.mxu0 %v1030
    %2115 = vmatprep.subr.mxu0 0.0
    %2116 = vmatpush2.msra.mxu0 0.0
    %2117 = vmatprep.subr.mxu0 0.0
    %2118 = vmatpush2.msra.mxu0 0.0
    %2119 = vmatprep.subr.mxu0 0.0
    %2120 = vmatpush2.msra.mxu0 0.0
    %2121 = vmatprep.subr.mxu0 0.0
    %2122 = vmatpush2.msra.mxu0 0.0
    %2123 = vmatprep.subr.mxu0 0.0
    %2124 = vmatpush2.msra.mxu0 0.0
    %2125 = vmatprep.subr.mxu0 0.0
    %2126 = vmatpush2.msra.mxu0 0.0
    %2127 = vmatprep.subr.mxu0 0.0
    %2128 = vmatpush2.msra.mxu0 0.0
    %2129 = vmatprep.subr.mxu0 0.0
    %2130 = vmatpush2.msra.mxu0 0.0
    %2131 = vmatprep.subr.mxu0 0.0
    %2132 = vmatpush2.msra.mxu0 0.0
    %2133 = vmatprep.subr.mxu0 0.0
    %2134 = vmatpush2.msra.mxu0 0.0
    %2135 = vmatprep.subr.mxu0 0.0
    %2136 = vmatpush2.msra.mxu0 0.0
    %2137 = vmatprep.subr.mxu0 0.0
    %2138 = vmatpush2.msra.mxu0 0.0
    %2139 = vmatprep.subr.mxu0 0.0
    %2140 = vmatpush2.msra.mxu0 0.0
    %2141 = vmatprep.subr.mxu0 0.0
    %2142 = vmatpush2.msra.mxu0 0.0
    %2143 = vmatprep.subr.mxu0 0.0
    %2144 = vmatpush2.msra.mxu0 0.0
    %2145 = vmatprep.subr.mxu0 0.0
    %2146 = vmatpush2.msra.mxu0 0.0
    %2147 = vmatprep.mubr.f32.mxu0 0.0
    %2148 = vmatmul.mubr.f32.gmra.mxu0 %v1726
    %v2149 = vpop.f32.mrf.mxu0
    %v2150 = vadd.f32 0.0, %v2149
    %v2151 = vpop.f32.mrf.mxu0
    %2152 = vdwg.mxu0
    %v2153 = vadd.f32 %v1727, %v1797
    %v2154 = vxor.u32 %v2153, 2147483648
    %v2155 = vmul.f32 %v2154, 1.442695
    %v2156 = vpow.pop %v2155
    %v2157 = vadd.f32 %v2156, 1.0
    %v2158 = vrcp.pop %v2157
    %v2159 = vmul.f32 1.0, %v2158
    %v2160 = vadd.f32 %v1728, %v1799
    %v2161 = vxor.u32 %v2160, 2147483648
    %v2162 = vmul.f32 %v2161, 1.442695
    %v2163 = vpow.pop %v2162
    %v2164 = vadd.f32 %v2163, 1.0
    %v2165 = vrcp.pop %v2164
    %v2166 = vmul.f32 1.0, %v2165
    %v2167 = vadd.f32 %v1868, %v473
    %v2168 = vmul.f32 %v2159, %v2167
    %v2169 = vadd.f32 %v1729, %v2168
    %v2170 = vtanh.pop %v2169
    %v2171 = vsub.f32 %v1705, %v2170
    %v2172 = vmul.f32 %v2166, %v2171
    %v2173 = vadd.f32 %v2170, %v2172
    %v2174 = vadd.f32 %v1938, %v2079
    %v2175 = vxor.u32 %v2174, 2147483648
    %v2176 = vmul.f32 %v2175, 1.442695
    %v2177 = vpow.pop %v2176
    %v2178 = vadd.f32 %v2177, 1.0
    %v2179 = vrcp.pop %v2178
    %v2180 = vmul.f32 1.0, %v2179
    %v2181 = vadd.f32 %v1940, %v2081
    %v2182 = vxor.u32 %v2181, 2147483648
    %v2183 = vmul.f32 %v2182, 1.442695
    %v2184 = vpow.pop %v2183
    %v2185 = vadd.f32 %v2184, 1.0
    %v2186 = vrcp.pop %v2185
    %v2187 = vmul.f32 1.0, %v2186
    %v2188 = vadd.f32 %v2150, %v480
    %v2189 = vmul.f32 %v2180, %v2188
    %v2190 = vadd.f32 %v2009, %v2189
    %v2191 = vtanh.pop %v2190
    %v2192 = vsub.f32 %v1726, %v2191
    %v2193 = vmul.f32 %v2187, %v2192
    %v2194 = vadd.f32 %v2191, %v2193
    %v2195 = vld [vmem:[#allocation2 + $0x60] sm:$0xff]
    %v2196 = vld [vmem:[#allocation2 + $0x68] sm:$0xff]
    %v2197 = vld [vmem:[#allocation2 + $0x70] sm:$0xff]
    %2198 = vmatprep.subr.mxu0 %v531
    %2199 = vmatpush1.msra.mxu0 %v530
    %2200 = vmatprep.subr.mxu0 %v528
    %2201 = vmatpush1.msra.mxu0 %v527
    %2202 = vmatprep.subr.mxu0 %v525
    %2203 = vmatpush1.msra.mxu0 %v524
    %2204 = vmatprep.subr.mxu0 %v522
    %2205 = vmatpush1.msra.mxu0 %v521
    %2206 = vmatprep.subr.mxu0 %v519
    %2207 = vmatpush1.msra.mxu0 %v518
    %2208 = vmatprep.subr.mxu0 %v516
    %2209 = vmatpush1.msra.mxu0 %v515
    %2210 = vmatprep.subr.mxu0 %v513
    %2211 = vmatpush1.msra.mxu0 %v512
    %2212 = vmatprep.subr.mxu0 %v510
    %2213 = vmatpush1.msra.mxu0 %v509
    %2214 = vmatprep.subr.mxu0 %v507
    %2215 = vmatpush1.msra.mxu0 %v506
    %2216 = vmatprep.subr.mxu0 %v504
    %2217 = vmatpush1.msra.mxu0 %v503
    %2218 = vmatprep.subr.mxu0 %v501
    %2219 = vmatpush1.msra.mxu0 %v500
    %2220 = vmatprep.subr.mxu0 %v498
    %2221 = vmatpush1.msra.mxu0 %v497
    %2222 = vmatprep.subr.mxu0 %v495
    %2223 = vmatpush1.msra.mxu0 %v494
    %2224 = vmatprep.subr.mxu0 %v492
    %2225 = vmatpush1.msra.mxu0 %v491
    %2226 = vmatprep.subr.mxu0 %v489
    %2227 = vmatpush1.msra.mxu0 %v488
    %2228 = vmatprep.subr.mxu0 %v486
    %2229 = vmatpush1.msra.mxu0 %v485
    %2230 = vmatprep.subr.mxu0 0.0
    %2231 = vmatpush2.msra.mxu0 0.0
    %2232 = vmatprep.subr.mxu0 0.0
    %2233 = vmatpush2.msra.mxu0 0.0
    %2234 = vmatprep.subr.mxu0 0.0
    %2235 = vmatpush2.msra.mxu0 0.0
    %2236 = vmatprep.subr.mxu0 0.0
    %2237 = vmatpush2.msra.mxu0 0.0
    %2238 = vmatprep.subr.mxu0 0.0
    %2239 = vmatpush2.msra.mxu0 0.0
    %2240 = vmatprep.subr.mxu0 0.0
    %2241 = vmatpush2.msra.mxu0 0.0
    %2242 = vmatprep.subr.mxu0 0.0
    %2243 = vmatpush2.msra.mxu0 0.0
    %2244 = vmatprep.subr.mxu0 0.0
    %2245 = vmatpush2.msra.mxu0 0.0
    %2246 = vmatprep.subr.mxu0 0.0
    %2247 = vmatpush2.msra.mxu0 0.0
    %2248 = vmatprep.subr.mxu0 0.0
    %2249 = vmatpush2.msra.mxu0 0.0
    %2250 = vmatprep.subr.mxu0 0.0
    %2251 = vmatpush2.msra.mxu0 0.0
    %2252 = vmatprep.subr.mxu0 0.0
    %2253 = vmatpush2.msra.mxu0 0.0
    %2254 = vmatprep.subr.mxu0 0.0
    %2255 = vmatpush2.msra.mxu0 0.0
    %2256 = vmatprep.subr.mxu0 0.0
    %2257 = vmatpush2.msra.mxu0 0.0
    %2258 = vmatprep.subr.mxu0 0.0
    %2259 = vmatpush2.msra.mxu0 0.0
    %2260 = vmatprep.subr.mxu0 0.0
    %2261 = vmatpush2.msra.mxu0 0.0
    %2262 = vmatprep.mubr.f32.mxu0 0.0
    %2263 = vmatmul.mubr.f32.gmra.mxu0 %v2173
    %v2264 = vpop.f32.mrf.mxu0
    %v2265 = vadd.f32 0.0, %v2264
    %v2266 = vpop.f32.mrf.mxu0
    %v2267 = vadd.f32 0.0, %v2266
    %2268 = vdwg.mxu0
    %2269 = vmatprep.subr.mxu0 0.0
    %2270 = vmatpush1.msra.mxu0 %v532
    %2271 = vmatprep.subr.mxu0 0.0
    %2272 = vmatpush1.msra.mxu0 %v529
    %2273 = vmatprep.subr.mxu0 0.0
    %2274 = vmatpush1.msra.mxu0 %v526
    %2275 = vmatprep.subr.mxu0 0.0
    %2276 = vmatpush1.msra.mxu0 %v523
    %2277 = vmatprep.subr.mxu0 0.0
    %2278 = vmatpush1.msra.mxu0 %v520
    %2279 = vmatprep.subr.mxu0 0.0
    %2280 = vmatpush1.msra.mxu0 %v517
    %2281 = vmatprep.subr.mxu0 0.0
    %2282 = vmatpush1.msra.mxu0 %v514
    %2283 = vmatprep.subr.mxu0 0.0
    %2284 = vmatpush1.msra.mxu0 %v511
    %2285 = vmatprep.subr.mxu0 0.0
    %2286 = vmatpush1.msra.mxu0 %v508
    %2287 = vmatprep.subr.mxu0 0.0
    %2288 = vmatpush1.msra.mxu0 %v505
    %2289 = vmatprep.subr.mxu0 0.0
    %2290 = vmatpush1.msra.mxu0 %v502
    %2291 = vmatprep.subr.mxu0 0.0
    %2292 = vmatpush1.msra.mxu0 %v499
    %2293 = vmatprep.subr.mxu0 0.0
    %2294 = vmatpush1.msra.mxu0 %v496
    %2295 = vmatprep.subr.mxu0 0.0
    %2296 = vmatpush1.msra.mxu0 %v493
    %2297 = vmatprep.subr.mxu0 0.0
    %2298 = vmatpush1.msra.mxu0 %v490
    %2299 = vmatprep.subr.mxu0 0.0
    %2300 = vmatpush1.msra.mxu0 %v487
    %2301 = vmatprep.subr.mxu0 0.0
    %2302 = vmatpush2.msra.mxu0 0.0
    %2303 = vmatprep.subr.mxu0 0.0
    %2304 = vmatpush2.msra.mxu0 0.0
    %2305 = vmatprep.subr.mxu0 0.0
    %2306 = vmatpush2.msra.mxu0 0.0
    %2307 = vmatprep.subr.mxu0 0.0
    %2308 = vmatpush2.msra.mxu0 0.0
    %2309 = vmatprep.subr.mxu0 0.0
    %2310 = vmatpush2.msra.mxu0 0.0
    %2311 = vmatprep.subr.mxu0 0.0
    %2312 = vmatpush2.msra.mxu0 0.0
    %2313 = vmatprep.subr.mxu0 0.0
    %2314 = vmatpush2.msra.mxu0 0.0
    %2315 = vmatprep.subr.mxu0 0.0
    %2316 = vmatpush2.msra.mxu0 0.0
    %2317 = vmatprep.subr.mxu0 0.0
    %2318 = vmatpush2.msra.mxu0 0.0
    %2319 = vmatprep.subr.mxu0 0.0
    %2320 = vmatpush2.msra.mxu0 0.0
    %2321 = vmatprep.subr.mxu0 0.0
    %2322 = vmatpush2.msra.mxu0 0.0
    %2323 = vmatprep.subr.mxu0 0.0
    %2324 = vmatpush2.msra.mxu0 0.0
    %2325 = vmatprep.subr.mxu0 0.0
    %2326 = vmatpush2.msra.mxu0 0.0
    %2327 = vmatprep.subr.mxu0 0.0
    %2328 = vmatpush2.msra.mxu0 0.0
    %2329 = vmatprep.subr.mxu0 0.0
    %2330 = vmatpush2.msra.mxu0 0.0
    %2331 = vmatprep.subr.mxu0 0.0
    %2332 = vmatpush2.msra.mxu0 0.0
    %2333 = vmatprep.mubr.f32.mxu0 0.0
    %2334 = vmatmul.mubr.f32.gmra.mxu0 %v2173
    %v2335 = vpop.f32.mrf.mxu0
    %v2336 = vadd.f32 0.0, %v2335
    %v2337 = vpop.f32.mrf.mxu0
    %2338 = vdwg.mxu0
    %2339 = vmatprep.subr.mxu0 %v885
    %2340 = vmatpush1.msra.mxu0 %v884
    %2341 = vmatprep.subr.mxu0 %v882
    %2342 = vmatpush1.msra.mxu0 %v881
    %2343 = vmatprep.subr.mxu0 %v879
    %2344 = vmatpush1.msra.mxu0 %v878
    %2345 = vmatprep.subr.mxu0 %v876
    %2346 = vmatpush1.msra.mxu0 %v875
    %2347 = vmatprep.subr.mxu0 %v873
    %2348 = vmatpush1.msra.mxu0 %v872
    %2349 = vmatprep.subr.mxu0 %v870
    %2350 = vmatpush1.msra.mxu0 %v869
    %2351 = vmatprep.subr.mxu0 %v867
    %2352 = vmatpush1.msra.mxu0 %v866
    %2353 = vmatprep.subr.mxu0 %v864
    %2354 = vmatpush1.msra.mxu0 %v863
    %2355 = vmatprep.subr.mxu0 %v861
    %2356 = vmatpush1.msra.mxu0 %v860
    %2357 = vmatprep.subr.mxu0 %v858
    %2358 = vmatpush1.msra.mxu0 %v857
    %2359 = vmatprep.subr.mxu0 %v855
    %2360 = vmatpush1.msra.mxu0 %v854
    %2361 = vmatprep.subr.mxu0 %v852
    %2362 = vmatpush1.msra.mxu0 %v851
    %2363 = vmatprep.subr.mxu0 %v849
    %2364 = vmatpush1.msra.mxu0 %v848
    %2365 = vmatprep.subr.mxu0 %v846
    %2366 = vmatpush1.msra.mxu0 %v845
    %2367 = vmatprep.subr.mxu0 %v843
    %2368 = vmatpush1.msra.mxu0 %v842
    %2369 = vmatprep.subr.mxu0 %v840
    %2370 = vmatpush1.msra.mxu0 %v839
    %2371 = vmatprep.subr.mxu0 0.0
    %2372 = vmatpush2.msra.mxu0 0.0
    %2373 = vmatprep.subr.mxu0 0.0
    %2374 = vmatpush2.msra.mxu0 0.0
    %2375 = vmatprep.subr.mxu0 0.0
    %2376 = vmatpush2.msra.mxu0 0.0
    %2377 = vmatprep.subr.mxu0 0.0
    %2378 = vmatpush2.msra.mxu0 0.0
    %2379 = vmatprep.subr.mxu0 0.0
    %2380 = vmatpush2.msra.mxu0 0.0
    %2381 = vmatprep.subr.mxu0 0.0
    %2382 = vmatpush2.msra.mxu0 0.0
    %2383 = vmatprep.subr.mxu0 0.0
    %2384 = vmatpush2.msra.mxu0 0.0
    %2385 = vmatprep.subr.mxu0 0.0
    %2386 = vmatpush2.msra.mxu0 0.0
    %2387 = vmatprep.subr.mxu0 0.0
    %2388 = vmatpush2.msra.mxu0 0.0
    %2389 = vmatprep.subr.mxu0 0.0
    %2390 = vmatpush2.msra.mxu0 0.0
    %2391 = vmatprep.subr.mxu0 0.0
    %2392 = vmatpush2.msra.mxu0 0.0
    %2393 = vmatprep.subr.mxu0 0.0
    %2394 = vmatpush2.msra.mxu0 0.0
    %2395 = vmatprep.subr.mxu0 0.0
    %2396 = vmatpush2.msra.mxu0 0.0
    %2397 = vmatprep.subr.mxu0 0.0
    %2398 = vmatpush2.msra.mxu0 0.0
    %2399 = vmatprep.subr.mxu0 0.0
    %2400 = vmatpush2.msra.mxu0 0.0
    %2401 = vmatprep.subr.mxu0 0.0
    %2402 = vmatpush2.msra.mxu0 0.0
    %2403 = vmatprep.mubr.f32.mxu0 0.0
    %2404 = vmatmul.mubr.f32.gmra.mxu0 %v2173
    %v2405 = vpop.f32.mrf.mxu0
    %v2406 = vadd.f32 %v456, %v2405
    %v2407 = vpop.f32.mrf.mxu0
    %v2408 = vadd.f32 %v460, %v2407
    %2409 = vdwg.mxu0
    %2410 = vmatprep.subr.mxu0 0.0
    %2411 = vmatpush1.msra.mxu0 %v886
    %2412 = vmatprep.subr.mxu0 0.0
    %2413 = vmatpush1.msra.mxu0 %v883
    %2414 = vmatprep.subr.mxu0 0.0
    %2415 = vmatpush1.msra.mxu0 %v880
    %2416 = vmatprep.subr.mxu0 0.0
    %2417 = vmatpush1.msra.mxu0 %v877
    %2418 = vmatprep.subr.mxu0 0.0
    %2419 = vmatpush1.msra.mxu0 %v874
    %2420 = vmatprep.subr.mxu0 0.0
    %2421 = vmatpush1.msra.mxu0 %v871
    %2422 = vmatprep.subr.mxu0 0.0
    %2423 = vmatpush1.msra.mxu0 %v868
    %2424 = vmatprep.subr.mxu0 0.0
    %2425 = vmatpush1.msra.mxu0 %v865
    %2426 = vmatprep.subr.mxu0 0.0
    %2427 = vmatpush1.msra.mxu0 %v862
    %2428 = vmatprep.subr.mxu0 0.0
    %2429 = vmatpush1.msra.mxu0 %v859
    %2430 = vmatprep.subr.mxu0 0.0
    %2431 = vmatpush1.msra.mxu0 %v856
    %2432 = vmatprep.subr.mxu0 0.0
    %2433 = vmatpush1.msra.mxu0 %v853
    %2434 = vmatprep.subr.mxu0 0.0
    %2435 = vmatpush1.msra.mxu0 %v850
    %2436 = vmatprep.subr.mxu0 0.0
    %2437 = vmatpush1.msra.mxu0 %v847
    %2438 = vmatprep.subr.mxu0 0.0
    %2439 = vmatpush1.msra.mxu0 %v844
    %2440 = vmatprep.subr.mxu0 0.0
    %2441 = vmatpush1.msra.mxu0 %v841
    %2442 = vmatprep.subr.mxu0 0.0
    %2443 = vmatpush2.msra.mxu0 0.0
    %2444 = vmatprep.subr.mxu0 0.0
    %2445 = vmatpush2.msra.mxu0 0.0
    %2446 = vmatprep.subr.mxu0 0.0
    %2447 = vmatpush2.msra.mxu0 0.0
    %2448 = vmatprep.subr.mxu0 0.0
    %2449 = vmatpush2.msra.mxu0 0.0
    %2450 = vmatprep.subr.mxu0 0.0
    %2451 = vmatpush2.msra.mxu0 0.0
    %2452 = vmatprep.subr.mxu0 0.0
    %2453 = vmatpush2.msra.mxu0 0.0
    %2454 = vmatprep.subr.mxu0 0.0
    %2455 = vmatpush2.msra.mxu0 0.0
    %2456 = vmatprep.subr.mxu0 0.0
    %2457 = vmatpush2.msra.mxu0 0.0
    %2458 = vmatprep.subr.mxu0 0.0
    %2459 = vmatpush2.msra.mxu0 0.0
    %2460 = vmatprep.subr.mxu0 0.0
    %2461 = vmatpush2.msra.mxu0 0.0
    %2462 = vmatprep.subr.mxu0 0.0
    %2463 = vmatpush2.msra.mxu0 0.0
    %2464 = vmatprep.subr.mxu0 0.0
    %2465 = vmatpush2.msra.mxu0 0.0
    %2466 = vmatprep.subr.mxu0 0.0
    %2467 = vmatpush2.msra.mxu0 0.0
    %2468 = vmatprep.subr.mxu0 0.0
    %2469 = vmatpush2.msra.mxu0 0.0
    %2470 = vmatprep.subr.mxu0 0.0
    %2471 = vmatpush2.msra.mxu0 0.0
    %2472 = vmatprep.subr.mxu0 0.0
    %2473 = vmatpush2.msra.mxu0 0.0
    %2474 = vmatprep.mubr.f32.mxu0 0.0
    %2475 = vmatmul.mubr.f32.gmra.mxu0 %v2173
    %v2476 = vpop.f32.mrf.mxu0
    %v2477 = vadd.f32 %v464, %v2476
    %v2478 = vpop.f32.mrf.mxu0
    %2479 = vdwg.mxu0
    %2480 = vmatprep.subr.mxu0 %v1074
    %2481 = vmatpush1.msra.mxu0 %v1073
    %2482 = vmatprep.subr.mxu0 %v1071
    %2483 = vmatpush1.msra.mxu0 %v1070
    %2484 = vmatprep.subr.mxu0 %v1068
    %2485 = vmatpush1.msra.mxu0 %v1067
    %2486 = vmatprep.subr.mxu0 %v1065
    %2487 = vmatpush1.msra.mxu0 %v1064
    %2488 = vmatprep.subr.mxu0 %v1062
    %2489 = vmatpush1.msra.mxu0 %v1061
    %2490 = vmatprep.subr.mxu0 %v1059
    %2491 = vmatpush1.msra.mxu0 %v1058
    %2492 = vmatprep.subr.mxu0 %v1056
    %2493 = vmatpush1.msra.mxu0 %v1055
    %2494 = vmatprep.subr.mxu0 %v1053
    %2495 = vmatpush1.msra.mxu0 %v1052
    %2496 = vmatprep.subr.mxu0 %v1050
    %2497 = vmatpush1.msra.mxu0 %v1049
    %2498 = vmatprep.subr.mxu0 %v1047
    %2499 = vmatpush1.msra.mxu0 %v1046
    %2500 = vmatprep.subr.mxu0 %v1044
    %2501 = vmatpush1.msra.mxu0 %v1043
    %2502 = vmatprep.subr.mxu0 %v1041
    %2503 = vmatpush1.msra.mxu0 %v1040
    %2504 = vmatprep.subr.mxu0 %v1038
    %2505 = vmatpush1.msra.mxu0 %v1037
    %2506 = vmatprep.subr.mxu0 %v1035
    %2507 = vmatpush1.msra.mxu0 %v1034
    %2508 = vmatprep.subr.mxu0 %v1032
    %2509 = vmatpush1.msra.mxu0 %v1031
    %2510 = vmatprep.subr.mxu0 %v1029
    %2511 = vmatpush1.msra.mxu0 %v1028
    %2512 = vmatprep.subr.mxu0 0.0
    %2513 = vmatpush2.msra.mxu0 0.0
    %2514 = vmatprep.subr.mxu0 0.0
    %2515 = vmatpush2.msra.mxu0 0.0
    %2516 = vmatprep.subr.mxu0 0.0
    %2517 = vmatpush2.msra.mxu0 0.0
    %2518 = vmatprep.subr.mxu0 0.0
    %2519 = vmatpush2.msra.mxu0 0.0
    %2520 = vmatprep.subr.mxu0 0.0
    %2521 = vmatpush2.msra.mxu0 0.0
    %2522 = vmatprep.subr.mxu0 0.0
    %2523 = vmatpush2.msra.mxu0 0.0
    %2524 = vmatprep.subr.mxu0 0.0
    %2525 = vmatpush2.msra.mxu0 0.0
    %2526 = vmatprep.subr.mxu0 0.0
    %2527 = vmatpush2.msra.mxu0 0.0
    %2528 = vmatprep.subr.mxu0 0.0
    %2529 = vmatpush2.msra.mxu0 0.0
    %2530 = vmatprep.subr.mxu0 0.0
    %2531 = vmatpush2.msra.mxu0 0.0
    %2532 = vmatprep.subr.mxu0 0.0
    %2533 = vmatpush2.msra.mxu0 0.0
    %2534 = vmatprep.subr.mxu0 0.0
    %2535 = vmatpush2.msra.mxu0 0.0
    %2536 = vmatprep.subr.mxu0 0.0
    %2537 = vmatpush2.msra.mxu0 0.0
    %2538 = vmatprep.subr.mxu0 0.0
    %2539 = vmatpush2.msra.mxu0 0.0
    %2540 = vmatprep.subr.mxu0 0.0
    %2541 = vmatpush2.msra.mxu0 0.0
    %2542 = vmatprep.subr.mxu0 0.0
    %2543 = vmatpush2.msra.mxu0 0.0
    %2544 = vmatprep.mubr.f32.mxu0 0.0
    %2545 = vmatmul.mubr.f32.gmra.mxu0 %v2194
    %v2546 = vpop.f32.mrf.mxu0
    %v2547 = vadd.f32 0.0, %v2546
    %v2548 = vpop.f32.mrf.mxu0
    %v2549 = vadd.f32 0.0, %v2548
    %2550 = vdwg.mxu0
    %2551 = vmatprep.subr.mxu0 0.0
    %2552 = vmatpush1.msra.mxu0 %v1075
    %2553 = vmatprep.subr.mxu0 0.0
    %2554 = vmatpush1.msra.mxu0 %v1072
    %2555 = vmatprep.subr.mxu0 0.0
    %2556 = vmatpush1.msra.mxu0 %v1069
    %2557 = vmatprep.subr.mxu0 0.0
    %2558 = vmatpush1.msra.mxu0 %v1066
    %2559 = vmatprep.subr.mxu0 0.0
    %2560 = vmatpush1.msra.mxu0 %v1063
    %2561 = vmatprep.subr.mxu0 0.0
    %2562 = vmatpush1.msra.mxu0 %v1060
    %2563 = vmatprep.subr.mxu0 0.0
    %2564 = vmatpush1.msra.mxu0 %v1057
    %2565 = vmatprep.subr.mxu0 0.0
    %2566 = vmatpush1.msra.mxu0 %v1054
    %2567 = vmatprep.subr.mxu0 0.0
    %2568 = vmatpush1.msra.mxu0 %v1051
    %2569 = vmatprep.subr.mxu0 0.0
    %2570 = vmatpush1.msra.mxu0 %v1048
    %2571 = vmatprep.subr.mxu0 0.0
    %2572 = vmatpush1.msra.mxu0 %v1045
    %2573 = vmatprep.subr.mxu0 0.0
    %2574 = vmatpush1.msra.mxu0 %v1042
    %2575 = vmatprep.subr.mxu0 0.0
    %2576 = vmatpush1.msra.mxu0 %v1039
    %2577 = vmatprep.subr.mxu0 0.0
    %2578 = vmatpush1.msra.mxu0 %v1036
    %2579 = vmatprep.subr.mxu0 0.0
    %2580 = vmatpush1.msra.mxu0 %v1033
    %2581 = vmatprep.subr.mxu0 0.0
    %2582 = vmatpush1.msra.mxu0 %v1030
    %2583 = vmatprep.subr.mxu0 0.0
    %2584 = vmatpush2.msra.mxu0 0.0
    %2585 = vmatprep.subr.mxu0 0.0
    %2586 = vmatpush2.msra.mxu0 0.0
    %2587 = vmatprep.subr.mxu0 0.0
    %2588 = vmatpush2.msra.mxu0 0.0
    %2589 = vmatprep.subr.mxu0 0.0
    %2590 = vmatpush2.msra.mxu0 0.0
    %2591 = vmatprep.subr.mxu0 0.0
    %2592 = vmatpush2.msra.mxu0 0.0
    %2593 = vmatprep.subr.mxu0 0.0
    %2594 = vmatpush2.msra.mxu0 0.0
    %2595 = vmatprep.subr.mxu0 0.0
    %2596 = vmatpush2.msra.mxu0 0.0
    %2597 = vmatprep.subr.mxu0 0.0
    %2598 = vmatpush2.msra.mxu0 0.0
    %2599 = vmatprep.subr.mxu0 0.0
    %2600 = vmatpush2.msra.mxu0 0.0
    %2601 = vmatprep.subr.mxu0 0.0
    %2602 = vmatpush2.msra.mxu0 0.0
    %2603 = vmatprep.subr.mxu0 0.0
    %2604 = vmatpush2.msra.mxu0 0.0
    %2605 = vmatprep.subr.mxu0 0.0
    %2606 = vmatpush2.msra.mxu0 0.0
    %2607 = vmatprep.subr.mxu0 0.0
    %2608 = vmatpush2.msra.mxu0 0.0
    %2609 = vmatprep.subr.mxu0 0.0
    %2610 = vmatpush2.msra.mxu0 0.0
    %2611 = vmatprep.subr.mxu0 0.0
    %2612 = vmatpush2.msra.mxu0 0.0
    %2613 = vmatprep.subr.mxu0 0.0
    %2614 = vmatpush2.msra.mxu0 0.0
    %2615 = vmatprep.mubr.f32.mxu0 0.0
    %2616 = vmatmul.mubr.f32.gmra.mxu0 %v2194
    %v2617 = vpop.f32.mrf.mxu0
    %v2618 = vadd.f32 0.0, %v2617
    %v2619 = vpop.f32.mrf.mxu0
    %2620 = vdwg.mxu0
    %v2621 = vadd.f32 %v2195, %v2265
    %v2622 = vxor.u32 %v2621, 2147483648
    %v2623 = vmul.f32 %v2622, 1.442695
    %v2624 = vpow.pop %v2623
    %v2625 = vadd.f32 %v2624, 1.0
    %v2626 = vrcp.pop %v2625
    %v2627 = vmul.f32 1.0, %v2626
    %v2628 = vadd.f32 %v2196, %v2267
    %v2629 = vxor.u32 %v2628, 2147483648
    %v2630 = vmul.f32 %v2629, 1.442695
    %v2631 = vpow.pop %v2630
    %v2632 = vadd.f32 %v2631, 1.0
    %v2633 = vrcp.pop %v2632
    %v2634 = vmul.f32 1.0, %v2633
    %v2635 = vadd.f32 %v2336, %v473
    %v2636 = vmul.f32 %v2627, %v2635
    %v2637 = vadd.f32 %v2197, %v2636
    %v2638 = vtanh.pop %v2637
    %v2639 = vsub.f32 %v2173, %v2638
    %v2640 = vmul.f32 %v2634, %v2639
    %v2641 = vadd.f32 %v2638, %v2640
    %v2642 = vadd.f32 %v2406, %v2547
    %v2643 = vxor.u32 %v2642, 2147483648
    %v2644 = vmul.f32 %v2643, 1.442695
    %v2645 = vpow.pop %v2644
    %v2646 = vadd.f32 %v2645, 1.0
    %v2647 = vrcp.pop %v2646
    %v2648 = vmul.f32 1.0, %v2647
    %v2649 = vadd.f32 %v2408, %v2549
    %v2650 = vxor.u32 %v2649, 2147483648
    %v2651 = vmul.f32 %v2650, 1.442695
    %v2652 = vpow.pop %v2651
    %v2653 = vadd.f32 %v2652, 1.0
    %v2654 = vrcp.pop %v2653
    %v2655 = vmul.f32 1.0, %v2654
    %v2656 = vadd.f32 %v2618, %v480
    %v2657 = vmul.f32 %v2648, %v2656
    %v2658 = vadd.f32 %v2477, %v2657
    %v2659 = vtanh.pop %v2658
    %v2660 = vsub.f32 %v2194, %v2659
    %v2661 = vmul.f32 %v2655, %v2660
    %v2662 = vadd.f32 %v2659, %v2661
    %v2663 = vld [vmem:[#allocation2 + $0x78] sm:$0xff]
    %v2664 = vld [vmem:[#allocation2 + $0x80] sm:$0xff]
    %v2665 = vld [vmem:[#allocation2 + $0x88] sm:$0xff]
    %2666 = vmatprep.subr.mxu0 %v531
    %2667 = vmatpush1.msra.mxu0 %v530
    %2668 = vmatprep.subr.mxu0 %v528
    %2669 = vmatpush1.msra.mxu0 %v527
    %2670 = vmatprep.subr.mxu0 %v525
    %2671 = vmatpush1.msra.mxu0 %v524
    %2672 = vmatprep.subr.mxu0 %v522
    %2673 = vmatpush1.msra.mxu0 %v521
    %2674 = vmatprep.subr.mxu0 %v519
    %2675 = vmatpush1.msra.mxu0 %v518
    %2676 = vmatprep.subr.mxu0 %v516
    %2677 = vmatpush1.msra.mxu0 %v515
    %2678 = vmatprep.subr.mxu0 %v513
    %2679 = vmatpush1.msra.mxu0 %v512
    %2680 = vmatprep.subr.mxu0 %v510
    %2681 = vmatpush1.msra.mxu0 %v509
    %2682 = vmatprep.subr.mxu0 %v507
    %2683 = vmatpush1.msra.mxu0 %v506
    %2684 = vmatprep.subr.mxu0 %v504
    %2685 = vmatpush1.msra.mxu0 %v503
    %2686 = vmatprep.subr.mxu0 %v501
    %2687 = vmatpush1.msra.mxu0 %v500
    %2688 = vmatprep.subr.mxu0 %v498
    %2689 = vmatpush1.msra.mxu0 %v497
    %2690 = vmatprep.subr.mxu0 %v495
    %2691 = vmatpush1.msra.mxu0 %v494
    %2692 = vmatprep.subr.mxu0 %v492
    %2693 = vmatpush1.msra.mxu0 %v491
    %2694 = vmatprep.subr.mxu0 %v489
    %2695 = vmatpush1.msra.mxu0 %v488
    %2696 = vmatprep.subr.mxu0 %v486
    %2697 = vmatpush1.msra.mxu0 %v485
    %2698 = vmatprep.subr.mxu0 0.0
    %2699 = vmatpush2.msra.mxu0 0.0
    %2700 = vmatprep.subr.mxu0 0.0
    %2701 = vmatpush2.msra.mxu0 0.0
    %2702 = vmatprep.subr.mxu0 0.0
    %2703 = vmatpush2.msra.mxu0 0.0
    %2704 = vmatprep.subr.mxu0 0.0
    %2705 = vmatpush2.msra.mxu0 0.0
    %2706 = vmatprep.subr.mxu0 0.0
    %2707 = vmatpush2.msra.mxu0 0.0
    %2708 = vmatprep.subr.mxu0 0.0
    %2709 = vmatpush2.msra.mxu0 0.0
    %2710 = vmatprep.subr.mxu0 0.0
    %2711 = vmatpush2.msra.mxu0 0.0
    %2712 = vmatprep.subr.mxu0 0.0
    %2713 = vmatpush2.msra.mxu0 0.0
    %2714 = vmatprep.subr.mxu0 0.0
    %2715 = vmatpush2.msra.mxu0 0.0
    %2716 = vmatprep.subr.mxu0 0.0
    %2717 = vmatpush2.msra.mxu0 0.0
    %2718 = vmatprep.subr.mxu0 0.0
    %2719 = vmatpush2.msra.mxu0 0.0
    %2720 = vmatprep.subr.mxu0 0.0
    %2721 = vmatpush2.msra.mxu0 0.0
    %2722 = vmatprep.subr.mxu0 0.0
    %2723 = vmatpush2.msra.mxu0 0.0
    %2724 = vmatprep.subr.mxu0 0.0
    %2725 = vmatpush2.msra.mxu0 0.0
    %2726 = vmatprep.subr.mxu0 0.0
    %2727 = vmatpush2.msra.mxu0 0.0
    %2728 = vmatprep.subr.mxu0 0.0
    %2729 = vmatpush2.msra.mxu0 0.0
    %2730 = vmatprep.mubr.f32.mxu0 0.0
    %2731 = vmatmul.mubr.f32.gmra.mxu0 %v2641
    %v2732 = vpop.f32.mrf.mxu0
    %v2733 = vadd.f32 0.0, %v2732
    %v2734 = vpop.f32.mrf.mxu0
    %v2735 = vadd.f32 0.0, %v2734
    %2736 = vdwg.mxu0
    %2737 = vmatprep.subr.mxu0 0.0
    %2738 = vmatpush1.msra.mxu0 %v532
    %2739 = vmatprep.subr.mxu0 0.0
    %2740 = vmatpush1.msra.mxu0 %v529
    %2741 = vmatprep.subr.mxu0 0.0
    %2742 = vmatpush1.msra.mxu0 %v526
    %2743 = vmatprep.subr.mxu0 0.0
    %2744 = vmatpush1.msra.mxu0 %v523
    %2745 = vmatprep.subr.mxu0 0.0
    %2746 = vmatpush1.msra.mxu0 %v520
    %2747 = vmatprep.subr.mxu0 0.0
    %2748 = vmatpush1.msra.mxu0 %v517
    %2749 = vmatprep.subr.mxu0 0.0
    %2750 = vmatpush1.msra.mxu0 %v514
    %2751 = vmatprep.subr.mxu0 0.0
    %2752 = vmatpush1.msra.mxu0 %v511
    %2753 = vmatprep.subr.mxu0 0.0
    %2754 = vmatpush1.msra.mxu0 %v508
    %2755 = vmatprep.subr.mxu0 0.0
    %2756 = vmatpush1.msra.mxu0 %v505
    %2757 = vmatprep.subr.mxu0 0.0
    %2758 = vmatpush1.msra.mxu0 %v502
    %2759 = vmatprep.subr.mxu0 0.0
    %2760 = vmatpush1.msra.mxu0 %v499
    %2761 = vmatprep.subr.mxu0 0.0
    %2762 = vmatpush1.msra.mxu0 %v496
    %2763 = vmatprep.subr.mxu0 0.0
    %2764 = vmatpush1.msra.mxu0 %v493
    %2765 = vmatprep.subr.mxu0 0.0
    %2766 = vmatpush1.msra.mxu0 %v490
    %2767 = vmatprep.subr.mxu0 0.0
    %2768 = vmatpush1.msra.mxu0 %v487
    %2769 = vmatprep.subr.mxu0 0.0
    %2770 = vmatpush2.msra.mxu0 0.0
    %2771 = vmatprep.subr.mxu0 0.0
    %2772 = vmatpush2.msra.mxu0 0.0
    %2773 = vmatprep.subr.mxu0 0.0
    %2774 = vmatpush2.msra.mxu0 0.0
    %2775 = vmatprep.subr.mxu0 0.0
    %2776 = vmatpush2.msra.mxu0 0.0
    %2777 = vmatprep.subr.mxu0 0.0
    %2778 = vmatpush2.msra.mxu0 0.0
    %2779 = vmatprep.subr.mxu0 0.0
    %2780 = vmatpush2.msra.mxu0 0.0
    %2781 = vmatprep.subr.mxu0 0.0
    %2782 = vmatpush2.msra.mxu0 0.0
    %2783 = vmatprep.subr.mxu0 0.0
    %2784 = vmatpush2.msra.mxu0 0.0
    %2785 = vmatprep.subr.mxu0 0.0
    %2786 = vmatpush2.msra.mxu0 0.0
    %2787 = vmatprep.subr.mxu0 0.0
    %2788 = vmatpush2.msra.mxu0 0.0
    %2789 = vmatprep.subr.mxu0 0.0
    %2790 = vmatpush2.msra.mxu0 0.0
    %2791 = vmatprep.subr.mxu0 0.0
    %2792 = vmatpush2.msra.mxu0 0.0
    %2793 = vmatprep.subr.mxu0 0.0
    %2794 = vmatpush2.msra.mxu0 0.0
    %2795 = vmatprep.subr.mxu0 0.0
    %2796 = vmatpush2.msra.mxu0 0.0
    %2797 = vmatprep.subr.mxu0 0.0
    %2798 = vmatpush2.msra.mxu0 0.0
    %2799 = vmatprep.subr.mxu0 0.0
    %2800 = vmatpush2.msra.mxu0 0.0
    %2801 = vmatprep.mubr.f32.mxu0 0.0
    %2802 = vmatmul.mubr.f32.gmra.mxu0 %v2641
    %v2803 = vpop.f32.mrf.mxu0
    %v2804 = vadd.f32 0.0, %v2803
    %v2805 = vpop.f32.mrf.mxu0
    %2806 = vdwg.mxu0
    %2807 = vmatprep.subr.mxu0 %v885
    %2808 = vmatpush1.msra.mxu0 %v884
    %2809 = vmatprep.subr.mxu0 %v882
    %2810 = vmatpush1.msra.mxu0 %v881
    %2811 = vmatprep.subr.mxu0 %v879
    %2812 = vmatpush1.msra.mxu0 %v878
    %2813 = vmatprep.subr.mxu0 %v876
    %2814 = vmatpush1.msra.mxu0 %v875
    %2815 = vmatprep.subr.mxu0 %v873
    %2816 = vmatpush1.msra.mxu0 %v872
    %2817 = vmatprep.subr.mxu0 %v870
    %2818 = vmatpush1.msra.mxu0 %v869
    %2819 = vmatprep.subr.mxu0 %v867
    %2820 = vmatpush1.msra.mxu0 %v866
    %2821 = vmatprep.subr.mxu0 %v864
    %2822 = vmatpush1.msra.mxu0 %v863
    %2823 = vmatprep.subr.mxu0 %v861
    %2824 = vmatpush1.msra.mxu0 %v860
    %2825 = vmatprep.subr.mxu0 %v858
    %2826 = vmatpush1.msra.mxu0 %v857
    %2827 = vmatprep.subr.mxu0 %v855
    %2828 = vmatpush1.msra.mxu0 %v854
    %2829 = vmatprep.subr.mxu0 %v852
    %2830 = vmatpush1.msra.mxu0 %v851
    %2831 = vmatprep.subr.mxu0 %v849
    %2832 = vmatpush1.msra.mxu0 %v848
    %2833 = vmatprep.subr.mxu0 %v846
    %2834 = vmatpush1.msra.mxu0 %v845
    %2835 = vmatprep.subr.mxu0 %v843
    %2836 = vmatpush1.msra.mxu0 %v842
    %2837 = vmatprep.subr.mxu0 %v840
    %2838 = vmatpush1.msra.mxu0 %v839
    %2839 = vmatprep.subr.mxu0 0.0
    %2840 = vmatpush2.msra.mxu0 0.0
    %2841 = vmatprep.subr.mxu0 0.0
    %2842 = vmatpush2.msra.mxu0 0.0
    %2843 = vmatprep.subr.mxu0 0.0
    %2844 = vmatpush2.msra.mxu0 0.0
    %2845 = vmatprep.subr.mxu0 0.0
    %2846 = vmatpush2.msra.mxu0 0.0
    %2847 = vmatprep.subr.mxu0 0.0
    %2848 = vmatpush2.msra.mxu0 0.0
    %2849 = vmatprep.subr.mxu0 0.0
    %2850 = vmatpush2.msra.mxu0 0.0
    %2851 = vmatprep.subr.mxu0 0.0
    %2852 = vmatpush2.msra.mxu0 0.0
    %2853 = vmatprep.subr.mxu0 0.0
    %2854 = vmatpush2.msra.mxu0 0.0
    %2855 = vmatprep.subr.mxu0 0.0
    %2856 = vmatpush2.msra.mxu0 0.0
    %2857 = vmatprep.subr.mxu0 0.0
    %2858 = vmatpush2.msra.mxu0 0.0
    %2859 = vmatprep.subr.mxu0 0.0
    %2860 = vmatpush2.msra.mxu0 0.0
    %2861 = vmatprep.subr.mxu0 0.0
    %2862 = vmatpush2.msra.mxu0 0.0
    %2863 = vmatprep.subr.mxu0 0.0
    %2864 = vmatpush2.msra.mxu0 0.0
    %2865 = vmatprep.subr.mxu0 0.0
    %2866 = vmatpush2.msra.mxu0 0.0
    %2867 = vmatprep.subr.mxu0 0.0
    %2868 = vmatpush2.msra.mxu0 0.0
    %2869 = vmatprep.subr.mxu0 0.0
    %2870 = vmatpush2.msra.mxu0 0.0
    %2871 = vmatprep.mubr.f32.mxu0 0.0
    %2872 = vmatmul.mubr.f32.gmra.mxu0 %v2641
    %v2873 = vpop.f32.mrf.mxu0
    %v2874 = vadd.f32 %v456, %v2873
    %v2875 = vpop.f32.mrf.mxu0
    %v2876 = vadd.f32 %v460, %v2875
    %2877 = vdwg.mxu0
    %2878 = vmatprep.subr.mxu0 0.0
    %2879 = vmatpush1.msra.mxu0 %v886
    %2880 = vmatprep.subr.mxu0 0.0
    %2881 = vmatpush1.msra.mxu0 %v883
    %2882 = vmatprep.subr.mxu0 0.0
    %2883 = vmatpush1.msra.mxu0 %v880
    %2884 = vmatprep.subr.mxu0 0.0
    %2885 = vmatpush1.msra.mxu0 %v877
    %2886 = vmatprep.subr.mxu0 0.0
    %2887 = vmatpush1.msra.mxu0 %v874
    %2888 = vmatprep.subr.mxu0 0.0
    %2889 = vmatpush1.msra.mxu0 %v871
    %2890 = vmatprep.subr.mxu0 0.0
    %2891 = vmatpush1.msra.mxu0 %v868
    %2892 = vmatprep.subr.mxu0 0.0
    %2893 = vmatpush1.msra.mxu0 %v865
    %2894 = vmatprep.subr.mxu0 0.0
    %2895 = vmatpush1.msra.mxu0 %v862
    %2896 = vmatprep.subr.mxu0 0.0
    %2897 = vmatpush1.msra.mxu0 %v859
    %2898 = vmatprep.subr.mxu0 0.0
    %2899 = vmatpush1.msra.mxu0 %v856
    %2900 = vmatprep.subr.mxu0 0.0
    %2901 = vmatpush1.msra.mxu0 %v853
    %2902 = vmatprep.subr.mxu0 0.0
    %2903 = vmatpush1.msra.mxu0 %v850
    %2904 = vmatprep.subr.mxu0 0.0
    %2905 = vmatpush1.msra.mxu0 %v847
    %2906 = vmatprep.subr.mxu0 0.0
    %2907 = vmatpush1.msra.mxu0 %v844
    %2908 = vmatprep.subr.mxu0 0.0
    %2909 = vmatpush1.msra.mxu0 %v841
    %2910 = vmatprep.subr.mxu0 0.0
    %2911 = vmatpush2.msra.mxu0 0.0
    %2912 = vmatprep.subr.mxu0 0.0
    %2913 = vmatpush2.msra.mxu0 0.0
    %2914 = vmatprep.subr.mxu0 0.0
    %2915 = vmatpush2.msra.mxu0 0.0
    %2916 = vmatprep.subr.mxu0 0.0
    %2917 = vmatpush2.msra.mxu0 0.0
    %2918 = vmatprep.subr.mxu0 0.0
    %2919 = vmatpush2.msra.mxu0 0.0
    %2920 = vmatprep.subr.mxu0 0.0
    %2921 = vmatpush2.msra.mxu0 0.0
    %2922 = vmatprep.subr.mxu0 0.0
    %2923 = vmatpush2.msra.mxu0 0.0
    %2924 = vmatprep.subr.mxu0 0.0
    %2925 = vmatpush2.msra.mxu0 0.0
    %2926 = vmatprep.subr.mxu0 0.0
    %2927 = vmatpush2.msra.mxu0 0.0
    %2928 = vmatprep.subr.mxu0 0.0
    %2929 = vmatpush2.msra.mxu0 0.0
    %2930 = vmatprep.subr.mxu0 0.0
    %2931 = vmatpush2.msra.mxu0 0.0
    %2932 = vmatprep.subr.mxu0 0.0
    %2933 = vmatpush2.msra.mxu0 0.0
    %2934 = vmatprep.subr.mxu0 0.0
    %2935 = vmatpush2.msra.mxu0 0.0
    %2936 = vmatprep.subr.mxu0 0.0
    %2937 = vmatpush2.msra.mxu0 0.0
    %2938 = vmatprep.subr.mxu0 0.0
    %2939 = vmatpush2.msra.mxu0 0.0
    %2940 = vmatprep.subr.mxu0 0.0
    %2941 = vmatpush2.msra.mxu0 0.0
    %2942 = vmatprep.mubr.f32.mxu0 0.0
    %2943 = vmatmul.mubr.f32.gmra.mxu0 %v2641
    %v2944 = vpop.f32.mrf.mxu0
    %v2945 = vadd.f32 %v464, %v2944
    %v2946 = vpop.f32.mrf.mxu0
    %2947 = vdwg.mxu0
    %2948 = vmatprep.subr.mxu0 %v1074
    %2949 = vmatpush1.msra.mxu0 %v1073
    %2950 = vmatprep.subr.mxu0 %v1071
    %2951 = vmatpush1.msra.mxu0 %v1070
    %2952 = vmatprep.subr.mxu0 %v1068
    %2953 = vmatpush1.msra.mxu0 %v1067
    %2954 = vmatprep.subr.mxu0 %v1065
    %2955 = vmatpush1.msra.mxu0 %v1064
    %2956 = vmatprep.subr.mxu0 %v1062
    %2957 = vmatpush1.msra.mxu0 %v1061
    %2958 = vmatprep.subr.mxu0 %v1059
    %2959 = vmatpush1.msra.mxu0 %v1058
    %2960 = vmatprep.subr.mxu0 %v1056
    %2961 = vmatpush1.msra.mxu0 %v1055
    %2962 = vmatprep.subr.mxu0 %v1053
    %2963 = vmatpush1.msra.mxu0 %v1052
    %2964 = vmatprep.subr.mxu0 %v1050
    %2965 = vmatpush1.msra.mxu0 %v1049
    %2966 = vmatprep.subr.mxu0 %v1047
    %2967 = vmatpush1.msra.mxu0 %v1046
    %2968 = vmatprep.subr.mxu0 %v1044
    %2969 = vmatpush1.msra.mxu0 %v1043
    %2970 = vmatprep.subr.mxu0 %v1041
    %2971 = vmatpush1.msra.mxu0 %v1040
    %2972 = vmatprep.subr.mxu0 %v1038
    %2973 = vmatpush1.msra.mxu0 %v1037
    %2974 = vmatprep.subr.mxu0 %v1035
    %2975 = vmatpush1.msra.mxu0 %v1034
    %2976 = vmatprep.subr.mxu0 %v1032
    %2977 = vmatpush1.msra.mxu0 %v1031
    %2978 = vmatprep.subr.mxu0 %v1029
    %2979 = vmatpush1.msra.mxu0 %v1028
    %2980 = vmatprep.subr.mxu0 0.0
    %2981 = vmatpush2.msra.mxu0 0.0
    %2982 = vmatprep.subr.mxu0 0.0
    %2983 = vmatpush2.msra.mxu0 0.0
    %2984 = vmatprep.subr.mxu0 0.0
    %2985 = vmatpush2.msra.mxu0 0.0
    %2986 = vmatprep.subr.mxu0 0.0
    %2987 = vmatpush2.msra.mxu0 0.0
    %2988 = vmatprep.subr.mxu0 0.0
    %2989 = vmatpush2.msra.mxu0 0.0
    %2990 = vmatprep.subr.mxu0 0.0
    %2991 = vmatpush2.msra.mxu0 0.0
    %2992 = vmatprep.subr.mxu0 0.0
    %2993 = vmatpush2.msra.mxu0 0.0
    %2994 = vmatprep.subr.mxu0 0.0
    %2995 = vmatpush2.msra.mxu0 0.0
    %2996 = vmatprep.subr.mxu0 0.0
    %2997 = vmatpush2.msra.mxu0 0.0
    %2998 = vmatprep.subr.mxu0 0.0
    %2999 = vmatpush2.msra.mxu0 0.0
    %3000 = vmatprep.subr.mxu0 0.0
    %3001 = vmatpush2.msra.mxu0 0.0
    %3002 = vmatprep.subr.mxu0 0.0
    %3003 = vmatpush2.msra.mxu0 0.0
    %3004 = vmatprep.subr.mxu0 0.0
    %3005 = vmatpush2.msra.mxu0 0.0
    %3006 = vmatprep.subr.mxu0 0.0
    %3007 = vmatpush2.msra.mxu0 0.0
    %3008 = vmatprep.subr.mxu0 0.0
    %3009 = vmatpush2.msra.mxu0 0.0
    %3010 = vmatprep.subr.mxu0 0.0
    %3011 = vmatpush2.msra.mxu0 0.0
    %3012 = vmatprep.mubr.f32.mxu0 0.0
    %3013 = vmatmul.mubr.f32.gmra.mxu0 %v2662
    %v3014 = vpop.f32.mrf.mxu0
    %v3015 = vadd.f32 0.0, %v3014
    %v3016 = vpop.f32.mrf.mxu0
    %v3017 = vadd.f32 0.0, %v3016
    %3018 = vdwg.mxu0
    %3019 = vmatprep.subr.mxu0 0.0
    %3020 = vmatpush1.msra.mxu0 %v1075
    %3021 = vmatprep.subr.mxu0 0.0
    %3022 = vmatpush1.msra.mxu0 %v1072
    %3023 = vmatprep.subr.mxu0 0.0
    %3024 = vmatpush1.msra.mxu0 %v1069
    %3025 = vmatprep.subr.mxu0 0.0
    %3026 = vmatpush1.msra.mxu0 %v1066
    %3027 = vmatprep.subr.mxu0 0.0
    %3028 = vmatpush1.msra.mxu0 %v1063
    %3029 = vmatprep.subr.mxu0 0.0
    %3030 = vmatpush1.msra.mxu0 %v1060
    %3031 = vmatprep.subr.mxu0 0.0
    %3032 = vmatpush1.msra.mxu0 %v1057
    %3033 = vmatprep.subr.mxu0 0.0
    %3034 = vmatpush1.msra.mxu0 %v1054
    %3035 = vmatprep.subr.mxu0 0.0
    %3036 = vmatpush1.msra.mxu0 %v1051
    %3037 = vmatprep.subr.mxu0 0.0
    %3038 = vmatpush1.msra.mxu0 %v1048
    %3039 = vmatprep.subr.mxu0 0.0
    %3040 = vmatpush1.msra.mxu0 %v1045
    %3041 = vmatprep.subr.mxu0 0.0
    %3042 = vmatpush1.msra.mxu0 %v1042
    %3043 = vmatprep.subr.mxu0 0.0
    %3044 = vmatpush1.msra.mxu0 %v1039
    %3045 = vmatprep.subr.mxu0 0.0
    %3046 = vmatpush1.msra.mxu0 %v1036
    %3047 = vmatprep.subr.mxu0 0.0
    %3048 = vmatpush1.msra.mxu0 %v1033
    %3049 = vmatprep.subr.mxu0 0.0
    %3050 = vmatpush1.msra.mxu0 %v1030
    %3051 = vmatprep.subr.mxu0 0.0
    %3052 = vmatpush2.msra.mxu0 0.0
    %3053 = vmatprep.subr.mxu0 0.0
    %3054 = vmatpush2.msra.mxu0 0.0
    %3055 = vmatprep.subr.mxu0 0.0
    %3056 = vmatpush2.msra.mxu0 0.0
    %3057 = vmatprep.subr.mxu0 0.0
    %3058 = vmatpush2.msra.mxu0 0.0
    %3059 = vmatprep.subr.mxu0 0.0
    %3060 = vmatpush2.msra.mxu0 0.0
    %3061 = vmatprep.subr.mxu0 0.0
    %3062 = vmatpush2.msra.mxu0 0.0
    %3063 = vmatprep.subr.mxu0 0.0
    %3064 = vmatpush2.msra.mxu0 0.0
    %3065 = vmatprep.subr.mxu0 0.0
    %3066 = vmatpush2.msra.mxu0 0.0
    %3067 = vmatprep.subr.mxu0 0.0
    %3068 = vmatpush2.msra.mxu0 0.0
    %3069 = vmatprep.subr.mxu0 0.0
    %3070 = vmatpush2.msra.mxu0 0.0
    %3071 = vmatprep.subr.mxu0 0.0
    %3072 = vmatpush2.msra.mxu0 0.0
    %3073 = vmatprep.subr.mxu0 0.0
    %3074 = vmatpush2.msra.mxu0 0.0
    %3075 = vmatprep.subr.mxu0 0.0
    %3076 = vmatpush2.msra.mxu0 0.0
    %3077 = vmatprep.subr.mxu0 0.0
    %3078 = vmatpush2.msra.mxu0 0.0
    %3079 = vmatprep.subr.mxu0 0.0
    %3080 = vmatpush2.msra.mxu0 0.0
    %3081 = vmatprep.subr.mxu0 0.0
    %3082 = vmatpush2.msra.mxu0 0.0
    %3083 = vmatprep.mubr.f32.mxu0 0.0
    %3084 = vmatmul.mubr.f32.gmra.mxu0 %v2662
    %v3085 = vpop.f32.mrf.mxu0
    %v3086 = vadd.f32 0.0, %v3085
    %v3087 = vpop.f32.mrf.mxu0
    %3088 = vdwg.mxu0
    %v3089 = vadd.f32 %v2663, %v2733
    %v3090 = vxor.u32 %v3089, 2147483648
    %v3091 = vmul.f32 %v3090, 1.442695
    %v3092 = vpow.pop %v3091
    %v3093 = vadd.f32 %v3092, 1.0
    %v3094 = vrcp.pop %v3093
    %v3095 = vmul.f32 1.0, %v3094
    %v3096 = vadd.f32 %v2664, %v2735
    %v3097 = vxor.u32 %v3096, 2147483648
    %v3098 = vmul.f32 %v3097, 1.442695
    %v3099 = vpow.pop %v3098
    %v3100 = vadd.f32 %v3099, 1.0
    %v3101 = vrcp.pop %v3100
    %v3102 = vmul.f32 1.0, %v3101
    %v3103 = vadd.f32 %v2804, %v473
    %v3104 = vmul.f32 %v3095, %v3103
    %v3105 = vadd.f32 %v2665, %v3104
    %v3106 = vtanh.pop %v3105
    %v3107 = vsub.f32 %v2641, %v3106
    %v3108 = vmul.f32 %v3102, %v3107
    %v3109 = vadd.f32 %v3106, %v3108
    %v3110 = vadd.f32 %v2874, %v3015
    %v3111 = vxor.u32 %v3110, 2147483648
    %v3112 = vmul.f32 %v3111, 1.442695
    %v3113 = vpow.pop %v3112
    %v3114 = vadd.f32 %v3113, 1.0
    %v3115 = vrcp.pop %v3114
    %v3116 = vmul.f32 1.0, %v3115
    %v3117 = vadd.f32 %v2876, %v3017
    %v3118 = vxor.u32 %v3117, 2147483648
    %v3119 = vmul.f32 %v3118, 1.442695
    %v3120 = vpow.pop %v3119
    %v3121 = vadd.f32 %v3120, 1.0
    %v3122 = vrcp.pop %v3121
    %v3123 = vmul.f32 1.0, %v3122
    %v3124 = vadd.f32 %v3086, %v480
    %v3125 = vmul.f32 %v3116, %v3124
    %v3126 = vadd.f32 %v2945, %v3125
    %v3127 = vtanh.pop %v3126
    %v3128 = vsub.f32 %v2662, %v3127
    %v3129 = vmul.f32 %v3123, %v3128
    %v3130 = vadd.f32 %v3127, %v3129
    %v3131 = vld [vmem:[#allocation2 + $0x90] sm:$0xff]
    %v3132 = vld [vmem:[#allocation2 + $0x98] sm:$0xff]
    %v3133 = vld [vmem:[#allocation2 + $0xa0] sm:$0xff]
    %3134 = vmatprep.subr.mxu0 %v531
    %3135 = vmatpush1.msra.mxu0 %v530
    %3136 = vmatprep.subr.mxu0 %v528
    %3137 = vmatpush1.msra.mxu0 %v527
    %3138 = vmatprep.subr.mxu0 %v525
    %3139 = vmatpush1.msra.mxu0 %v524
    %3140 = vmatprep.subr.mxu0 %v522
    %3141 = vmatpush1.msra.mxu0 %v521
    %3142 = vmatprep.subr.mxu0 %v519
    %3143 = vmatpush1.msra.mxu0 %v518
    %3144 = vmatprep.subr.mxu0 %v516
    %3145 = vmatpush1.msra.mxu0 %v515
    %3146 = vmatprep.subr.mxu0 %v513
    %3147 = vmatpush1.msra.mxu0 %v512
    %3148 = vmatprep.subr.mxu0 %v510
    %3149 = vmatpush1.msra.mxu0 %v509
    %3150 = vmatprep.subr.mxu0 %v507
    %3151 = vmatpush1.msra.mxu0 %v506
    %3152 = vmatprep.subr.mxu0 %v504
    %3153 = vmatpush1.msra.mxu0 %v503
    %3154 = vmatprep.subr.mxu0 %v501
    %3155 = vmatpush1.msra.mxu0 %v500
    %3156 = vmatprep.subr.mxu0 %v498
    %3157 = vmatpush1.msra.mxu0 %v497
    %3158 = vmatprep.subr.mxu0 %v495
    %3159 = vmatpush1.msra.mxu0 %v494
    %3160 = vmatprep.subr.mxu0 %v492
    %3161 = vmatpush1.msra.mxu0 %v491
    %3162 = vmatprep.subr.mxu0 %v489
    %3163 = vmatpush1.msra.mxu0 %v488
    %3164 = vmatprep.subr.mxu0 %v486
    %3165 = vmatpush1.msra.mxu0 %v485
    %3166 = vmatprep.subr.mxu0 0.0
    %3167 = vmatpush2.msra.mxu0 0.0
    %3168 = vmatprep.subr.mxu0 0.0
    %3169 = vmatpush2.msra.mxu0 0.0
    %3170 = vmatprep.subr.mxu0 0.0
    %3171 = vmatpush2.msra.mxu0 0.0
    %3172 = vmatprep.subr.mxu0 0.0
    %3173 = vmatpush2.msra.mxu0 0.0
    %3174 = vmatprep.subr.mxu0 0.0
    %3175 = vmatpush2.msra.mxu0 0.0
    %3176 = vmatprep.subr.mxu0 0.0
    %3177 = vmatpush2.msra.mxu0 0.0
    %3178 = vmatprep.subr.mxu0 0.0
    %3179 = vmatpush2.msra.mxu0 0.0
    %3180 = vmatprep.subr.mxu0 0.0
    %3181 = vmatpush2.msra.mxu0 0.0
    %3182 = vmatprep.subr.mxu0 0.0
    %3183 = vmatpush2.msra.mxu0 0.0
    %3184 = vmatprep.subr.mxu0 0.0
    %3185 = vmatpush2.msra.mxu0 0.0
    %3186 = vmatprep.subr.mxu0 0.0
    %3187 = vmatpush2.msra.mxu0 0.0
    %3188 = vmatprep.subr.mxu0 0.0
    %3189 = vmatpush2.msra.mxu0 0.0
    %3190 = vmatprep.subr.mxu0 0.0
    %3191 = vmatpush2.msra.mxu0 0.0
    %3192 = vmatprep.subr.mxu0 0.0
    %3193 = vmatpush2.msra.mxu0 0.0
    %3194 = vmatprep.subr.mxu0 0.0
    %3195 = vmatpush2.msra.mxu0 0.0
    %3196 = vmatprep.subr.mxu0 0.0
    %3197 = vmatpush2.msra.mxu0 0.0
    %3198 = vmatprep.mubr.f32.mxu0 0.0
    %3199 = vmatmul.mubr.f32.gmra.mxu0 %v3109
    %v3200 = vpop.f32.mrf.mxu0
    %v3201 = vadd.f32 0.0, %v3200
    %v3202 = vpop.f32.mrf.mxu0
    %v3203 = vadd.f32 0.0, %v3202
    %3204 = vdwg.mxu0
    %3205 = vmatprep.subr.mxu0 0.0
    %3206 = vmatpush1.msra.mxu0 %v532
    %3207 = vmatprep.subr.mxu0 0.0
    %3208 = vmatpush1.msra.mxu0 %v529
    %3209 = vmatprep.subr.mxu0 0.0
    %3210 = vmatpush1.msra.mxu0 %v526
    %3211 = vmatprep.subr.mxu0 0.0
    %3212 = vmatpush1.msra.mxu0 %v523
    %3213 = vmatprep.subr.mxu0 0.0
    %3214 = vmatpush1.msra.mxu0 %v520
    %3215 = vmatprep.subr.mxu0 0.0
    %3216 = vmatpush1.msra.mxu0 %v517
    %3217 = vmatprep.subr.mxu0 0.0
    %3218 = vmatpush1.msra.mxu0 %v514
    %3219 = vmatprep.subr.mxu0 0.0
    %3220 = vmatpush1.msra.mxu0 %v511
    %3221 = vmatprep.subr.mxu0 0.0
    %3222 = vmatpush1.msra.mxu0 %v508
    %3223 = vmatprep.subr.mxu0 0.0
    %3224 = vmatpush1.msra.mxu0 %v505
    %3225 = vmatprep.subr.mxu0 0.0
    %3226 = vmatpush1.msra.mxu0 %v502
    %3227 = vmatprep.subr.mxu0 0.0
    %3228 = vmatpush1.msra.mxu0 %v499
    %3229 = vmatprep.subr.mxu0 0.0
    %3230 = vmatpush1.msra.mxu0 %v496
    %3231 = vmatprep.subr.mxu0 0.0
    %3232 = vmatpush1.msra.mxu0 %v493
    %3233 = vmatprep.subr.mxu0 0.0
    %3234 = vmatpush1.msra.mxu0 %v490
    %3235 = vmatprep.subr.mxu0 0.0
    %3236 = vmatpush1.msra.mxu0 %v487
    %3237 = vmatprep.subr.mxu0 0.0
    %3238 = vmatpush2.msra.mxu0 0.0
    %3239 = vmatprep.subr.mxu0 0.0
    %3240 = vmatpush2.msra.mxu0 0.0
    %3241 = vmatprep.subr.mxu0 0.0
    %3242 = vmatpush2.msra.mxu0 0.0
    %3243 = vmatprep.subr.mxu0 0.0
    %3244 = vmatpush2.msra.mxu0 0.0
    %3245 = vmatprep.subr.mxu0 0.0
    %3246 = vmatpush2.msra.mxu0 0.0
    %3247 = vmatprep.subr.mxu0 0.0
    %3248 = vmatpush2.msra.mxu0 0.0
    %3249 = vmatprep.subr.mxu0 0.0
    %3250 = vmatpush2.msra.mxu0 0.0
    %3251 = vmatprep.subr.mxu0 0.0
    %3252 = vmatpush2.msra.mxu0 0.0
    %3253 = vmatprep.subr.mxu0 0.0
    %3254 = vmatpush2.msra.mxu0 0.0
    %3255 = vmatprep.subr.mxu0 0.0
    %3256 = vmatpush2.msra.mxu0 0.0
    %3257 = vmatprep.subr.mxu0 0.0
    %3258 = vmatpush2.msra.mxu0 0.0
    %3259 = vmatprep.subr.mxu0 0.0
    %3260 = vmatpush2.msra.mxu0 0.0
    %3261 = vmatprep.subr.mxu0 0.0
    %3262 = vmatpush2.msra.mxu0 0.0
    %3263 = vmatprep.subr.mxu0 0.0
    %3264 = vmatpush2.msra.mxu0 0.0
    %3265 = vmatprep.subr.mxu0 0.0
    %3266 = vmatpush2.msra.mxu0 0.0
    %3267 = vmatprep.subr.mxu0 0.0
    %3268 = vmatpush2.msra.mxu0 0.0
    %3269 = vmatprep.mubr.f32.mxu0 0.0
    %3270 = vmatmul.mubr.f32.gmra.mxu0 %v3109
    %v3271 = vpop.f32.mrf.mxu0
    %v3272 = vadd.f32 0.0, %v3271
    %v3273 = vpop.f32.mrf.mxu0
    %3274 = vdwg.mxu0
    %3275 = vmatprep.subr.mxu0 %v885
    %3276 = vmatpush1.msra.mxu0 %v884
    %3277 = vmatprep.subr.mxu0 %v882
    %3278 = vmatpush1.msra.mxu0 %v881
    %3279 = vmatprep.subr.mxu0 %v879
    %3280 = vmatpush1.msra.mxu0 %v878
    %3281 = vmatprep.subr.mxu0 %v876
    %3282 = vmatpush1.msra.mxu0 %v875
    %3283 = vmatprep.subr.mxu0 %v873
    %3284 = vmatpush1.msra.mxu0 %v872
    %3285 = vmatprep.subr.mxu0 %v870
    %3286 = vmatpush1.msra.mxu0 %v869
    %3287 = vmatprep.subr.mxu0 %v867
    %3288 = vmatpush1.msra.mxu0 %v866
    %3289 = vmatprep.subr.mxu0 %v864
    %3290 = vmatpush1.msra.mxu0 %v863
    %3291 = vmatprep.subr.mxu0 %v861
    %3292 = vmatpush1.msra.mxu0 %v860
    %3293 = vmatprep.subr.mxu0 %v858
    %3294 = vmatpush1.msra.mxu0 %v857
    %3295 = vmatprep.subr.mxu0 %v855
    %3296 = vmatpush1.msra.mxu0 %v854
    %3297 = vmatprep.subr.mxu0 %v852
    %3298 = vmatpush1.msra.mxu0 %v851
    %3299 = vmatprep.subr.mxu0 %v849
    %3300 = vmatpush1.msra.mxu0 %v848
    %3301 = vmatprep.subr.mxu0 %v846
    %3302 = vmatpush1.msra.mxu0 %v845
    %3303 = vmatprep.subr.mxu0 %v843
    %3304 = vmatpush1.msra.mxu0 %v842
    %3305 = vmatprep.subr.mxu0 %v840
    %3306 = vmatpush1.msra.mxu0 %v839
    %3307 = vmatprep.subr.mxu0 0.0
    %3308 = vmatpush2.msra.mxu0 0.0
    %3309 = vmatprep.subr.mxu0 0.0
    %3310 = vmatpush2.msra.mxu0 0.0
    %3311 = vmatprep.subr.mxu0 0.0
    %3312 = vmatpush2.msra.mxu0 0.0
    %3313 = vmatprep.subr.mxu0 0.0
    %3314 = vmatpush2.msra.mxu0 0.0
    %3315 = vmatprep.subr.mxu0 0.0
    %3316 = vmatpush2.msra.mxu0 0.0
    %3317 = vmatprep.subr.mxu0 0.0
    %3318 = vmatpush2.msra.mxu0 0.0
    %3319 = vmatprep.subr.mxu0 0.0
    %3320 = vmatpush2.msra.mxu0 0.0
    %3321 = vmatprep.subr.mxu0 0.0
    %3322 = vmatpush2.msra.mxu0 0.0
    %3323 = vmatprep.subr.mxu0 0.0
    %3324 = vmatpush2.msra.mxu0 0.0
    %3325 = vmatprep.subr.mxu0 0.0
    %3326 = vmatpush2.msra.mxu0 0.0
    %3327 = vmatprep.subr.mxu0 0.0
    %3328 = vmatpush2.msra.mxu0 0.0
    %3329 = vmatprep.subr.mxu0 0.0
    %3330 = vmatpush2.msra.mxu0 0.0
    %3331 = vmatprep.subr.mxu0 0.0
    %3332 = vmatpush2.msra.mxu0 0.0
    %3333 = vmatprep.subr.mxu0 0.0
    %3334 = vmatpush2.msra.mxu0 0.0
    %3335 = vmatprep.subr.mxu0 0.0
    %3336 = vmatpush2.msra.mxu0 0.0
    %3337 = vmatprep.subr.mxu0 0.0
    %3338 = vmatpush2.msra.mxu0 0.0
    %3339 = vmatprep.mubr.f32.mxu0 0.0
    %3340 = vmatmul.mubr.f32.gmra.mxu0 %v3109
    %v3341 = vpop.f32.mrf.mxu0
    %v3342 = vadd.f32 %v456, %v3341
    %v3343 = vpop.f32.mrf.mxu0
    %v3344 = vadd.f32 %v460, %v3343
    %3345 = vdwg.mxu0
    %3346 = vmatprep.subr.mxu0 0.0
    %3347 = vmatpush1.msra.mxu0 %v886
    %3348 = vmatprep.subr.mxu0 0.0
    %3349 = vmatpush1.msra.mxu0 %v883
    %3350 = vmatprep.subr.mxu0 0.0
    %3351 = vmatpush1.msra.mxu0 %v880
    %3352 = vmatprep.subr.mxu0 0.0
    %3353 = vmatpush1.msra.mxu0 %v877
    %3354 = vmatprep.subr.mxu0 0.0
    %3355 = vmatpush1.msra.mxu0 %v874
    %3356 = vmatprep.subr.mxu0 0.0
    %3357 = vmatpush1.msra.mxu0 %v871
    %3358 = vmatprep.subr.mxu0 0.0
    %3359 = vmatpush1.msra.mxu0 %v868
    %3360 = vmatprep.subr.mxu0 0.0
    %3361 = vmatpush1.msra.mxu0 %v865
    %3362 = vmatprep.subr.mxu0 0.0
    %3363 = vmatpush1.msra.mxu0 %v862
    %3364 = vmatprep.subr.mxu0 0.0
    %3365 = vmatpush1.msra.mxu0 %v859
    %3366 = vmatprep.subr.mxu0 0.0
    %3367 = vmatpush1.msra.mxu0 %v856
    %3368 = vmatprep.subr.mxu0 0.0
    %3369 = vmatpush1.msra.mxu0 %v853
    %3370 = vmatprep.subr.mxu0 0.0
    %3371 = vmatpush1.msra.mxu0 %v850
    %3372 = vmatprep.subr.mxu0 0.0
    %3373 = vmatpush1.msra.mxu0 %v847
    %3374 = vmatprep.subr.mxu0 0.0
    %3375 = vmatpush1.msra.mxu0 %v844
    %3376 = vmatprep.subr.mxu0 0.0
    %3377 = vmatpush1.msra.mxu0 %v841
    %3378 = vmatprep.subr.mxu0 0.0
    %3379 = vmatpush2.msra.mxu0 0.0
    %3380 = vmatprep.subr.mxu0 0.0
    %3381 = vmatpush2.msra.mxu0 0.0
    %3382 = vmatprep.subr.mxu0 0.0
    %3383 = vmatpush2.msra.mxu0 0.0
    %3384 = vmatprep.subr.mxu0 0.0
    %3385 = vmatpush2.msra.mxu0 0.0
    %3386 = vmatprep.subr.mxu0 0.0
    %3387 = vmatpush2.msra.mxu0 0.0
    %3388 = vmatprep.subr.mxu0 0.0
    %3389 = vmatpush2.msra.mxu0 0.0
    %3390 = vmatprep.subr.mxu0 0.0
    %3391 = vmatpush2.msra.mxu0 0.0
    %3392 = vmatprep.subr.mxu0 0.0
    %3393 = vmatpush2.msra.mxu0 0.0
    %3394 = vmatprep.subr.mxu0 0.0
    %3395 = vmatpush2.msra.mxu0 0.0
    %3396 = vmatprep.subr.mxu0 0.0
    %3397 = vmatpush2.msra.mxu0 0.0
    %3398 = vmatprep.subr.mxu0 0.0
    %3399 = vmatpush2.msra.mxu0 0.0
    %3400 = vmatprep.subr.mxu0 0.0
    %3401 = vmatpush2.msra.mxu0 0.0
    %3402 = vmatprep.subr.mxu0 0.0
    %3403 = vmatpush2.msra.mxu0 0.0
    %3404 = vmatprep.subr.mxu0 0.0
    %3405 = vmatpush2.msra.mxu0 0.0
    %3406 = vmatprep.subr.mxu0 0.0
    %3407 = vmatpush2.msra.mxu0 0.0
    %3408 = vmatprep.subr.mxu0 0.0
    %3409 = vmatpush2.msra.mxu0 0.0
    %3410 = vmatprep.mubr.f32.mxu0 0.0
    %3411 = vmatmul.mubr.f32.gmra.mxu0 %v3109
    %v3412 = vpop.f32.mrf.mxu0
    %v3413 = vadd.f32 %v464, %v3412
    %v3414 = vpop.f32.mrf.mxu0
    %3415 = vdwg.mxu0
    %3416 = vmatprep.subr.mxu0 %v1074
    %3417 = vmatpush1.msra.mxu0 %v1073
    %3418 = vmatprep.subr.mxu0 %v1071
    %3419 = vmatpush1.msra.mxu0 %v1070
    %3420 = vmatprep.subr.mxu0 %v1068
    %3421 = vmatpush1.msra.mxu0 %v1067
    %3422 = vmatprep.subr.mxu0 %v1065
    %3423 = vmatpush1.msra.mxu0 %v1064
    %3424 = vmatprep.subr.mxu0 %v1062
    %3425 = vmatpush1.msra.mxu0 %v1061
    %3426 = vmatprep.subr.mxu0 %v1059
    %3427 = vmatpush1.msra.mxu0 %v1058
    %3428 = vmatprep.subr.mxu0 %v1056
    %3429 = vmatpush1.msra.mxu0 %v1055
    %3430 = vmatprep.subr.mxu0 %v1053
    %3431 = vmatpush1.msra.mxu0 %v1052
    %3432 = vmatprep.subr.mxu0 %v1050
    %3433 = vmatpush1.msra.mxu0 %v1049
    %3434 = vmatprep.subr.mxu0 %v1047
    %3435 = vmatpush1.msra.mxu0 %v1046
    %3436 = vmatprep.subr.mxu0 %v1044
    %3437 = vmatpush1.msra.mxu0 %v1043
    %3438 = vmatprep.subr.mxu0 %v1041
    %3439 = vmatpush1.msra.mxu0 %v1040
    %3440 = vmatprep.subr.mxu0 %v1038
    %3441 = vmatpush1.msra.mxu0 %v1037
    %3442 = vmatprep.subr.mxu0 %v1035
    %3443 = vmatpush1.msra.mxu0 %v1034
    %3444 = vmatprep.subr.mxu0 %v1032
    %3445 = vmatpush1.msra.mxu0 %v1031
    %3446 = vmatprep.subr.mxu0 %v1029
    %3447 = vmatpush1.msra.mxu0 %v1028
    %3448 = vmatprep.subr.mxu0 0.0
    %3449 = vmatpush2.msra.mxu0 0.0
    %3450 = vmatprep.subr.mxu0 0.0
    %3451 = vmatpush2.msra.mxu0 0.0
    %3452 = vmatprep.subr.mxu0 0.0
    %3453 = vmatpush2.msra.mxu0 0.0
    %3454 = vmatprep.subr.mxu0 0.0
    %3455 = vmatpush2.msra.mxu0 0.0
    %3456 = vmatprep.subr.mxu0 0.0
    %3457 = vmatpush2.msra.mxu0 0.0
    %3458 = vmatprep.subr.mxu0 0.0
    %3459 = vmatpush2.msra.mxu0 0.0
    %3460 = vmatprep.subr.mxu0 0.0
    %3461 = vmatpush2.msra.mxu0 0.0
    %3462 = vmatprep.subr.mxu0 0.0
    %3463 = vmatpush2.msra.mxu0 0.0
    %3464 = vmatprep.subr.mxu0 0.0
    %3465 = vmatpush2.msra.mxu0 0.0
    %3466 = vmatprep.subr.mxu0 0.0
    %3467 = vmatpush2.msra.mxu0 0.0
    %3468 = vmatprep.subr.mxu0 0.0
    %3469 = vmatpush2.msra.mxu0 0.0
    %3470 = vmatprep.subr.mxu0 0.0
    %3471 = vmatpush2.msra.mxu0 0.0
    %3472 = vmatprep.subr.mxu0 0.0
    %3473 = vmatpush2.msra.mxu0 0.0
    %3474 = vmatprep.subr.mxu0 0.0
    %3475 = vmatpush2.msra.mxu0 0.0
    %3476 = vmatprep.subr.mxu0 0.0
    %3477 = vmatpush2.msra.mxu0 0.0
    %3478 = vmatprep.subr.mxu0 0.0
    %3479 = vmatpush2.msra.mxu0 0.0
    %3480 = vmatprep.mubr.f32.mxu0 0.0
    %3481 = vmatmul.mubr.f32.gmra.mxu0 %v3130
    %v3482 = vpop.f32.mrf.mxu0
    %v3483 = vadd.f32 0.0, %v3482
    %v3484 = vpop.f32.mrf.mxu0
    %v3485 = vadd.f32 0.0, %v3484
    %3486 = vdwg.mxu0
    %3487 = vmatprep.subr.mxu0 0.0
    %3488 = vmatpush1.msra.mxu0 %v1075
    %3489 = vmatprep.subr.mxu0 0.0
    %3490 = vmatpush1.msra.mxu0 %v1072
    %3491 = vmatprep.subr.mxu0 0.0
    %3492 = vmatpush1.msra.mxu0 %v1069
    %3493 = vmatprep.subr.mxu0 0.0
    %3494 = vmatpush1.msra.mxu0 %v1066
    %3495 = vmatprep.subr.mxu0 0.0
    %3496 = vmatpush1.msra.mxu0 %v1063
    %3497 = vmatprep.subr.mxu0 0.0
    %3498 = vmatpush1.msra.mxu0 %v1060
    %3499 = vmatprep.subr.mxu0 0.0
    %3500 = vmatpush1.msra.mxu0 %v1057
    %3501 = vmatprep.subr.mxu0 0.0
    %3502 = vmatpush1.msra.mxu0 %v1054
    %3503 = vmatprep.subr.mxu0 0.0
    %3504 = vmatpush1.msra.mxu0 %v1051
    %3505 = vmatprep.subr.mxu0 0.0
    %3506 = vmatpush1.msra.mxu0 %v1048
    %3507 = vmatprep.subr.mxu0 0.0
    %3508 = vmatpush1.msra.mxu0 %v1045
    %3509 = vmatprep.subr.mxu0 0.0
    %3510 = vmatpush1.msra.mxu0 %v1042
    %3511 = vmatprep.subr.mxu0 0.0
    %3512 = vmatpush1.msra.mxu0 %v1039
    %3513 = vmatprep.subr.mxu0 0.0
    %3514 = vmatpush1.msra.mxu0 %v1036
    %3515 = vmatprep.subr.mxu0 0.0
    %3516 = vmatpush1.msra.mxu0 %v1033
    %3517 = vmatprep.subr.mxu0 0.0
    %3518 = vmatpush1.msra.mxu0 %v1030
    %3519 = vmatprep.subr.mxu0 0.0
    %3520 = vmatpush2.msra.mxu0 0.0
    %3521 = vmatprep.subr.mxu0 0.0
    %3522 = vmatpush2.msra.mxu0 0.0
    %3523 = vmatprep.subr.mxu0 0.0
    %3524 = vmatpush2.msra.mxu0 0.0
    %3525 = vmatprep.subr.mxu0 0.0
    %3526 = vmatpush2.msra.mxu0 0.0
    %3527 = vmatprep.subr.mxu0 0.0
    %3528 = vmatpush2.msra.mxu0 0.0
    %3529 = vmatprep.subr.mxu0 0.0
    %3530 = vmatpush2.msra.mxu0 0.0
    %3531 = vmatprep.subr.mxu0 0.0
    %3532 = vmatpush2.msra.mxu0 0.0
    %3533 = vmatprep.subr.mxu0 0.0
    %3534 = vmatpush2.msra.mxu0 0.0
    %3535 = vmatprep.subr.mxu0 0.0
    %3536 = vmatpush2.msra.mxu0 0.0
    %3537 = vmatprep.subr.mxu0 0.0
    %3538 = vmatpush2.msra.mxu0 0.0
    %3539 = vmatprep.subr.mxu0 0.0
    %3540 = vmatpush2.msra.mxu0 0.0
    %3541 = vmatprep.subr.mxu0 0.0
    %3542 = vmatpush2.msra.mxu0 0.0
    %3543 = vmatprep.subr.mxu0 0.0
    %3544 = vmatpush2.msra.mxu0 0.0
    %3545 = vmatprep.subr.mxu0 0.0
    %3546 = vmatpush2.msra.mxu0 0.0
    %3547 = vmatprep.subr.mxu0 0.0
    %3548 = vmatpush2.msra.mxu0 0.0
    %3549 = vmatprep.subr.mxu0 0.0
    %3550 = vmatpush2.msra.mxu0 0.0
    %3551 = vmatprep.mubr.f32.mxu0 0.0
    %3552 = vmatmul.mubr.f32.gmra.mxu0 %v3130
    %v3553 = vpop.f32.mrf.mxu0
    %v3554 = vadd.f32 0.0, %v3553
    %v3555 = vpop.f32.mrf.mxu0
    %3556 = vdwg.mxu0
    %v3557 = vadd.f32 %v3131, %v3201
    %v3558 = vxor.u32 %v3557, 2147483648
    %v3559 = vmul.f32 %v3558, 1.442695
    %v3560 = vpow.pop %v3559
    %v3561 = vadd.f32 %v3560, 1.0
    %v3562 = vrcp.pop %v3561
    %v3563 = vmul.f32 1.0, %v3562
    %v3564 = vadd.f32 %v3132, %v3203
    %v3565 = vxor.u32 %v3564, 2147483648
    %v3566 = vmul.f32 %v3565, 1.442695
    %v3567 = vpow.pop %v3566
    %v3568 = vadd.f32 %v3567, 1.0
    %v3569 = vrcp.pop %v3568
    %v3570 = vmul.f32 1.0, %v3569
    %v3571 = vadd.f32 %v3272, %v473
    %v3572 = vmul.f32 %v3563, %v3571
    %v3573 = vadd.f32 %v3133, %v3572
    %v3574 = vtanh.pop %v3573
    %v3575 = vsub.f32 %v3109, %v3574
    %v3576 = vmul.f32 %v3570, %v3575
    %v3577 = vadd.f32 %v3574, %v3576
    %v3578 = vadd.f32 %v3342, %v3483
    %v3579 = vxor.u32 %v3578, 2147483648
    %v3580 = vmul.f32 %v3579, 1.442695
    %v3581 = vpow.pop %v3580
    %v3582 = vadd.f32 %v3581, 1.0
    %v3583 = vrcp.pop %v3582
    %v3584 = vmul.f32 1.0, %v3583
    %v3585 = vadd.f32 %v3344, %v3485
    %v3586 = vxor.u32 %v3585, 2147483648
    %v3587 = vmul.f32 %v3586, 1.442695
    %v3588 = vpow.pop %v3587
    %v3589 = vadd.f32 %v3588, 1.0
    %v3590 = vrcp.pop %v3589
    %v3591 = vmul.f32 1.0, %v3590
    %v3592 = vadd.f32 %v3554, %v480
    %v3593 = vmul.f32 %v3584, %v3592
    %v3594 = vadd.f32 %v3413, %v3593
    %v3595 = vtanh.pop %v3594
    %v3596 = vsub.f32 %v3130, %v3595
    %v3597 = vmul.f32 %v3591, %v3596
    %v3598 = vadd.f32 %v3595, %v3597
    %v3599 = vld [vmem:[#allocation2 + $0xa8] sm:$0xff]
    %v3600 = vld [vmem:[#allocation2 + $0xb0] sm:$0xff]
    %v3601 = vld [vmem:[#allocation2 + $0xb8] sm:$0xff]
    %3602 = vmatprep.subr.mxu0 %v531
    %3603 = vmatpush1.msra.mxu0 %v530
    %3604 = vmatprep.subr.mxu0 %v528
    %3605 = vmatpush1.msra.mxu0 %v527
    %3606 = vmatprep.subr.mxu0 %v525
    %3607 = vmatpush1.msra.mxu0 %v524
    %3608 = vmatprep.subr.mxu0 %v522
    %3609 = vmatpush1.msra.mxu0 %v521
    %3610 = vmatprep.subr.mxu0 %v519
    %3611 = vmatpush1.msra.mxu0 %v518
    %3612 = vmatprep.subr.mxu0 %v516
    %3613 = vmatpush1.msra.mxu0 %v515
    %3614 = vmatprep.subr.mxu0 %v513
    %3615 = vmatpush1.msra.mxu0 %v512
    %3616 = vmatprep.subr.mxu0 %v510
    %3617 = vmatpush1.msra.mxu0 %v509
    %3618 = vmatprep.subr.mxu0 %v507
    %3619 = vmatpush1.msra.mxu0 %v506
    %3620 = vmatprep.subr.mxu0 %v504
    %3621 = vmatpush1.msra.mxu0 %v503
    %3622 = vmatprep.subr.mxu0 %v501
    %3623 = vmatpush1.msra.mxu0 %v500
    %3624 = vmatprep.subr.mxu0 %v498
    %3625 = vmatpush1.msra.mxu0 %v497
    %3626 = vmatprep.subr.mxu0 %v495
    %3627 = vmatpush1.msra.mxu0 %v494
    %3628 = vmatprep.subr.mxu0 %v492
    %3629 = vmatpush1.msra.mxu0 %v491
    %3630 = vmatprep.subr.mxu0 %v489
    %3631 = vmatpush1.msra.mxu0 %v488
    %3632 = vmatprep.subr.mxu0 %v486
    %3633 = vmatpush1.msra.mxu0 %v485
    %3634 = vmatprep.subr.mxu0 0.0
    %3635 = vmatpush2.msra.mxu0 0.0
    %3636 = vmatprep.subr.mxu0 0.0
    %3637 = vmatpush2.msra.mxu0 0.0
    %3638 = vmatprep.subr.mxu0 0.0
    %3639 = vmatpush2.msra.mxu0 0.0
    %3640 = vmatprep.subr.mxu0 0.0
    %3641 = vmatpush2.msra.mxu0 0.0
    %3642 = vmatprep.subr.mxu0 0.0
    %3643 = vmatpush2.msra.mxu0 0.0
    %3644 = vmatprep.subr.mxu0 0.0
    %3645 = vmatpush2.msra.mxu0 0.0
    %3646 = vmatprep.subr.mxu0 0.0
    %3647 = vmatpush2.msra.mxu0 0.0
    %3648 = vmatprep.subr.mxu0 0.0
    %3649 = vmatpush2.msra.mxu0 0.0
    %3650 = vmatprep.subr.mxu0 0.0
    %3651 = vmatpush2.msra.mxu0 0.0
    %3652 = vmatprep.subr.mxu0 0.0
    %3653 = vmatpush2.msra.mxu0 0.0
    %3654 = vmatprep.subr.mxu0 0.0
    %3655 = vmatpush2.msra.mxu0 0.0
    %3656 = vmatprep.subr.mxu0 0.0
    %3657 = vmatpush2.msra.mxu0 0.0
    %3658 = vmatprep.subr.mxu0 0.0
    %3659 = vmatpush2.msra.mxu0 0.0
    %3660 = vmatprep.subr.mxu0 0.0
    %3661 = vmatpush2.msra.mxu0 0.0
    %3662 = vmatprep.subr.mxu0 0.0
    %3663 = vmatpush2.msra.mxu0 0.0
    %3664 = vmatprep.subr.mxu0 0.0
    %3665 = vmatpush2.msra.mxu0 0.0
    %3666 = vmatprep.mubr.f32.mxu0 0.0
    %3667 = vmatmul.mubr.f32.gmra.mxu0 %v3577
    %v3668 = vpop.f32.mrf.mxu0
    %v3669 = vadd.f32 0.0, %v3668
    %v3670 = vpop.f32.mrf.mxu0
    %v3671 = vadd.f32 0.0, %v3670
    %3672 = vdwg.mxu0
    %3673 = vmatprep.subr.mxu0 0.0
    %3674 = vmatpush1.msra.mxu0 %v532
    %3675 = vmatprep.subr.mxu0 0.0
    %3676 = vmatpush1.msra.mxu0 %v529
    %3677 = vmatprep.subr.mxu0 0.0
    %3678 = vmatpush1.msra.mxu0 %v526
    %3679 = vmatprep.subr.mxu0 0.0
    %3680 = vmatpush1.msra.mxu0 %v523
    %3681 = vmatprep.subr.mxu0 0.0
    %3682 = vmatpush1.msra.mxu0 %v520
    %3683 = vmatprep.subr.mxu0 0.0
    %3684 = vmatpush1.msra.mxu0 %v517
    %3685 = vmatprep.subr.mxu0 0.0
    %3686 = vmatpush1.msra.mxu0 %v514
    %3687 = vmatprep.subr.mxu0 0.0
    %3688 = vmatpush1.msra.mxu0 %v511
    %3689 = vmatprep.subr.mxu0 0.0
    %3690 = vmatpush1.msra.mxu0 %v508
    %3691 = vmatprep.subr.mxu0 0.0
    %3692 = vmatpush1.msra.mxu0 %v505
    %3693 = vmatprep.subr.mxu0 0.0
    %3694 = vmatpush1.msra.mxu0 %v502
    %3695 = vmatprep.subr.mxu0 0.0
    %3696 = vmatpush1.msra.mxu0 %v499
    %3697 = vmatprep.subr.mxu0 0.0
    %3698 = vmatpush1.msra.mxu0 %v496
    %3699 = vmatprep.subr.mxu0 0.0
    %3700 = vmatpush1.msra.mxu0 %v493
    %3701 = vmatprep.subr.mxu0 0.0
    %3702 = vmatpush1.msra.mxu0 %v490
    %3703 = vmatprep.subr.mxu0 0.0
    %3704 = vmatpush1.msra.mxu0 %v487
    %3705 = vmatprep.subr.mxu0 0.0
    %3706 = vmatpush2.msra.mxu0 0.0
    %3707 = vmatprep.subr.mxu0 0.0
    %3708 = vmatpush2.msra.mxu0 0.0
    %3709 = vmatprep.subr.mxu0 0.0
    %3710 = vmatpush2.msra.mxu0 0.0
    %3711 = vmatprep.subr.mxu0 0.0
    %3712 = vmatpush2.msra.mxu0 0.0
    %3713 = vmatprep.subr.mxu0 0.0
    %3714 = vmatpush2.msra.mxu0 0.0
    %3715 = vmatprep.subr.mxu0 0.0
    %3716 = vmatpush2.msra.mxu0 0.0
    %3717 = vmatprep.subr.mxu0 0.0
    %3718 = vmatpush2.msra.mxu0 0.0
    %3719 = vmatprep.subr.mxu0 0.0
    %3720 = vmatpush2.msra.mxu0 0.0
    %3721 = vmatprep.subr.mxu0 0.0
    %3722 = vmatpush2.msra.mxu0 0.0
    %3723 = vmatprep.subr.mxu0 0.0
    %3724 = vmatpush2.msra.mxu0 0.0
    %3725 = vmatprep.subr.mxu0 0.0
    %3726 = vmatpush2.msra.mxu0 0.0
    %3727 = vmatprep.subr.mxu0 0.0
    %3728 = vmatpush2.msra.mxu0 0.0
    %3729 = vmatprep.subr.mxu0 0.0
    %3730 = vmatpush2.msra.mxu0 0.0
    %3731 = vmatprep.subr.mxu0 0.0
    %3732 = vmatpush2.msra.mxu0 0.0
    %3733 = vmatprep.subr.mxu0 0.0
    %3734 = vmatpush2.msra.mxu0 0.0
    %3735 = vmatprep.subr.mxu0 0.0
    %3736 = vmatpush2.msra.mxu0 0.0
    %3737 = vmatprep.mubr.f32.mxu0 0.0
    %3738 = vmatmul.mubr.f32.gmra.mxu0 %v3577
    %v3739 = vpop.f32.mrf.mxu0
    %v3740 = vadd.f32 0.0, %v3739
    %v3741 = vpop.f32.mrf.mxu0
    %3742 = vdwg.mxu0
    %3743 = vmatprep.subr.mxu0 %v885
    %3744 = vmatpush1.msra.mxu0 %v884
    %3745 = vmatprep.subr.mxu0 %v882
    %3746 = vmatpush1.msra.mxu0 %v881
    %3747 = vmatprep.subr.mxu0 %v879
    %3748 = vmatpush1.msra.mxu0 %v878
    %3749 = vmatprep.subr.mxu0 %v876
    %3750 = vmatpush1.msra.mxu0 %v875
    %3751 = vmatprep.subr.mxu0 %v873
    %3752 = vmatpush1.msra.mxu0 %v872
    %3753 = vmatprep.subr.mxu0 %v870
    %3754 = vmatpush1.msra.mxu0 %v869
    %3755 = vmatprep.subr.mxu0 %v867
    %3756 = vmatpush1.msra.mxu0 %v866
    %3757 = vmatprep.subr.mxu0 %v864
    %3758 = vmatpush1.msra.mxu0 %v863
    %3759 = vmatprep.subr.mxu0 %v861
    %3760 = vmatpush1.msra.mxu0 %v860
    %3761 = vmatprep.subr.mxu0 %v858
    %3762 = vmatpush1.msra.mxu0 %v857
    %3763 = vmatprep.subr.mxu0 %v855
    %3764 = vmatpush1.msra.mxu0 %v854
    %3765 = vmatprep.subr.mxu0 %v852
    %3766 = vmatpush1.msra.mxu0 %v851
    %3767 = vmatprep.subr.mxu0 %v849
    %3768 = vmatpush1.msra.mxu0 %v848
    %3769 = vmatprep.subr.mxu0 %v846
    %3770 = vmatpush1.msra.mxu0 %v845
    %3771 = vmatprep.subr.mxu0 %v843
    %3772 = vmatpush1.msra.mxu0 %v842
    %3773 = vmatprep.subr.mxu0 %v840
    %3774 = vmatpush1.msra.mxu0 %v839
    %3775 = vmatprep.subr.mxu0 0.0
    %3776 = vmatpush2.msra.mxu0 0.0
    %3777 = vmatprep.subr.mxu0 0.0
    %3778 = vmatpush2.msra.mxu0 0.0
    %3779 = vmatprep.subr.mxu0 0.0
    %3780 = vmatpush2.msra.mxu0 0.0
    %3781 = vmatprep.subr.mxu0 0.0
    %3782 = vmatpush2.msra.mxu0 0.0
    %3783 = vmatprep.subr.mxu0 0.0
    %3784 = vmatpush2.msra.mxu0 0.0
    %3785 = vmatprep.subr.mxu0 0.0
    %3786 = vmatpush2.msra.mxu0 0.0
    %3787 = vmatprep.subr.mxu0 0.0
    %3788 = vmatpush2.msra.mxu0 0.0
    %3789 = vmatprep.subr.mxu0 0.0
    %3790 = vmatpush2.msra.mxu0 0.0
    %3791 = vmatprep.subr.mxu0 0.0
    %3792 = vmatpush2.msra.mxu0 0.0
    %3793 = vmatprep.subr.mxu0 0.0
    %3794 = vmatpush2.msra.mxu0 0.0
    %3795 = vmatprep.subr.mxu0 0.0
    %3796 = vmatpush2.msra.mxu0 0.0
    %3797 = vmatprep.subr.mxu0 0.0
    %3798 = vmatpush2.msra.mxu0 0.0
    %3799 = vmatprep.subr.mxu0 0.0
    %3800 = vmatpush2.msra.mxu0 0.0
    %3801 = vmatprep.subr.mxu0 0.0
    %3802 = vmatpush2.msra.mxu0 0.0
    %3803 = vmatprep.subr.mxu0 0.0
    %3804 = vmatpush2.msra.mxu0 0.0
    %3805 = vmatprep.subr.mxu0 0.0
    %3806 = vmatpush2.msra.mxu0 0.0
    %3807 = vmatprep.mubr.f32.mxu0 0.0
    %3808 = vmatmul.mubr.f32.gmra.mxu0 %v3577
    %v3809 = vpop.f32.mrf.mxu0
    %v3810 = vadd.f32 %v456, %v3809
    %v3811 = vpop.f32.mrf.mxu0
    %v3812 = vadd.f32 %v460, %v3811
    %3813 = vdwg.mxu0
    %3814 = vmatprep.subr.mxu0 0.0
    %3815 = vmatpush1.msra.mxu0 %v886
    %3816 = vmatprep.subr.mxu0 0.0
    %3817 = vmatpush1.msra.mxu0 %v883
    %3818 = vmatprep.subr.mxu0 0.0
    %3819 = vmatpush1.msra.mxu0 %v880
    %3820 = vmatprep.subr.mxu0 0.0
    %3821 = vmatpush1.msra.mxu0 %v877
    %3822 = vmatprep.subr.mxu0 0.0
    %3823 = vmatpush1.msra.mxu0 %v874
    %3824 = vmatprep.subr.mxu0 0.0
    %3825 = vmatpush1.msra.mxu0 %v871
    %3826 = vmatprep.subr.mxu0 0.0
    %3827 = vmatpush1.msra.mxu0 %v868
    %3828 = vmatprep.subr.mxu0 0.0
    %3829 = vmatpush1.msra.mxu0 %v865
    %3830 = vmatprep.subr.mxu0 0.0
    %3831 = vmatpush1.msra.mxu0 %v862
    %3832 = vmatprep.subr.mxu0 0.0
    %3833 = vmatpush1.msra.mxu0 %v859
    %3834 = vmatprep.subr.mxu0 0.0
    %3835 = vmatpush1.msra.mxu0 %v856
    %3836 = vmatprep.subr.mxu0 0.0
    %3837 = vmatpush1.msra.mxu0 %v853
    %3838 = vmatprep.subr.mxu0 0.0
    %3839 = vmatpush1.msra.mxu0 %v850
    %3840 = vmatprep.subr.mxu0 0.0
    %3841 = vmatpush1.msra.mxu0 %v847
    %3842 = vmatprep.subr.mxu0 0.0
    %3843 = vmatpush1.msra.mxu0 %v844
    %3844 = vmatprep.subr.mxu0 0.0
    %3845 = vmatpush1.msra.mxu0 %v841
    %3846 = vmatprep.subr.mxu0 0.0
    %3847 = vmatpush2.msra.mxu0 0.0
    %3848 = vmatprep.subr.mxu0 0.0
    %3849 = vmatpush2.msra.mxu0 0.0
    %3850 = vmatprep.subr.mxu0 0.0
    %3851 = vmatpush2.msra.mxu0 0.0
    %3852 = vmatprep.subr.mxu0 0.0
    %3853 = vmatpush2.msra.mxu0 0.0
    %3854 = vmatprep.subr.mxu0 0.0
    %3855 = vmatpush2.msra.mxu0 0.0
    %3856 = vmatprep.subr.mxu0 0.0
    %3857 = vmatpush2.msra.mxu0 0.0
    %3858 = vmatprep.subr.mxu0 0.0
    %3859 = vmatpush2.msra.mxu0 0.0
    %3860 = vmatprep.subr.mxu0 0.0
    %3861 = vmatpush2.msra.mxu0 0.0
    %3862 = vmatprep.subr.mxu0 0.0
    %3863 = vmatpush2.msra.mxu0 0.0
    %3864 = vmatprep.subr.mxu0 0.0
    %3865 = vmatpush2.msra.mxu0 0.0
    %3866 = vmatprep.subr.mxu0 0.0
    %3867 = vmatpush2.msra.mxu0 0.0
    %3868 = vmatprep.subr.mxu0 0.0
    %3869 = vmatpush2.msra.mxu0 0.0
    %3870 = vmatprep.subr.mxu0 0.0
    %3871 = vmatpush2.msra.mxu0 0.0
    %3872 = vmatprep.subr.mxu0 0.0
    %3873 = vmatpush2.msra.mxu0 0.0
    %3874 = vmatprep.subr.mxu0 0.0
    %3875 = vmatpush2.msra.mxu0 0.0
    %3876 = vmatprep.subr.mxu0 0.0
    %3877 = vmatpush2.msra.mxu0 0.0
    %3878 = vmatprep.mubr.f32.mxu0 0.0
    %3879 = vmatmul.mubr.f32.gmra.mxu0 %v3577
    %v3880 = vpop.f32.mrf.mxu0
    %v3881 = vadd.f32 %v464, %v3880
    %v3882 = vpop.f32.mrf.mxu0
    %3883 = vdwg.mxu0
    %3884 = vmatprep.subr.mxu0 %v1074
    %3885 = vmatpush1.msra.mxu0 %v1073
    %3886 = vmatprep.subr.mxu0 %v1071
    %3887 = vmatpush1.msra.mxu0 %v1070
    %3888 = vmatprep.subr.mxu0 %v1068
    %3889 = vmatpush1.msra.mxu0 %v1067
    %3890 = vmatprep.subr.mxu0 %v1065
    %3891 = vmatpush1.msra.mxu0 %v1064
    %3892 = vmatprep.subr.mxu0 %v1062
    %3893 = vmatpush1.msra.mxu0 %v1061
    %3894 = vmatprep.subr.mxu0 %v1059
    %3895 = vmatpush1.msra.mxu0 %v1058
    %3896 = vmatprep.subr.mxu0 %v1056
    %3897 = vmatpush1.msra.mxu0 %v1055
    %3898 = vmatprep.subr.mxu0 %v1053
    %3899 = vmatpush1.msra.mxu0 %v1052
    %3900 = vmatprep.subr.mxu0 %v1050
    %3901 = vmatpush1.msra.mxu0 %v1049
    %3902 = vmatprep.subr.mxu0 %v1047
    %3903 = vmatpush1.msra.mxu0 %v1046
    %3904 = vmatprep.subr.mxu0 %v1044
    %3905 = vmatpush1.msra.mxu0 %v1043
    %3906 = vmatprep.subr.mxu0 %v1041
    %3907 = vmatpush1.msra.mxu0 %v1040
    %3908 = vmatprep.subr.mxu0 %v1038
    %3909 = vmatpush1.msra.mxu0 %v1037
    %3910 = vmatprep.subr.mxu0 %v1035
    %3911 = vmatpush1.msra.mxu0 %v1034
    %3912 = vmatprep.subr.mxu0 %v1032
    %3913 = vmatpush1.msra.mxu0 %v1031
    %3914 = vmatprep.subr.mxu0 %v1029
    %3915 = vmatpush1.msra.mxu0 %v1028
    %3916 = vmatprep.subr.mxu0 0.0
    %3917 = vmatpush2.msra.mxu0 0.0
    %3918 = vmatprep.subr.mxu0 0.0
    %3919 = vmatpush2.msra.mxu0 0.0
    %3920 = vmatprep.subr.mxu0 0.0
    %3921 = vmatpush2.msra.mxu0 0.0
    %3922 = vmatprep.subr.mxu0 0.0
    %3923 = vmatpush2.msra.mxu0 0.0
    %3924 = vmatprep.subr.mxu0 0.0
    %3925 = vmatpush2.msra.mxu0 0.0
    %3926 = vmatprep.subr.mxu0 0.0
    %3927 = vmatpush2.msra.mxu0 0.0
    %3928 = vmatprep.subr.mxu0 0.0
    %3929 = vmatpush2.msra.mxu0 0.0
    %3930 = vmatprep.subr.mxu0 0.0
    %3931 = vmatpush2.msra.mxu0 0.0
    %3932 = vmatprep.subr.mxu0 0.0
    %3933 = vmatpush2.msra.mxu0 0.0
    %3934 = vmatprep.subr.mxu0 0.0
    %3935 = vmatpush2.msra.mxu0 0.0
    %3936 = vmatprep.subr.mxu0 0.0
    %3937 = vmatpush2.msra.mxu0 0.0
    %3938 = vmatprep.subr.mxu0 0.0
    %3939 = vmatpush2.msra.mxu0 0.0
    %3940 = vmatprep.subr.mxu0 0.0
    %3941 = vmatpush2.msra.mxu0 0.0
    %3942 = vmatprep.subr.mxu0 0.0
    %3943 = vmatpush2.msra.mxu0 0.0
    %3944 = vmatprep.subr.mxu0 0.0
    %3945 = vmatpush2.msra.mxu0 0.0
    %3946 = vmatprep.subr.mxu0 0.0
    %3947 = vmatpush2.msra.mxu0 0.0
    %3948 = vmatprep.mubr.f32.mxu0 0.0
    %3949 = vmatmul.mubr.f32.gmra.mxu0 %v3598
    %v3950 = vpop.f32.mrf.mxu0
    %v3951 = vadd.f32 0.0, %v3950
    %v3952 = vpop.f32.mrf.mxu0
    %v3953 = vadd.f32 0.0, %v3952
    %3954 = vdwg.mxu0
    %3955 = vmatprep.subr.mxu0 0.0
    %3956 = vmatpush1.msra.mxu0 %v1075
    %3957 = vmatprep.subr.mxu0 0.0
    %3958 = vmatpush1.msra.mxu0 %v1072
    %3959 = vmatprep.subr.mxu0 0.0
    %3960 = vmatpush1.msra.mxu0 %v1069
    %3961 = vmatprep.subr.mxu0 0.0
    %3962 = vmatpush1.msra.mxu0 %v1066
    %3963 = vmatprep.subr.mxu0 0.0
    %3964 = vmatpush1.msra.mxu0 %v1063
    %3965 = vmatprep.subr.mxu0 0.0
    %3966 = vmatpush1.msra.mxu0 %v1060
    %3967 = vmatprep.subr.mxu0 0.0
    %3968 = vmatpush1.msra.mxu0 %v1057
    %3969 = vmatprep.subr.mxu0 0.0
    %3970 = vmatpush1.msra.mxu0 %v1054
    %3971 = vmatprep.subr.mxu0 0.0
    %3972 = vmatpush1.msra.mxu0 %v1051
    %3973 = vmatprep.subr.mxu0 0.0
    %3974 = vmatpush1.msra.mxu0 %v1048
    %3975 = vmatprep.subr.mxu0 0.0
    %3976 = vmatpush1.msra.mxu0 %v1045
    %3977 = vmatprep.subr.mxu0 0.0
    %3978 = vmatpush1.msra.mxu0 %v1042
    %3979 = vmatprep.subr.mxu0 0.0
    %3980 = vmatpush1.msra.mxu0 %v1039
    %3981 = vmatprep.subr.mxu0 0.0
    %3982 = vmatpush1.msra.mxu0 %v1036
    %3983 = vmatprep.subr.mxu0 0.0
    %3984 = vmatpush1.msra.mxu0 %v1033
    %3985 = vmatprep.subr.mxu0 0.0
    %3986 = vmatpush1.msra.mxu0 %v1030
    %3987 = vmatprep.subr.mxu0 0.0
    %3988 = vmatpush2.msra.mxu0 0.0
    %3989 = vmatprep.subr.mxu0 0.0
    %3990 = vmatpush2.msra.mxu0 0.0
    %3991 = vmatprep.subr.mxu0 0.0
    %3992 = vmatpush2.msra.mxu0 0.0
    %3993 = vmatprep.subr.mxu0 0.0
    %3994 = vmatpush2.msra.mxu0 0.0
    %3995 = vmatprep.subr.mxu0 0.0
    %3996 = vmatpush2.msra.mxu0 0.0
    %3997 = vmatprep.subr.mxu0 0.0
    %3998 = vmatpush2.msra.mxu0 0.0
    %3999 = vmatprep.subr.mxu0 0.0
    %4000 = vmatpush2.msra.mxu0 0.0
    %4001 = vmatprep.subr.mxu0 0.0
    %4002 = vmatpush2.msra.mxu0 0.0
    %4003 = vmatprep.subr.mxu0 0.0
    %4004 = vmatpush2.msra.mxu0 0.0
    %4005 = vmatprep.subr.mxu0 0.0
    %4006 = vmatpush2.msra.mxu0 0.0
    %4007 = vmatprep.subr.mxu0 0.0
    %4008 = vmatpush2.msra.mxu0 0.0
    %4009 = vmatprep.subr.mxu0 0.0
    %4010 = vmatpush2.msra.mxu0 0.0
    %4011 = vmatprep.subr.mxu0 0.0
    %4012 = vmatpush2.msra.mxu0 0.0
    %4013 = vmatprep.subr.mxu0 0.0
    %4014 = vmatpush2.msra.mxu0 0.0
    %4015 = vmatprep.subr.mxu0 0.0
    %4016 = vmatpush2.msra.mxu0 0.0
    %4017 = vmatprep.subr.mxu0 0.0
    %4018 = vmatpush2.msra.mxu0 0.0
    %4019 = vmatprep.mubr.f32.mxu0 0.0
    %4020 = vmatmul.mubr.f32.gmra.mxu0 %v3598
    %v4021 = vpop.f32.mrf.mxu0
    %v4022 = vadd.f32 0.0, %v4021
    %v4023 = vpop.f32.mrf.mxu0
    %4024 = vdwg.mxu0
    %v4025 = vadd.f32 %v3599, %v3669
    %v4026 = vxor.u32 %v4025, 2147483648
    %v4027 = vmul.f32 %v4026, 1.442695
    %v4028 = vpow.pop %v4027
    %v4029 = vadd.f32 %v4028, 1.0
    %v4030 = vrcp.pop %v4029
    %v4031 = vmul.f32 1.0, %v4030
    %v4032 = vadd.f32 %v3600, %v3671
    %v4033 = vxor.u32 %v4032, 2147483648
    %v4034 = vmul.f32 %v4033, 1.442695
    %v4035 = vpow.pop %v4034
    %v4036 = vadd.f32 %v4035, 1.0
    %v4037 = vrcp.pop %v4036
    %v4038 = vmul.f32 1.0, %v4037
    %v4039 = vadd.f32 %v3740, %v473
    %v4040 = vmul.f32 %v4031, %v4039
    %v4041 = vadd.f32 %v3601, %v4040
    %v4042 = vtanh.pop %v4041
    %v4043 = vsub.f32 %v3577, %v4042
    %v4044 = vmul.f32 %v4038, %v4043
    %v4045 = vadd.f32 %v4042, %v4044
    %v4046 = vadd.f32 %v3810, %v3951
    %v4047 = vxor.u32 %v4046, 2147483648
    %v4048 = vmul.f32 %v4047, 1.442695
    %v4049 = vpow.pop %v4048
    %v4050 = vadd.f32 %v4049, 1.0
    %v4051 = vrcp.pop %v4050
    %v4052 = vmul.f32 1.0, %v4051
    %v4053 = vadd.f32 %v3812, %v3953
    %v4054 = vxor.u32 %v4053, 2147483648
    %v4055 = vmul.f32 %v4054, 1.442695
    %v4056 = vpow.pop %v4055
    %v4057 = vadd.f32 %v4056, 1.0
    %v4058 = vrcp.pop %v4057
    %v4059 = vmul.f32 1.0, %v4058
    %v4060 = vadd.f32 %v4022, %v480
    %v4061 = vmul.f32 %v4052, %v4060
    %v4062 = vadd.f32 %v3881, %v4061
    %v4063 = vtanh.pop %v4062
    %v4064 = vsub.f32 %v3598, %v4063
    %v4065 = vmul.f32 %v4059, %v4064
    %v4066 = vadd.f32 %v4063, %v4065
    %4067 = vmatprep.subr.mxu0 %v885
    %4068 = vmatpush1.msra.mxu0 %v884
    %4069 = vmatprep.subr.mxu0 %v882
    %4070 = vmatpush1.msra.mxu0 %v881
    %4071 = vmatprep.subr.mxu0 %v879
    %4072 = vmatpush1.msra.mxu0 %v878
    %4073 = vmatprep.subr.mxu0 %v876
    %4074 = vmatpush1.msra.mxu0 %v875
    %4075 = vmatprep.subr.mxu0 %v873
    %4076 = vmatpush1.msra.mxu0 %v872
    %4077 = vmatprep.subr.mxu0 %v870
    %4078 = vmatpush1.msra.mxu0 %v869
    %4079 = vmatprep.subr.mxu0 %v867
    %4080 = vmatpush1.msra.mxu0 %v866
    %4081 = vmatprep.subr.mxu0 %v864
    %4082 = vmatpush1.msra.mxu0 %v863
    %4083 = vmatprep.subr.mxu0 %v861
    %4084 = vmatpush1.msra.mxu0 %v860
    %4085 = vmatprep.subr.mxu0 %v858
    %4086 = vmatpush1.msra.mxu0 %v857
    %4087 = vmatprep.subr.mxu0 %v855
    %4088 = vmatpush1.msra.mxu0 %v854
    %4089 = vmatprep.subr.mxu0 %v852
    %4090 = vmatpush1.msra.mxu0 %v851
    %4091 = vmatprep.subr.mxu0 %v849
    %4092 = vmatpush1.msra.mxu0 %v848
    %4093 = vmatprep.subr.mxu0 %v846
    %4094 = vmatpush1.msra.mxu0 %v845
    %4095 = vmatprep.subr.mxu0 %v843
    %4096 = vmatpush1.msra.mxu0 %v842
    %4097 = vmatprep.subr.mxu0 %v840
    %4098 = vmatpush1.msra.mxu0 %v839
    %4099 = vmatprep.subr.mxu0 0.0
    %4100 = vmatpush2.msra.mxu0 0.0
    %4101 = vmatprep.subr.mxu0 0.0
    %4102 = vmatpush2.msra.mxu0 0.0
    %4103 = vmatprep.subr.mxu0 0.0
    %4104 = vmatpush2.msra.mxu0 0.0
    %4105 = vmatprep.subr.mxu0 0.0
    %4106 = vmatpush2.msra.mxu0 0.0
    %4107 = vmatprep.subr.mxu0 0.0
    %4108 = vmatpush2.msra.mxu0 0.0
    %4109 = vmatprep.subr.mxu0 0.0
    %4110 = vmatpush2.msra.mxu0 0.0
    %4111 = vmatprep.subr.mxu0 0.0
    %4112 = vmatpush2.msra.mxu0 0.0
    %4113 = vmatprep.subr.mxu0 0.0
    %4114 = vmatpush2.msra.mxu0 0.0
    %4115 = vmatprep.subr.mxu0 0.0
    %4116 = vmatpush2.msra.mxu0 0.0
    %4117 = vmatprep.subr.mxu0 0.0
    %4118 = vmatpush2.msra.mxu0 0.0
    %4119 = vmatprep.subr.mxu0 0.0
    %4120 = vmatpush2.msra.mxu0 0.0
    %4121 = vmatprep.subr.mxu0 0.0
    %4122 = vmatpush2.msra.mxu0 0.0
    %4123 = vmatprep.subr.mxu0 0.0
    %4124 = vmatpush2.msra.mxu0 0.0
    %4125 = vmatprep.subr.mxu0 0.0
    %4126 = vmatpush2.msra.mxu0 0.0
    %4127 = vmatprep.subr.mxu0 0.0
    %4128 = vmatpush2.msra.mxu0 0.0
    %4129 = vmatprep.subr.mxu0 0.0
    %4130 = vmatpush2.msra.mxu0 0.0
    %4131 = vmatprep.mubr.f32.mxu0 0.0
    %4132 = vmatmul.mubr.f32.gmra.mxu0 %v4045
    %v4133 = vpop.f32.mrf.mxu0
    %v4134 = vadd.f32 %v456, %v4133
    %v4135 = vpop.f32.mrf.mxu0
    %v4136 = vadd.f32 %v460, %v4135
    %4137 = vdwg.mxu0
    %4138 = vmatprep.subr.mxu0 0.0
    %4139 = vmatpush1.msra.mxu0 %v886
    %4140 = vmatprep.subr.mxu0 0.0
    %4141 = vmatpush1.msra.mxu0 %v883
    %4142 = vmatprep.subr.mxu0 0.0
    %4143 = vmatpush1.msra.mxu0 %v880
    %4144 = vmatprep.subr.mxu0 0.0
    %4145 = vmatpush1.msra.mxu0 %v877
    %4146 = vmatprep.subr.mxu0 0.0
    %4147 = vmatpush1.msra.mxu0 %v874
    %4148 = vmatprep.subr.mxu0 0.0
    %4149 = vmatpush1.msra.mxu0 %v871
    %4150 = vmatprep.subr.mxu0 0.0
    %4151 = vmatpush1.msra.mxu0 %v868
    %4152 = vmatprep.subr.mxu0 0.0
    %4153 = vmatpush1.msra.mxu0 %v865
    %4154 = vmatprep.subr.mxu0 0.0
    %4155 = vmatpush1.msra.mxu0 %v862
    %4156 = vmatprep.subr.mxu0 0.0
    %4157 = vmatpush1.msra.mxu0 %v859
    %4158 = vmatprep.subr.mxu0 0.0
    %4159 = vmatpush1.msra.mxu0 %v856
    %4160 = vmatprep.subr.mxu0 0.0
    %4161 = vmatpush1.msra.mxu0 %v853
    %4162 = vmatprep.subr.mxu0 0.0
    %4163 = vmatpush1.msra.mxu0 %v850
    %4164 = vmatprep.subr.mxu0 0.0
    %4165 = vmatpush1.msra.mxu0 %v847
    %4166 = vmatprep.subr.mxu0 0.0
    %4167 = vmatpush1.msra.mxu0 %v844
    %4168 = vmatprep.subr.mxu0 0.0
    %4169 = vmatpush1.msra.mxu0 %v841
    %4170 = vmatprep.subr.mxu0 0.0
    %4171 = vmatpush2.msra.mxu0 0.0
    %4172 = vmatprep.subr.mxu0 0.0
    %4173 = vmatpush2.msra.mxu0 0.0
    %4174 = vmatprep.subr.mxu0 0.0
    %4175 = vmatpush2.msra.mxu0 0.0
    %4176 = vmatprep.subr.mxu0 0.0
    %4177 = vmatpush2.msra.mxu0 0.0
    %4178 = vmatprep.subr.mxu0 0.0
    %4179 = vmatpush2.msra.mxu0 0.0
    %4180 = vmatprep.subr.mxu0 0.0
    %4181 = vmatpush2.msra.mxu0 0.0
    %4182 = vmatprep.subr.mxu0 0.0
    %4183 = vmatpush2.msra.mxu0 0.0
    %4184 = vmatprep.subr.mxu0 0.0
    %4185 = vmatpush2.msra.mxu0 0.0
    %4186 = vmatprep.subr.mxu0 0.0
    %4187 = vmatpush2.msra.mxu0 0.0
    %4188 = vmatprep.subr.mxu0 0.0
    %4189 = vmatpush2.msra.mxu0 0.0
    %4190 = vmatprep.subr.mxu0 0.0
    %4191 = vmatpush2.msra.mxu0 0.0
    %4192 = vmatprep.subr.mxu0 0.0
    %4193 = vmatpush2.msra.mxu0 0.0
    %4194 = vmatprep.subr.mxu0 0.0
    %4195 = vmatpush2.msra.mxu0 0.0
    %4196 = vmatprep.subr.mxu0 0.0
    %4197 = vmatpush2.msra.mxu0 0.0
    %4198 = vmatprep.subr.mxu0 0.0
    %4199 = vmatpush2.msra.mxu0 0.0
    %4200 = vmatprep.subr.mxu0 0.0
    %4201 = vmatpush2.msra.mxu0 0.0
    %4202 = vmatprep.mubr.f32.mxu0 0.0
    %4203 = vmatmul.mubr.f32.gmra.mxu0 %v4045
    %v4204 = vpop.f32.mrf.mxu0
    %v4205 = vadd.f32 %v464, %v4204
    %v4206 = vpop.f32.mrf.mxu0
    %4207 = vdwg.mxu0
    %4208 = vmatprep.subr.mxu0 %v1074
    %4209 = vmatpush1.msra.mxu0 %v1073
    %4210 = vmatprep.subr.mxu0 %v1071
    %4211 = vmatpush1.msra.mxu0 %v1070
    %4212 = vmatprep.subr.mxu0 %v1068
    %4213 = vmatpush1.msra.mxu0 %v1067
    %4214 = vmatprep.subr.mxu0 %v1065
    %4215 = vmatpush1.msra.mxu0 %v1064
    %4216 = vmatprep.subr.mxu0 %v1062
    %4217 = vmatpush1.msra.mxu0 %v1061
    %4218 = vmatprep.subr.mxu0 %v1059
    %4219 = vmatpush1.msra.mxu0 %v1058
    %4220 = vmatprep.subr.mxu0 %v1056
    %4221 = vmatpush1.msra.mxu0 %v1055
    %4222 = vmatprep.subr.mxu0 %v1053
    %4223 = vmatpush1.msra.mxu0 %v1052
    %4224 = vmatprep.subr.mxu0 %v1050
    %4225 = vmatpush1.msra.mxu0 %v1049
    %4226 = vmatprep.subr.mxu0 %v1047
    %4227 = vmatpush1.msra.mxu0 %v1046
    %4228 = vmatprep.subr.mxu0 %v1044
    %4229 = vmatpush1.msra.mxu0 %v1043
    %4230 = vmatprep.subr.mxu0 %v1041
    %4231 = vmatpush1.msra.mxu0 %v1040
    %4232 = vmatprep.subr.mxu0 %v1038
    %4233 = vmatpush1.msra.mxu0 %v1037
    %4234 = vmatprep.subr.mxu0 %v1035
    %4235 = vmatpush1.msra.mxu0 %v1034
    %4236 = vmatprep.subr.mxu0 %v1032
    %4237 = vmatpush1.msra.mxu0 %v1031
    %4238 = vmatprep.subr.mxu0 %v1029
    %4239 = vmatpush1.msra.mxu0 %v1028
    %4240 = vmatprep.subr.mxu0 0.0
    %4241 = vmatpush2.msra.mxu0 0.0
    %4242 = vmatprep.subr.mxu0 0.0
    %4243 = vmatpush2.msra.mxu0 0.0
    %4244 = vmatprep.subr.mxu0 0.0
    %4245 = vmatpush2.msra.mxu0 0.0
    %4246 = vmatprep.subr.mxu0 0.0
    %4247 = vmatpush2.msra.mxu0 0.0
    %4248 = vmatprep.subr.mxu0 0.0
    %4249 = vmatpush2.msra.mxu0 0.0
    %4250 = vmatprep.subr.mxu0 0.0
    %4251 = vmatpush2.msra.mxu0 0.0
    %4252 = vmatprep.subr.mxu0 0.0
    %4253 = vmatpush2.msra.mxu0 0.0
    %4254 = vmatprep.subr.mxu0 0.0
    %4255 = vmatpush2.msra.mxu0 0.0
    %4256 = vmatprep.subr.mxu0 0.0
    %4257 = vmatpush2.msra.mxu0 0.0
    %4258 = vmatprep.subr.mxu0 0.0
    %4259 = vmatpush2.msra.mxu0 0.0
    %4260 = vmatprep.subr.mxu0 0.0
    %4261 = vmatpush2.msra.mxu0 0.0
    %4262 = vmatprep.subr.mxu0 0.0
    %4263 = vmatpush2.msra.mxu0 0.0
    %4264 = vmatprep.subr.mxu0 0.0
    %4265 = vmatpush2.msra.mxu0 0.0
    %4266 = vmatprep.subr.mxu0 0.0
    %4267 = vmatpush2.msra.mxu0 0.0
    %4268 = vmatprep.subr.mxu0 0.0
    %4269 = vmatpush2.msra.mxu0 0.0
    %4270 = vmatprep.subr.mxu0 0.0
    %4271 = vmatpush2.msra.mxu0 0.0
    %4272 = vmatprep.mubr.f32.mxu0 0.0
    %4273 = vmatmul.mubr.f32.gmra.mxu0 %v4066
    %v4274 = vpop.f32.mrf.mxu0
    %v4275 = vadd.f32 0.0, %v4274
    %v4276 = vpop.f32.mrf.mxu0
    %v4277 = vadd.f32 0.0, %v4276
    %4278 = vdwg.mxu0
    %4279 = vmatprep.subr.mxu0 0.0
    %4280 = vmatpush1.msra.mxu0 %v1075
    %4281 = vmatprep.subr.mxu0 0.0
    %4282 = vmatpush1.msra.mxu0 %v1072
    %4283 = vmatprep.subr.mxu0 0.0
    %4284 = vmatpush1.msra.mxu0 %v1069
    %4285 = vmatprep.subr.mxu0 0.0
    %4286 = vmatpush1.msra.mxu0 %v1066
    %4287 = vmatprep.subr.mxu0 0.0
    %4288 = vmatpush1.msra.mxu0 %v1063
    %4289 = vmatprep.subr.mxu0 0.0
    %4290 = vmatpush1.msra.mxu0 %v1060
    %4291 = vmatprep.subr.mxu0 0.0
    %4292 = vmatpush1.msra.mxu0 %v1057
    %4293 = vmatprep.subr.mxu0 0.0
    %4294 = vmatpush1.msra.mxu0 %v1054
    %4295 = vmatprep.subr.mxu0 0.0
    %4296 = vmatpush1.msra.mxu0 %v1051
    %4297 = vmatprep.subr.mxu0 0.0
    %4298 = vmatpush1.msra.mxu0 %v1048
    %4299 = vmatprep.subr.mxu0 0.0
    %4300 = vmatpush1.msra.mxu0 %v1045
    %4301 = vmatprep.subr.mxu0 0.0
    %4302 = vmatpush1.msra.mxu0 %v1042
    %4303 = vmatprep.subr.mxu0 0.0
    %4304 = vmatpush1.msra.mxu0 %v1039
    %4305 = vmatprep.subr.mxu0 0.0
    %4306 = vmatpush1.msra.mxu0 %v1036
    %4307 = vmatprep.subr.mxu0 0.0
    %4308 = vmatpush1.msra.mxu0 %v1033
    %4309 = vmatprep.subr.mxu0 0.0
    %4310 = vmatpush1.msra.mxu0 %v1030
    %4311 = vmatprep.subr.mxu0 0.0
    %4312 = vmatpush2.msra.mxu0 0.0
    %4313 = vmatprep.subr.mxu0 0.0
    %4314 = vmatpush2.msra.mxu0 0.0
    %4315 = vmatprep.subr.mxu0 0.0
    %4316 = vmatpush2.msra.mxu0 0.0
    %4317 = vmatprep.subr.mxu0 0.0
    %4318 = vmatpush2.msra.mxu0 0.0
    %4319 = vmatprep.subr.mxu0 0.0
    %4320 = vmatpush2.msra.mxu0 0.0
    %4321 = vmatprep.subr.mxu0 0.0
    %4322 = vmatpush2.msra.mxu0 0.0
    %4323 = vmatprep.subr.mxu0 0.0
    %4324 = vmatpush2.msra.mxu0 0.0
    %4325 = vmatprep.subr.mxu0 0.0
    %4326 = vmatpush2.msra.mxu0 0.0
    %4327 = vmatprep.subr.mxu0 0.0
    %4328 = vmatpush2.msra.mxu0 0.0
    %4329 = vmatprep.subr.mxu0 0.0
    %4330 = vmatpush2.msra.mxu0 0.0
    %4331 = vmatprep.subr.mxu0 0.0
    %4332 = vmatpush2.msra.mxu0 0.0
    %4333 = vmatprep.subr.mxu0 0.0
    %4334 = vmatpush2.msra.mxu0 0.0
    %4335 = vmatprep.subr.mxu0 0.0
    %4336 = vmatpush2.msra.mxu0 0.0
    %4337 = vmatprep.subr.mxu0 0.0
    %4338 = vmatpush2.msra.mxu0 0.0
    %4339 = vmatprep.subr.mxu0 0.0
    %4340 = vmatpush2.msra.mxu0 0.0
    %4341 = vmatprep.subr.mxu0 0.0
    %4342 = vmatpush2.msra.mxu0 0.0
    %4343 = vmatprep.mubr.f32.mxu0 0.0
    %4344 = vmatmul.mubr.f32.gmra.mxu0 %v4066
    %v4345 = vpop.f32.mrf.mxu0
    %v4346 = vadd.f32 0.0, %v4345
    %v4347 = vpop.f32.mrf.mxu0
    %4348 = vdwg.mxu0
    %v4349 = vadd.f32 %v4134, %v4275
    %v4350 = vxor.u32 %v4349, 2147483648
    %v4351 = vmul.f32 %v4350, 1.442695
    %v4352 = vpow.pop %v4351
    %v4353 = vadd.f32 %v4352, 1.0
    %v4354 = vrcp.pop %v4353
    %v4355 = vmul.f32 1.0, %v4354
    %v4356 = vadd.f32 %v4136, %v4277
    %v4357 = vxor.u32 %v4356, 2147483648
    %v4358 = vmul.f32 %v4357, 1.442695
    %v4359 = vpow.pop %v4358
    %v4360 = vadd.f32 %v4359, 1.0
    %v4361 = vrcp.pop %v4360
    %v4362 = vmul.f32 1.0, %v4361
    %v4363 = vadd.f32 %v4346, %v480
    %v4364 = vmul.f32 %v4355, %v4363
    %v4365 = vadd.f32 %v4205, %v4364
    %v4366 = vtanh.pop %v4365
    %v4367 = vsub.f32 %v4066, %v4366
    %v4368 = vmul.f32 %v4362, %v4367
    %v4369 = vadd.f32 %v4366, %v4368
    %v4370 = vld [vmem:[#allocation10] sm:$0xff]
    %v4371 = vld [vmem:[#allocation10 + $0x8] sm:$0xff]
    %v4372 = vld [vmem:[#allocation10 + $0x10] sm:$0xff]
    %v4373 = vld [vmem:[#allocation10 + $0x18] sm:$0xff]
    %v4374 = vld [vmem:[#allocation10 + $0x20] sm:$0xff]
    %v4375 = vld [vmem:[#allocation10 + $0x28] sm:$0xff]
    %v4376 = vld [vmem:[#allocation10 + $0x30] sm:$0xff]
    %v4377 = vld [vmem:[#allocation10 + $0x38] sm:$0xff]
    %v4378 = vld [vmem:[#allocation10 + $0x40] sm:$0xff]
    %v4379 = vld [vmem:[#allocation10 + $0x48] sm:$0xff]
    %v4380 = vld [vmem:[#allocation10 + $0x50] sm:$0xff]
    %v4381 = vld [vmem:[#allocation10 + $0x58] sm:$0xff]
    %v4382 = vld [vmem:[#allocation10 + $0x60] sm:$0xff]
    %v4383 = vld [vmem:[#allocation10 + $0x68] sm:$0xff]
    %v4384 = vld [vmem:[#allocation10 + $0x70] sm:$0xff]
    %v4385 = vld [vmem:[#allocation10 + $0x78] sm:$0xff]
    %v4386 = vld [vmem:[%s9] sm:$0x1]
    %v4388 = vlaneseq
    %v4389 = vshrl.u32 %v4388, 7
    %v4390 = vsub.s32 0, %v4389
    %v4391 = vrot.slane %v4386, %v4390
    %4393 = vmatprep.subr.mxu0 0.0
    %4394 = vmatpush1.msra.mxu0 %v4385
    %4395 = vmatprep.subr.mxu0 0.0
    %4396 = vmatpush1.msra.mxu0 %v4384
    %4397 = vmatprep.subr.mxu0 0.0
    %4398 = vmatpush1.msra.mxu0 %v4383
    %4399 = vmatprep.subr.mxu0 0.0
    %4400 = vmatpush1.msra.mxu0 %v4382
    %4401 = vmatprep.subr.mxu0 0.0
    %4402 = vmatpush1.msra.mxu0 %v4381
    %4403 = vmatprep.subr.mxu0 0.0
    %4404 = vmatpush1.msra.mxu0 %v4380
    %4405 = vmatprep.subr.mxu0 0.0
    %4406 = vmatpush1.msra.mxu0 %v4379
    %4407 = vmatprep.subr.mxu0 0.0
    %4408 = vmatpush1.msra.mxu0 %v4378
    %4409 = vmatprep.subr.mxu0 0.0
    %4410 = vmatpush1.msra.mxu0 %v4377
    %4411 = vmatprep.subr.mxu0 0.0
    %4412 = vmatpush1.msra.mxu0 %v4376
    %4413 = vmatprep.subr.mxu0 0.0
    %4414 = vmatpush1.msra.mxu0 %v4375
    %4415 = vmatprep.subr.mxu0 0.0
    %4416 = vmatpush1.msra.mxu0 %v4374
    %4417 = vmatprep.subr.mxu0 0.0
    %4418 = vmatpush1.msra.mxu0 %v4373
    %4419 = vmatprep.subr.mxu0 0.0
    %4420 = vmatpush1.msra.mxu0 %v4372
    %4421 = vmatprep.subr.mxu0 0.0
    %4422 = vmatpush1.msra.mxu0 %v4371
    %4423 = vmatprep.subr.mxu0 0.0
    %4424 = vmatpush1.msra.mxu0 %v4370
    %4425 = vmatprep.subr.mxu0 0.0
    %4426 = vmatpush2.msra.mxu0 0.0
    %4427 = vmatprep.subr.mxu0 0.0
    %4428 = vmatpush2.msra.mxu0 0.0
    %4429 = vmatprep.subr.mxu0 0.0
    %4430 = vmatpush2.msra.mxu0 0.0
    %4431 = vmatprep.subr.mxu0 0.0
    %4432 = vmatpush2.msra.mxu0 0.0
    %4433 = vmatprep.subr.mxu0 0.0
    %4434 = vmatpush2.msra.mxu0 0.0
    %4435 = vmatprep.subr.mxu0 0.0
    %4436 = vmatpush2.msra.mxu0 0.0
    %4437 = vmatprep.subr.mxu0 0.0
    %4438 = vmatpush2.msra.mxu0 0.0
    %4439 = vmatprep.subr.mxu0 0.0
    %4440 = vmatpush2.msra.mxu0 0.0
    %4441 = vmatprep.subr.mxu0 0.0
    %4442 = vmatpush2.msra.mxu0 0.0
    %4443 = vmatprep.subr.mxu0 0.0
    %4444 = vmatpush2.msra.mxu0 0.0
    %4445 = vmatprep.subr.mxu0 0.0
    %4446 = vmatpush2.msra.mxu0 0.0
    %4447 = vmatprep.subr.mxu0 0.0
    %4448 = vmatpush2.msra.mxu0 0.0
    %4449 = vmatprep.subr.mxu0 0.0
    %4450 = vmatpush2.msra.mxu0 0.0
    %4451 = vmatprep.subr.mxu0 0.0
    %4452 = vmatpush2.msra.mxu0 0.0
    %4453 = vmatprep.subr.mxu0 0.0
    %4454 = vmatpush2.msra.mxu0 0.0
    %4455 = vmatprep.subr.mxu0 0.0
    %4456 = vmatpush2.msra.mxu0 0.0
    %4457 = vmatprep.mubr.f32.mxu0 0.0
    %4458 = vmatmul.mubr.f32.gmra.mxu0 %v4369
    %v4459 = vpop.f32.mrf.mxu0
    %v4460 = vadd.f32 %v4391, %v4459
    %v4461 = vpop.f32.mrf.mxu0
    %4462 = vdwg.mxu0
    %4463 = vst [vmem:[%s10] sm:$0xff] %v4460
    // Predicated region
    $region62: #{leonard_gru_multi_big.1} parent=1 // pred_check
      _
    $region63: #{leonard_gru_multi_big.1} parent=1 // pred_check_branch
      %4465 = sbr.rel (0) target = $region65
    $region64: #{leonard_gru_multi_big.1} parent=1 // pred_region
      _
    $region65: #{leonard_gru_multi_big.1} parent=1 // pred_fallthru
      _
    // Predicated region
    $region66: #{leonard_gru_multi_big.1} parent=1 // pred_check
      _
    $region67: #{leonard_gru_multi_big.1} parent=1 // pred_check_branch
      %4467 = sbr.rel (0) target = $region69
    $region68: #{leonard_gru_multi_big.1} parent=1 // pred_region
      _
    $region69: #{leonard_gru_multi_big.1} parent=1 // pred_fallthru
      _
    %4468 = vsyncpa [#allocation4], 1
    %4469 = vsyncpa [#allocation6], 1
    %4470 = vsyncpa [#allocation9], 1

</llo_original>
